<compile_context>
chip_gen: v5e
topology: v5e:2x2
jax: 0.10.0
libtpu: 0.0.40
codegen_flags: <defaults>
</compile_context>

<pallas_src>
import functools

import jax
import jax.numpy as jnp
from jax import lax
from jax.experimental import pallas as pl
from jax.experimental.pallas import tpu as pltpu

BN_EPS = 1e-5
EXPANSION = 4


# ---------------------------------------------------------------------------
# Kernel: whole bottleneck block on one (tile_h rows x W cols) spatial tile.
# ---------------------------------------------------------------------------
def _bottleneck_kernel(xb_ref, xt_ref, xbo_ref,
                       w1_ref, s1_ref, b1_ref,
                       w2_ref, s2_ref, b2_ref,
                       w3_ref, s3_ref, b3_ref,
                       o_ref, h1_scr, *, th, width, p8):
    """Layouts (channels on the lane axis everywhere):

      xb_ref  : (1, th, p8, Cin)   body rows of the W-padded input (pitch p8)
      xt_ref  : (1, 1,  p8, Cin)   row above the block (border -> masked out)
      xbo_ref : (1, 1,  p8, Cin)   row below the block (border -> masked out)
      w1_ref  : (Cin, P)   w2_ref: (9, P, P) [tap = ky*3+kx]   w3_ref: (P, Cout)
      s*/b*   : (1, C)     folded BN scale / bias (f32)
      o_ref   : (1, th, width, Cout)
      h1_scr  : ((th+2)*p8 + 8, P)  conv1 output incl. conv2 zero-pad ring,
                                    flattened with row pitch p8 (multiple of 8)
    """
    P = w1_ref.shape[1]
    cout = w3_ref.shape[1]
    cin = xb_ref.shape[3]
    cdt = w1_ref.dtype                  # compute dtype fed to the MXU
    mo = th * p8
    hb = pl.program_id(1)
    nhb = pl.num_programs(1)

    def conv1(x2d):                     # (M, Cin) -> (M, P) f32, bn1 + relu
        h = jnp.dot(x2d, w1_ref[...], preferred_element_type=jnp.float32)
        return jnp.maximum(h * s1_ref[...] + b1_ref[...], 0.0)

    # conv2's zero padding lives in h1 space: columns 0 and width+1 of every
    # padded row, plus the top/bottom halo row when this block touches the
    # image border, must be exactly zero *after* bn1+relu (relu(b1) != 0).
    col_b = lax.broadcasted_iota(jnp.int32, (mo, 1), 0) % p8
    ok_b = (col_b >= 1) & (col_b <= width)
    col_r = lax.broadcasted_iota(jnp.int32, (p8, 1), 0)
    ok_r = (col_r >= 1) & (col_r <= width)

    # ---- conv1 (1x1) + bn1 + relu: body rows, one aligned store -----------
    h1_body = conv1(xb_ref[0].reshape(mo, cin))
    h1_scr[pl.ds(p8, mo), :] = jnp.where(ok_b, h1_body, 0.0).astype(cdt)

    # ---- conv1 + bn1 + relu: halo rows (zeroed at the image borders) -------
    h1_top = conv1(xt_ref[0, 0])
    h1_bot = conv1(xbo_ref[0, 0])
    h1_scr[pl.ds(0, p8), :] = jnp.where(ok_r & (hb > 0), h1_top, 0.0).astype(cdt)
    h1_scr[pl.ds((th + 1) * p8, p8), :] = (
        jnp.where(ok_r & (hb < nhb - 1), h1_bot, 0.0).astype(cdt))
    h1_scr[pl.ds((th + 2) * p8, 8), :] = jnp.zeros((8, P), cdt)   # slack rows

    # ---- conv2 (3x3, pad=1) as 9 shifted MXU matmuls + bn2 + relu ----------
    # Output flat index m = y*p8 + c reads h1_scr[m + ky*p8 + kx]; ky offsets
    # are sublane-aligned because p8 is a multiple of 8.  Columns c >= width
    # are garbage and get dropped by the epilogue slice.
    acc = None
    for k in range(9):
        ky, kx = divmod(k, 3)
        slab = h1_scr[pl.ds(ky * p8 + kx, mo), :]                 # (mo, P)
        part = jnp.dot(slab, w2_ref[k], preferred_element_type=jnp.float32)
        acc = part if acc is None else acc + part
    h2 = jnp.maximum(acc * s2_ref[...] + b2_ref[...], 0.0).astype(cdt)

    # ---- conv3 (1x1) + bn3 + residual + relu, single lane-dense store ------
    h3 = jnp.dot(h2, w3_ref[...], preferred_element_type=jnp.float32)
    h3 = h3 * s3_ref[...] + b3_ref[...]
    h3 = h3.reshape(th, p8, cout)[:, :width, :]                   # drop pad cols
    # Residual from the same (compute-dtype) input tile; see notes for exact-f32.
    resid = xb_ref[0, :, pl.ds(1, width), :].astype(jnp.float32)
    o_ref[0] = jnp.maximum(h3 + resid, 0.0).astype(o_ref.dtype)


# ---------------------------------------------------------------------------
# Wrapper helpers
# ---------------------------------------------------------------------------
def _round_up(x, m):
    return (x + m - 1) // m * m


def _fold_bn(gamma, beta, mean, var):
    scale = (gamma / jnp.sqrt(var + BN_EPS)).astype(jnp.float32)
    bias = (beta - mean * scale).astype(jnp.float32)
    return scale[None, :], bias[None, :]          # (1, C) for lane broadcast


def prepare_params(params, compute_dtype=jnp.bfloat16):
    """One-time (per model) weight/BN preprocessing, hoisted out of the forward."""
    planes = params["w1"].shape[0]
    prep = {
        "w1": params["w1"][:, :, 0, 0].T.astype(compute_dtype),              # (Cin, P)
        "w2": jnp.transpose(params["w2"], (2, 3, 1, 0))
                 .reshape(9, planes, planes).astype(compute_dtype),          # (9, P, P)
        "w3": params["w3"][:, :, 0, 0].T.astype(compute_dtype),              # (P, Cout)
    }
    prep["s1"], prep["b1"] = _fold_bn(params["g1"], params["b1"], params["m1"], params["v1"])
    prep["s2"], prep["b2"] = _fold_bn(params["g2"], params["b2"], params["m2"], params["v2"])
    prep["s3"], prep["b3"] = _fold_bn(params["g3"], params["b3"], params["m3"], params["v3"])
    return prep


def _vmem_capacity():
    try:
        return int(pltpu.get_tpu_info().vmem_capacity_bytes)
    except Exception:
        return 64 * 1024 * 1024                    # conservative (v7x-sized) fallback


def _block_vmem_bytes(th, W, p8, cin, planes, cout, abytes, obytes):
    """Rough per-grid-step VMEM footprint (double-buffered blocks + scratch)."""
    mo = th * p8
    weights = (cin * planes + 9 * planes * planes + planes * cout) * abytes
    weights += (4 * planes + 2 * cout) * 4
    act_in = (th + 2) * p8 * cin * abytes          # body block + 2 halo-row blocks
    act_out = th * W * cout * obytes
    scratch = ((th + 2) * p8 + 8) * planes * abytes
    live = mo * (2 * planes + cout) * 4 + mo * (planes + cin) * abytes
    return 2 * (act_in + act_out + weights) + scratch + live


def _pick_tile_h(N, H, W, p8, cin, planes, cout, abytes, obytes, budget=None):
    """Largest divisor of H whose working set fits a generation-aware budget."""
    if budget is None:
        cap = _vmem_capacity()
        budget = 28 * 2**20 if cap <= 64 * 2**20 else 56 * 2**20
    # v7x has 2 TensorCores fed via the "parallel" grid axes: make sure a
    # single-image call still produces >= 2 grid steps.
    max_th = H if N > 1 else max(1, H // 2)
    best = 1
    for th in range(1, max_th + 1):
        if H % th == 0 and _block_vmem_bytes(th, W, p8, cin, planes, cout,
                                             abytes, obytes) <= budget:
            best = th
    return best


def _vmem_limit_bytes(block_bytes):
    """Only request extra scoped VMEM when the default is actually too small."""
    if block_bytes <= 8 * 2**20:
        return None
    cap = _vmem_capacity()
    ceiling = 48 * 2**20 if cap <= 64 * 2**20 else int(0.8 * cap)
    return int(min(max(int(1.25 * block_bytes), 32 * 2**20), ceiling))


# ---------------------------------------------------------------------------
# Forward (NHWC core; NCHW shim below for PyTorch-layout parity)
# ---------------------------------------------------------------------------
def bottleneck_forward_nhwc(x_nhwc, prep, *, tile_h=None, out_dtype=None):
    N, H, W, Cin = x_nhwc.shape
    P = prep["w1"].shape[1]
    Cout = prep["w3"].shape[1]
    if Cin != Cout:
        raise ValueError("downsample=None requires inplanes == planes * expansion")
    cdt = prep["w1"].dtype
    if out_dtype is None:
        out_dtype = x_nhwc.dtype
    abytes = jnp.dtype(cdt).itemsize
    obytes = jnp.dtype(out_dtype).itemsize

    p8 = _round_up(W + 2, 8)                       # 8-aligned conv2 row pitch
    if tile_h is None:
        tile_h = _pick_tile_h(N, H, W, p8, Cin, P, Cout, abytes, obytes)
    if H % tile_h != 0:
        raise ValueError(f"tile_h={tile_h} must divide H={H}")
    HB = H // tile_h

    # Cast + pad W (1 zero col left, p8-W-1 right).  This is the only wrapper
    # data-movement pass; no per-block window materialization.
    xp = jnp.pad(x_nhwc.astype(cdt), ((0, 0), (0, 0), (1, p8 - W - 1), (0, 0)))

    def cmap(*shape):
        return pl.BlockSpec(shape, lambda n, hb: (0,) * len(shape))

    in_specs = [
        # body rows of the padded input (non-overlapping, auto-pipelined)
        pl.BlockSpec((1, tile_h, p8, Cin), lambda n, hb: (n, hb, 0, 0)),
        # 1-row halos above/below; clamped at the borders (masked in-kernel)
        pl.BlockSpec((1, 1, p8, Cin),
                     lambda n, hb: (n, jnp.maximum(hb * tile_h - 1, 0), 0, 0)),
        pl.BlockSpec((1, 1, p8, Cin),
                     lambda n, hb: (n, jnp.minimum((hb + 1) * tile_h, H - 1), 0, 0)),
        cmap(Cin, P), cmap(1, P), cmap(1, P),       # conv1 / bn1
        cmap(9, P, P), cmap(1, P), cmap(1, P),      # conv2 / bn2
        cmap(P, Cout), cmap(1, Cout), cmap(1, Cout),  # conv3 / bn3
    ]
    out_specs = pl.BlockSpec((1, tile_h, W, Cout), lambda n, hb: (n, hb, 0, 0))

    cp_kwargs = dict(dimension_semantics=("parallel", "parallel"))
    limit = _vmem_limit_bytes(
        _block_vmem_bytes(tile_h, W, p8, Cin, P, Cout, abytes, obytes))
    if limit is not None:
        cp_kwargs["vmem_limit_bytes"] = limit

    flops = 2 * N * H * W * (Cin * P + 9 * P * P + P * Cout)
    bytes_accessed = (N * H * p8 * Cin * abytes + N * H * W * Cout * obytes
                      + (Cin * P + 9 * P * P + P * Cout) * abytes)
    cost = pl.CostEstimate(flops=int(flops), transcendentals=0,
                           bytes_accessed=int(bytes_accessed))

    return pl.pallas_call(
        functools.partial(_bottleneck_kernel, th=tile_h, width=W, p8=p8),
        out_shape=jax.ShapeDtypeStruct((N, H, W, Cout), out_dtype),
        grid=(N, HB),
        in_specs=in_specs,
        out_specs=out_specs,
        scratch_shapes=[pltpu.VMEM(((tile_h + 2) * p8 + 8, P), cdt)],
        compiler_params=pltpu.CompilerParams(**cp_kwargs),
        cost_estimate=cost,
    )(xp, xp, xp,
      prep["w1"], prep["s1"], prep["b1"],
      prep["w2"], prep["s2"], prep["b2"],
      prep["w3"], prep["s3"], prep["b3"])


def bottleneck_forward(x_nchw, prep, *, tile_h=None, out_dtype=None):
    """NCHW in / NCHW out shim matching the PyTorch module layout."""
    x_nhwc = jnp.transpose(x_nchw, (0, 2, 3, 1))
    y = bottleneck_forward_nhwc(x_nhwc, prep, tile_h=tile_h, out_dtype=out_dtype)
    return jnp.transpose(y, (0, 3, 1, 2))


# ---------------------------------------------------------------------------
# Pure-JAX reference (for self-check)
# ---------------------------------------------------------------------------
def bottleneck_reference(x, p):
    def bn(y, g, b, m, v):
        sh = (1, -1, 1, 1)
        return (y - m.reshape(sh)) / jnp.sqrt(v.reshape(sh) + BN_EPS) * g.reshape(sh) + b.reshape(sh)

    dn = ("NCHW", "OIHW", "NCHW")
    out = lax.conv_general_dilated(x, p["w1"], (1, 1), "VALID", dimension_numbers=dn)
    out = jax.nn.relu(bn(out, p["g1"], p["b1"], p["m1"], p["v1"]))
    out = lax.conv_general_dilated(out, p["w2"], (1, 1), ((1, 1), (1, 1)), dimension_numbers=dn)
    out = jax.nn.relu(bn(out, p["g2"], p["b2"], p["m2"], p["v2"]))
    out = lax.conv_general_dilated(out, p["w3"], (1, 1), "VALID", dimension_numbers=dn)
    out = bn(out, p["g3"], p["b3"], p["m3"], p["v3"])
    return jax.nn.relu(out + x)


def make_params(key, inplanes, planes):
    ks = jax.random.split(key, 12)
    cout = planes * EXPANSION

    def bn_params(k, c):
        k1, k2, k3, k4 = jax.random.split(k, 4)
        g = 1.0 + 0.1 * jax.random.normal(k1, (c,), jnp.float32)
        b = 0.1 * jax.random.normal(k2, (c,), jnp.float32)
        m = 0.05 * jax.random.normal(k3, (c,), jnp.float32)
        v = 1.0 + 0.1 * jnp.abs(jax.random.normal(k4, (c,), jnp.float32))
        return g, b, m, v

    p = {}
    p["w1"] = 0.1 * jax.random.normal(ks[0], (planes, inplanes, 1, 1), jnp.float32)
    p["w2"] = 0.1 * jax.random.normal(ks[1], (planes, planes, 3, 3), jnp.float32)
    p["w3"] = 0.1 * jax.random.normal(ks[2], (cout, planes, 1, 1), jnp.float32)
    p["g1"], p["b1"], p["m1"], p["v1"] = bn_params(ks[3], planes)
    p["g2"], p["b2"], p["m2"], p["v2"] = bn_params(ks[4], planes)
    p["g3"], p["b3"], p["m3"], p["v3"] = bn_params(ks[5], cout)
    return p


if __name__ == "__main__":
    key = jax.random.PRNGKey(0)
    kx, kp = jax.random.split(key)

    N, planes, H, W = 2, 4, 16, 16
    inplanes = planes * EXPANSION                   # residual add requires Cin == Cout
    x = jax.random.normal(kx, (N, inplanes, H, W), jnp.float32)   # NCHW like PyTorch
    params = make_params(kp, inplanes, planes)

    ref = jax.block_until_ready(bottleneck_reference(x, params))

    fwd = jax.jit(bottleneck_forward, static_argnames=("tile_h", "out_dtype"))

    # Exact-precision path (f32 everywhere), tiled over H so the halo logic runs.
    prep_f32 = prepare_params(params, compute_dtype=jnp.float32)
    out_f32 = jax.block_until_ready(fwd(x, prep_f32, tile_h=8, out_dtype=jnp.float32))
    assert out_f32.shape == ref.shape == (N, inplanes, H, W)
    err32 = float(jnp.max(jnp.abs(out_f32 - ref)))
    assert jnp.allclose(out_f32, ref, rtol=1e-4, atol=1e-4), f"f32 max abs err {err32}"

    # Default fast path: bf16 activations/weights on the MXU, f32 accumulate/BN/ReLU.
    prep_bf16 = prepare_params(params, compute_dtype=jnp.bfloat16)
    out_bf16 = jax.block_until_ready(fwd(x, prep_bf16, tile_h=None, out_dtype=jnp.float32))
    errbf = float(jnp.max(jnp.abs(out_bf16 - ref)))
    assert jnp.allclose(out_bf16, ref, rtol=5e-2, atol=5e-2), f"bf16 max abs err {errbf}"

    print("KERNEL_OK")
</pallas_src>

<mosaic_0001>
module attributes {stable_mosaic.version = 11 : i64} {
  func.func @_bottleneck_kernel(%arg0: i32, %arg1: i32, %arg2: memref<1x8x24x16xf32, #tpu.memory_space<vmem>>, %arg3: memref<1x1x24x16xf32, #tpu.memory_space<vmem>>, %arg4: memref<1x1x24x16xf32, #tpu.memory_space<vmem>>, %arg5: memref<16x4xf32, #tpu.memory_space<vmem>>, %arg6: memref<1x4xf32, #tpu.memory_space<vmem>>, %arg7: memref<1x4xf32, #tpu.memory_space<vmem>>, %arg8: memref<9x4x4xf32, #tpu.memory_space<vmem>>, %arg9: memref<1x4xf32, #tpu.memory_space<vmem>>, %arg10: memref<1x4xf32, #tpu.memory_space<vmem>>, %arg11: memref<4x16xf32, #tpu.memory_space<vmem>>, %arg12: memref<1x16xf32, #tpu.memory_space<vmem>>, %arg13: memref<1x16xf32, #tpu.memory_space<vmem>>, %arg14: memref<1x8x16x16xf32, #tpu.memory_space<vmem>>, %arg15: memref<248x4xf32, #tpu.memory_space<vmem>>) attributes {dimension_semantics = [#tpu.dimension_semantics<parallel>, #tpu.dimension_semantics<parallel>], iteration_bounds = array<i64: 2, 2>, scalar_prefetch = 0 : i64, scratch_operands = 1 : i64, tpu.core_type = #tpu.core_type<tc>, window_params = [{transform_indices = @transform_0, window_bounds = array<i64: 1, 8, 24, 16>}, {transform_indices = @transform_1, window_bounds = array<i64: 1, 1, 24, 16>}, {transform_indices = @transform_2, window_bounds = array<i64: 1, 1, 24, 16>}, {pipeline_mode = #tpu.pipeline_mode<synchronous>, transform_indices = @transform_3, window_bounds = array<i64: 16, 4>}, {pipeline_mode = #tpu.pipeline_mode<synchronous>, transform_indices = @transform_4, window_bounds = array<i64: 1, 4>}, {pipeline_mode = #tpu.pipeline_mode<synchronous>, transform_indices = @transform_5, window_bounds = array<i64: 1, 4>}, {pipeline_mode = #tpu.pipeline_mode<synchronous>, transform_indices = @transform_6, window_bounds = array<i64: 9, 4, 4>}, {pipeline_mode = #tpu.pipeline_mode<synchronous>, transform_indices = @transform_7, window_bounds = array<i64: 1, 4>}, {pipeline_mode = #tpu.pipeline_mode<synchronous>, transform_indices = @transform_8, window_bounds = array<i64: 1, 4>}, {pipeline_mode = #tpu.pipeline_mode<synchronous>, transform_indices = @transform_9, window_bounds = array<i64: 4, 16>}, {pipeline_mode = #tpu.pipeline_mode<synchronous>, transform_indices = @transform_10, window_bounds = array<i64: 1, 16>}, {pipeline_mode = #tpu.pipeline_mode<synchronous>, transform_indices = @transform_11, window_bounds = array<i64: 1, 16>}, {transform_indices = @transform_12, window_bounds = array<i64: 1, 8, 16, 16>}]} {
    %0 = tpu.iota {dimensions = array<i32: 0>} : vector<192x1xi32>
    %c24_i32 = arith.constant 24 : i32
    %c0_i32 = arith.constant 0 : i32
    %1 = arith.cmpi eq, %c24_i32, %c0_i32 : i32
    %c1_i32 = arith.constant 1 : i32
    %2 = arith.select %1, %c1_i32, %c24_i32 : i32
    %3 = vector.broadcast %2 : i32 to vector<192x1xi32>
    %4 = arith.remsi %0, %3 : vector<192x1xi32>
    %c0_i32_0 = arith.constant 0 : i32
    %5 = vector.broadcast %c0_i32_0 : i32 to vector<192x1xi32>
    %6 = arith.cmpi ne, %4, %5 : vector<192x1xi32>
    %c0_i32_1 = arith.constant 0 : i32
    %7 = vector.broadcast %c0_i32_1 : i32 to vector<192x1xi32>
    %8 = arith.cmpi slt, %4, %7 : vector<192x1xi32>
    %c0_i32_2 = arith.constant 0 : i32
    %9 = arith.cmpi slt, %2, %c0_i32_2 : i32
    %10 = vector.broadcast %9 : i1 to vector<192x1xi1>
    %11 = vector.broadcast %10 : vector<192x1xi1> to vector<192x1xi1>
    %12 = arith.xori %8, %11 : vector<192x1xi1>
    %13 = arith.andi %12, %6 : vector<192x1xi1>
    %14 = vector.broadcast %2 : i32 to vector<192x1xi32>
    %15 = arith.addi %4, %14 : vector<192x1xi32>
    %16 = arith.select %13, %15, %4 : vector<192x1xi1>, vector<192x1xi32>
    %c1_i32_3 = arith.constant 1 : i32
    %17 = vector.broadcast %c1_i32_3 : i32 to vector<192x1xi32>
    %18 = arith.cmpi sge, %16, %17 : vector<192x1xi32>
    %c16_i32 = arith.constant 16 : i32
    %19 = vector.broadcast %c16_i32 : i32 to vector<192x1xi32>
    %20 = arith.cmpi sle, %16, %19 : vector<192x1xi32>
    %21 = arith.andi %18, %20 : vector<192x1xi1>
    %22 = tpu.iota {dimensions = array<i32: 0>} : vector<24x1xi32>
    %c1_i32_4 = arith.constant 1 : i32
    %23 = vector.broadcast %c1_i32_4 : i32 to vector<24x1xi32>
    %24 = arith.cmpi sge, %22, %23 : vector<24x1xi32>
    %c16_i32_5 = arith.constant 16 : i32
    %25 = vector.broadcast %c16_i32_5 : i32 to vector<24x1xi32>
    %26 = arith.cmpi sle, %22, %25 : vector<24x1xi32>
    %27 = arith.andi %24, %26 : vector<24x1xi1>
    %c0 = arith.constant 0 : index
    %c0_6 = arith.constant 0 : index
    %c0_7 = arith.constant 0 : index
    %c0_8 = arith.constant 0 : index
    %28 = vector.load %arg2[%c0, %c0_6, %c0_7, %c0_8] : memref<1x8x24x16xf32, #tpu.memory_space<vmem>>, vector<1x8x24x16xf32>
    %29 = vector.shape_cast %28 : vector<1x8x24x16xf32> to vector<8x24x16xf32>
    %30 = vector.shape_cast %29 : vector<8x24x16xf32> to vector<192x16xf32>
    %c0_9 = arith.constant 0 : index
    %c0_10 = arith.constant 0 : index
    %31 = vector.load %arg5[%c0_9, %c0_10] : memref<16x4xf32, #tpu.memory_space<vmem>>, vector<16x4xf32>
    %cst = arith.constant dense<0.000000e+00> : vector<192x4xf32>
    %32 = tpu.matmul %30, %31, %cst {dimension_numbers = #tpu.dot_dimension_numbers<[1], [0], [0], [1], [0, 0, 1, 1], [], []>} : vector<192x16xf32>, vector<16x4xf32>, vector<192x4xf32> -> vector<192x4xf32>
    %c0_11 = arith.constant 0 : index
    %c0_12 = arith.constant 0 : index
    %33 = vector.load %arg6[%c0_11, %c0_12] : memref<1x4xf32, #tpu.memory_space<vmem>>, vector<1x4xf32>
    %34 = vector.broadcast %33 : vector<1x4xf32> to vector<192x4xf32>
    %35 = arith.mulf %32, %34 : vector<192x4xf32>
    %c0_13 = arith.constant 0 : index
    %c0_14 = arith.constant 0 : index
    %36 = vector.load %arg7[%c0_13, %c0_14] : memref<1x4xf32, #tpu.memory_space<vmem>>, vector<1x4xf32>
    %37 = vector.broadcast %36 : vector<1x4xf32> to vector<192x4xf32>
    %38 = arith.addf %35, %37 : vector<192x4xf32>
    %cst_15 = arith.constant 0.000000e+00 : f32
    %39 = vector.broadcast %cst_15 : f32 to vector<192x4xf32>
    %40 = arith.maximumf %38, %39 : vector<192x4xf32>
    %cst_16 = arith.constant 0.000000e+00 : f32
    %41 = vector.shape_cast %21 : vector<192x1xi1> to vector<192x1xi1>
    %42 = vector.broadcast %41 : vector<192x1xi1> to vector<192x4xi1>
    %43 = vector.broadcast %cst_16 : f32 to vector<192x4xf32>
    %44 = arith.select %42, %40, %43 : vector<192x4xi1>, vector<192x4xf32>
    %c24 = arith.constant 24 : index
    %c0_17 = arith.constant 0 : index
    %45 = vector.load %arg15[%c24, %c0_17] : memref<248x4xf32, #tpu.memory_space<vmem>>, vector<192x4xf32>
    tpu.vector_store %arg15[%c24, %c0_17], %44 {strides = array<i32>} : memref<248x4xf32, #tpu.memory_space<vmem>>, vector<192x4xf32>,
    %c0_18 = arith.constant 0 : index
    %c0_19 = arith.constant 0 : index
    %c0_20 = arith.constant 0 : index
    %c0_21 = arith.constant 0 : index
    %46 = vector.load %arg3[%c0_18, %c0_19, %c0_20, %c0_21] : memref<1x1x24x16xf32, #tpu.memory_space<vmem>>, vector<1x1x24x16xf32>
    %47 = vector.shape_cast %46 : vector<1x1x24x16xf32> to vector<24x16xf32>
    %c0_22 = arith.constant 0 : index
    %c0_23 = arith.constant 0 : index
    %48 = vector.load %arg5[%c0_22, %c0_23] : memref<16x4xf32, #tpu.memory_space<vmem>>, vector<16x4xf32>
    %cst_24 = arith.constant dense<0.000000e+00> : vector<24x4xf32>
    %49 = tpu.matmul %47, %48, %cst_24 {dimension_numbers = #tpu.dot_dimension_numbers<[1], [0], [0], [1], [0, 0, 1, 1], [], []>} : vector<24x16xf32>, vector<16x4xf32>, vector<24x4xf32> -> vector<24x4xf32>
    %c0_25 = arith.constant 0 : index
    %c0_26 = arith.constant 0 : index
    %50 = vector.load %arg6[%c0_25, %c0_26] : memref<1x4xf32, #tpu.memory_space<vmem>>, vector<1x4xf32>
    %51 = vector.broadcast %50 : vector<1x4xf32> to vector<24x4xf32>
    %52 = arith.mulf %49, %51 : vector<24x4xf32>
    %c0_27 = arith.constant 0 : index
    %c0_28 = arith.constant 0 : index
    %53 = vector.load %arg7[%c0_27, %c0_28] : memref<1x4xf32, #tpu.memory_space<vmem>>, vector<1x4xf32>
    %54 = vector.broadcast %53 : vector<1x4xf32> to vector<24x4xf32>
    %55 = arith.addf %52, %54 : vector<24x4xf32>
    %cst_29 = arith.constant 0.000000e+00 : f32
    %56 = vector.broadcast %cst_29 : f32 to vector<24x4xf32>
    %57 = arith.maximumf %55, %56 : vector<24x4xf32>
    %c0_30 = arith.constant 0 : index
    %c0_31 = arith.constant 0 : index
    %c0_32 = arith.constant 0 : index
    %c0_33 = arith.constant 0 : index
    %58 = vector.load %arg4[%c0_30, %c0_31, %c0_32, %c0_33] : memref<1x1x24x16xf32, #tpu.memory_space<vmem>>, vector<1x1x24x16xf32>
    %59 = vector.shape_cast %58 : vector<1x1x24x16xf32> to vector<24x16xf32>
    %c0_34 = arith.constant 0 : index
    %c0_35 = arith.constant 0 : index
    %60 = vector.load %arg5[%c0_34, %c0_35] : memref<16x4xf32, #tpu.memory_space<vmem>>, vector<16x4xf32>
    %cst_36 = arith.constant dense<0.000000e+00> : vector<24x4xf32>
    %61 = tpu.matmul %59, %60, %cst_36 {dimension_numbers = #tpu.dot_dimension_numbers<[1], [0], [0], [1], [0, 0, 1, 1], [], []>} : vector<24x16xf32>, vector<16x4xf32>, vector<24x4xf32> -> vector<24x4xf32>
    %c0_37 = arith.constant 0 : index
    %c0_38 = arith.constant 0 : index
    %62 = vector.load %arg6[%c0_37, %c0_38] : memref<1x4xf32, #tpu.memory_space<vmem>>, vector<1x4xf32>
    %63 = vector.broadcast %62 : vector<1x4xf32> to vector<24x4xf32>
    %64 = arith.mulf %61, %63 : vector<24x4xf32>
    %c0_39 = arith.constant 0 : index
    %c0_40 = arith.constant 0 : index
    %65 = vector.load %arg7[%c0_39, %c0_40] : memref<1x4xf32, #tpu.memory_space<vmem>>, vector<1x4xf32>
    %66 = vector.broadcast %65 : vector<1x4xf32> to vector<24x4xf32>
    %67 = arith.addf %64, %66 : vector<24x4xf32>
    %cst_41 = arith.constant 0.000000e+00 : f32
    %68 = vector.broadcast %cst_41 : f32 to vector<24x4xf32>
    %69 = arith.maximumf %67, %68 : vector<24x4xf32>
    %c0_i32_42 = arith.constant 0 : i32
    %70 = arith.cmpi sgt, %arg1, %c0_i32_42 : i32
    %71 = vector.broadcast %70 : i1 to vector<24x1xi1>
    %72 = arith.andi %27, %71 : vector<24x1xi1>
    %cst_43 = arith.constant 0.000000e+00 : f32
    %73 = vector.shape_cast %72 : vector<24x1xi1> to vector<24x1xi1>
    %74 = vector.broadcast %73 : vector<24x1xi1> to vector<24x4xi1>
    %75 = vector.broadcast %cst_43 : f32 to vector<24x4xf32>
    %76 = arith.select %74, %57, %75 : vector<24x4xi1>, vector<24x4xf32>
    %c0_44 = arith.constant 0 : index
    %c0_45 = arith.constant 0 : index
    %77 = vector.load %arg15[%c0_44, %c0_45] : memref<248x4xf32, #tpu.memory_space<vmem>>, vector<24x4xf32>
    tpu.vector_store %arg15[%c0_44, %c0_45], %76 {strides = array<i32>} : memref<248x4xf32, #tpu.memory_space<vmem>>, vector<24x4xf32>,
    %c1_i32_46 = arith.constant 1 : i32
    %78 = arith.cmpi slt, %arg1, %c1_i32_46 : i32
    %79 = vector.broadcast %78 : i1 to vector<24x1xi1>
    %80 = arith.andi %27, %79 : vector<24x1xi1>
    %cst_47 = arith.constant 0.000000e+00 : f32
    %81 = vector.shape_cast %80 : vector<24x1xi1> to vector<24x1xi1>
    %82 = vector.broadcast %81 : vector<24x1xi1> to vector<24x4xi1>
    %83 = vector.broadcast %cst_47 : f32 to vector<24x4xf32>
    %84 = arith.select %82, %69, %83 : vector<24x4xi1>, vector<24x4xf32>
    %c216 = arith.constant 216 : index
    %c0_48 = arith.constant 0 : index
    %85 = vector.load %arg15[%c216, %c0_48] : memref<248x4xf32, #tpu.memory_space<vmem>>, vector<24x4xf32>
    tpu.vector_store %arg15[%c216, %c0_48], %84 {strides = array<i32>} : memref<248x4xf32, #tpu.memory_space<vmem>>, vector<24x4xf32>,
    %cst_49 = arith.constant 0.000000e+00 : f32
    %86 = vector.broadcast %cst_49 : f32 to vector<8x4xf32>
    %c240 = arith.constant 240 : index
    %c0_50 = arith.constant 0 : index
    %87 = vector.load %arg15[%c240, %c0_50] : memref<248x4xf32, #tpu.memory_space<vmem>>, vector<8x4xf32>
    tpu.vector_store %arg15[%c240, %c0_50], %86 {strides = array<i32>} : memref<248x4xf32, #tpu.memory_space<vmem>>, vector<8x4xf32>,
    %c0_51 = arith.constant 0 : index
    %c0_52 = arith.constant 0 : index
    %88 = vector.load %arg15[%c0_51, %c0_52] : memref<248x4xf32, #tpu.memory_space<vmem>>, vector<192x4xf32>
    %c0_53 = arith.constant 0 : index
    %c0_54 = arith.constant 0 : index
    %c0_55 = arith.constant 0 : index
    %89 = vector.load %arg8[%c0_53, %c0_54, %c0_55] : memref<9x4x4xf32, #tpu.memory_space<vmem>>, vector<1x4x4xf32>
    %90 = vector.shape_cast %89 : vector<1x4x4xf32> to vector<4x4xf32>
    %cst_56 = arith.constant dense<0.000000e+00> : vector<192x4xf32>
    %91 = tpu.matmul %88, %90, %cst_56 {dimension_numbers = #tpu.dot_dimension_numbers<[1], [0], [0], [1], [0, 0, 1, 1], [], []>} : vector<192x4xf32>, vector<4x4xf32>, vector<192x4xf32> -> vector<192x4xf32>
    %c1 = arith.constant 1 : index
    %c0_57 = arith.constant 0 : index
    %92 = vector.load %arg15[%c1, %c0_57] : memref<248x4xf32, #tpu.memory_space<vmem>>, vector<192x4xf32>
    %c1_58 = arith.constant 1 : index
    %c0_59 = arith.constant 0 : index
    %c0_60 = arith.constant 0 : index
    %93 = vector.load %arg8[%c1_58, %c0_59, %c0_60] : memref<9x4x4xf32, #tpu.memory_space<vmem>>, vector<1x4x4xf32>
    %94 = vector.shape_cast %93 : vector<1x4x4xf32> to vector<4x4xf32>
    %cst_61 = arith.constant dense<0.000000e+00> : vector<192x4xf32>
    %95 = tpu.matmul %92, %94, %cst_61 {dimension_numbers = #tpu.dot_dimension_numbers<[1], [0], [0], [1], [0, 0, 1, 1], [], []>} : vector<192x4xf32>, vector<4x4xf32>, vector<192x4xf32> -> vector<192x4xf32>
    %96 = arith.addf %91, %95 : vector<192x4xf32>
    %c2 = arith.constant 2 : index
    %c0_62 = arith.constant 0 : index
    %97 = vector.load %arg15[%c2, %c0_62] : memref<248x4xf32, #tpu.memory_space<vmem>>, vector<192x4xf32>
    %c2_63 = arith.constant 2 : index
    %c0_64 = arith.constant 0 : index
    %c0_65 = arith.constant 0 : index
    %98 = vector.load %arg8[%c2_63, %c0_64, %c0_65] : memref<9x4x4xf32, #tpu.memory_space<vmem>>, vector<1x4x4xf32>
    %99 = vector.shape_cast %98 : vector<1x4x4xf32> to vector<4x4xf32>
    %cst_66 = arith.constant dense<0.000000e+00> : vector<192x4xf32>
    %100 = tpu.matmul %97, %99, %cst_66 {dimension_numbers = #tpu.dot_dimension_numbers<[1], [0], [0], [1], [0, 0, 1, 1], [], []>} : vector<192x4xf32>, vector<4x4xf32>, vector<192x4xf32> -> vector<192x4xf32>
    %101 = arith.addf %96, %100 : vector<192x4xf32>
    %c24_67 = arith.constant 24 : index
    %c0_68 = arith.constant 0 : index
    %102 = vector.load %arg15[%c24_67, %c0_68] : memref<248x4xf32, #tpu.memory_space<vmem>>, vector<192x4xf32>
    %c3 = arith.constant 3 : index
    %c0_69 = arith.constant 0 : index
    %c0_70 = arith.constant 0 : index
    %103 = vector.load %arg8[%c3, %c0_69, %c0_70] : memref<9x4x4xf32, #tpu.memory_space<vmem>>, vector<1x4x4xf32>
    %104 = vector.shape_cast %103 : vector<1x4x4xf32> to vector<4x4xf32>
    %cst_71 = arith.constant dense<0.000000e+00> : vector<192x4xf32>
    %105 = tpu.matmul %102, %104, %cst_71 {dimension_numbers = #tpu.dot_dimension_numbers<[1], [0], [0], [1], [0, 0, 1, 1], [], []>} : vector<192x4xf32>, vector<4x4xf32>, vector<192x4xf32> -> vector<192x4xf32>
    %106 = arith.addf %101, %105 : vector<192x4xf32>
    %c25 = arith.constant 25 : index
    %c0_72 = arith.constant 0 : index
    %107 = vector.load %arg15[%c25, %c0_72] : memref<248x4xf32, #tpu.memory_space<vmem>>, vector<192x4xf32>
    %c4 = arith.constant 4 : index
    %c0_73 = arith.constant 0 : index
    %c0_74 = arith.constant 0 : index
    %108 = vector.load %arg8[%c4, %c0_73, %c0_74] : memref<9x4x4xf32, #tpu.memory_space<vmem>>, vector<1x4x4xf32>
    %109 = vector.shape_cast %108 : vector<1x4x4xf32> to vector<4x4xf32>
    %cst_75 = arith.constant dense<0.000000e+00> : vector<192x4xf32>
    %110 = tpu.matmul %107, %109, %cst_75 {dimension_numbers = #tpu.dot_dimension_numbers<[1], [0], [0], [1], [0, 0, 1, 1], [], []>} : vector<192x4xf32>, vector<4x4xf32>, vector<192x4xf32> -> vector<192x4xf32>
    %111 = arith.addf %106, %110 : vector<192x4xf32>
    %c26 = arith.constant 26 : index
    %c0_76 = arith.constant 0 : index
    %112 = vector.load %arg15[%c26, %c0_76] : memref<248x4xf32, #tpu.memory_space<vmem>>, vector<192x4xf32>
    %c5 = arith.constant 5 : index
    %c0_77 = arith.constant 0 : index
    %c0_78 = arith.constant 0 : index
    %113 = vector.load %arg8[%c5, %c0_77, %c0_78] : memref<9x4x4xf32, #tpu.memory_space<vmem>>, vector<1x4x4xf32>
    %114 = vector.shape_cast %113 : vector<1x4x4xf32> to vector<4x4xf32>
    %cst_79 = arith.constant dense<0.000000e+00> : vector<192x4xf32>
    %115 = tpu.matmul %112, %114, %cst_79 {dimension_numbers = #tpu.dot_dimension_numbers<[1], [0], [0], [1], [0, 0, 1, 1], [], []>} : vector<192x4xf32>, vector<4x4xf32>, vector<192x4xf32> -> vector<192x4xf32>
    %116 = arith.addf %111, %115 : vector<192x4xf32>
    %c48 = arith.constant 48 : index
    %c0_80 = arith.constant 0 : index
    %117 = vector.load %arg15[%c48, %c0_80] : memref<248x4xf32, #tpu.memory_space<vmem>>, vector<192x4xf32>
    %c6 = arith.constant 6 : index
    %c0_81 = arith.constant 0 : index
    %c0_82 = arith.constant 0 : index
    %118 = vector.load %arg8[%c6, %c0_81, %c0_82] : memref<9x4x4xf32, #tpu.memory_space<vmem>>, vector<1x4x4xf32>
    %119 = vector.shape_cast %118 : vector<1x4x4xf32> to vector<4x4xf32>
    %cst_83 = arith.constant dense<0.000000e+00> : vector<192x4xf32>
    %120 = tpu.matmul %117, %119, %cst_83 {dimension_numbers = #tpu.dot_dimension_numbers<[1], [0], [0], [1], [0, 0, 1, 1], [], []>} : vector<192x4xf32>, vector<4x4xf32>, vector<192x4xf32> -> vector<192x4xf32>
    %121 = arith.addf %116, %120 : vector<192x4xf32>
    %c49 = arith.constant 49 : index
    %c0_84 = arith.constant 0 : index
    %122 = vector.load %arg15[%c49, %c0_84] : memref<248x4xf32, #tpu.memory_space<vmem>>, vector<192x4xf32>
    %c7 = arith.constant 7 : index
    %c0_85 = arith.constant 0 : index
    %c0_86 = arith.constant 0 : index
    %123 = vector.load %arg8[%c7, %c0_85, %c0_86] : memref<9x4x4xf32, #tpu.memory_space<vmem>>, vector<1x4x4xf32>
    %124 = vector.shape_cast %123 : vector<1x4x4xf32> to vector<4x4xf32>
    %cst_87 = arith.constant dense<0.000000e+00> : vector<192x4xf32>
    %125 = tpu.matmul %122, %124, %cst_87 {dimension_numbers = #tpu.dot_dimension_numbers<[1], [0], [0], [1], [0, 0, 1, 1], [], []>} : vector<192x4xf32>, vector<4x4xf32>, vector<192x4xf32> -> vector<192x4xf32>
    %126 = arith.addf %121, %125 : vector<192x4xf32>
    %c50 = arith.constant 50 : index
    %c0_88 = arith.constant 0 : index
    %127 = vector.load %arg15[%c50, %c0_88] : memref<248x4xf32, #tpu.memory_space<vmem>>, vector<192x4xf32>
    %c8 = arith.constant 8 : index
    %c0_89 = arith.constant 0 : index
    %c0_90 = arith.constant 0 : index
    %128 = vector.load %arg8[%c8, %c0_89, %c0_90] : memref<9x4x4xf32, #tpu.memory_space<vmem>>, vector<1x4x4xf32>
    %129 = vector.shape_cast %128 : vector<1x4x4xf32> to vector<4x4xf32>
    %cst_91 = arith.constant dense<0.000000e+00> : vector<192x4xf32>
    %130 = tpu.matmul %127, %129, %cst_91 {dimension_numbers = #tpu.dot_dimension_numbers<[1], [0], [0], [1], [0, 0, 1, 1], [], []>} : vector<192x4xf32>, vector<4x4xf32>, vector<192x4xf32> -> vector<192x4xf32>
    %131 = arith.addf %126, %130 : vector<192x4xf32>
    %c0_92 = arith.constant 0 : index
    %c0_93 = arith.constant 0 : index
    %132 = vector.load %arg9[%c0_92, %c0_93] : memref<1x4xf32, #tpu.memory_space<vmem>>, vector<1x4xf32>
    %133 = vector.broadcast %132 : vector<1x4xf32> to vector<192x4xf32>
    %134 = arith.mulf %131, %133 : vector<192x4xf32>
    %c0_94 = arith.constant 0 : index
    %c0_95 = arith.constant 0 : index
    %135 = vector.load %arg10[%c0_94, %c0_95] : memref<1x4xf32, #tpu.memory_space<vmem>>, vector<1x4xf32>
    %136 = vector.broadcast %135 : vector<1x4xf32> to vector<192x4xf32>
    %137 = arith.addf %134, %136 : vector<192x4xf32>
    %cst_96 = arith.constant 0.000000e+00 : f32
    %138 = vector.broadcast %cst_96 : f32 to vector<192x4xf32>
    %139 = arith.maximumf %137, %138 : vector<192x4xf32>
    %c0_97 = arith.constant 0 : index
    %c0_98 = arith.constant 0 : index
    %140 = vector.load %arg11[%c0_97, %c0_98] : memref<4x16xf32, #tpu.memory_space<vmem>>, vector<4x16xf32>
    %cst_99 = arith.constant dense<0.000000e+00> : vector<192x16xf32>
    %141 = tpu.matmul %139, %140, %cst_99 {dimension_numbers = #tpu.dot_dimension_numbers<[1], [0], [0], [1], [0, 0, 1, 1], [], []>} : vector<192x4xf32>, vector<4x16xf32>, vector<192x16xf32> -> vector<192x16xf32>
    %c0_100 = arith.constant 0 : index
    %c0_101 = arith.constant 0 : index
    %142 = vector.load %arg12[%c0_100, %c0_101] : memref<1x16xf32, #tpu.memory_space<vmem>>, vector<1x16xf32>
    %143 = vector.broadcast %142 : vector<1x16xf32> to vector<192x16xf32>
    %144 = arith.mulf %141, %143 : vector<192x16xf32>
    %c0_102 = arith.constant 0 : index
    %c0_103 = arith.constant 0 : index
    %145 = vector.load %arg13[%c0_102, %c0_103] : memref<1x16xf32, #tpu.memory_space<vmem>>, vector<1x16xf32>
    %146 = vector.broadcast %145 : vector<1x16xf32> to vector<192x16xf32>
    %147 = arith.addf %144, %146 : vector<192x16xf32>
    %148 = vector.shape_cast %147 : vector<192x16xf32> to vector<8x24x16xf32>
    %149 = vector.extract_strided_slice %148 {offsets = [0, 0, 0], sizes = [8, 16, 16], strides = [1, 1, 1]} : vector<8x24x16xf32> to vector<8x16x16xf32>
    %c0_104 = arith.constant 0 : index
    %c0_105 = arith.constant 0 : index
    %c1_106 = arith.constant 1 : index
    %c0_107 = arith.constant 0 : index
    %150 = vector.load %arg2[%c0_104, %c0_105, %c1_106, %c0_107] : memref<1x8x24x16xf32, #tpu.memory_space<vmem>>, vector<1x8x16x16xf32>
    %151 = vector.shape_cast %150 : vector<1x8x16x16xf32> to vector<8x16x16xf32>
    %152 = arith.addf %149, %151 : vector<8x16x16xf32>
    %cst_108 = arith.constant 0.000000e+00 : f32
    %153 = vector.broadcast %cst_108 : f32 to vector<8x16x16xf32>
    %154 = arith.maximumf %152, %153 : vector<8x16x16xf32>
    %c0_109 = arith.constant 0 : index
    %c0_110 = arith.constant 0 : index
    %c0_111 = arith.constant 0 : index
    %c0_112 = arith.constant 0 : index
    %155 = vector.load %arg14[%c0_109, %c0_110, %c0_111, %c0_112] : memref<1x8x16x16xf32, #tpu.memory_space<vmem>>, vector<1x8x16x16xf32>
    %156 = vector.shape_cast %155 : vector<1x8x16x16xf32> to vector<8x16x16xf32>
    %157 = vector.shape_cast %154 : vector<8x16x16xf32> to vector<1x8x16x16xf32>
    tpu.vector_store %arg14[%c0_109, %c0_110, %c0_111, %c0_112], %157 {strides = array<i32>} : memref<1x8x16x16xf32, #tpu.memory_space<vmem>>, vector<1x8x16x16xf32>,
    return
  }
  func.func @transform_0(%arg0: i32, %arg1: i32) -> (i32, i32, i32, i32) {
    %c0_i32 = arith.constant 0 : i32
    %c0_i32_0 = arith.constant 0 : i32
    %c0_i32_1 = arith.constant 0 : i32
    return %arg0, %arg1, %c0_i32, %c0_i32_0 : i32, i32, i32, i32
  }
  func.func @transform_1(%arg0: i32, %arg1: i32) -> (i32, i32, i32, i32) {
    %c8_i32 = arith.constant 8 : i32
    %0 = arith.muli %arg1, %c8_i32 : i32
    %c1_i32 = arith.constant 1 : i32
    %1 = arith.subi %0, %c1_i32 : i32
    %c0_i32 = arith.constant 0 : i32
    %2 = arith.maxsi %1, %c0_i32 : i32
    %c0_i32_0 = arith.constant 0 : i32
    %c0_i32_1 = arith.constant 0 : i32
    %c0_i32_2 = arith.constant 0 : i32
    return %arg0, %2, %c0_i32_0, %c0_i32_1 : i32, i32, i32, i32
  }
  func.func @transform_2(%arg0: i32, %arg1: i32) -> (i32, i32, i32, i32) {
    %c1_i32 = arith.constant 1 : i32
    %0 = arith.addi %arg1, %c1_i32 : i32
    %c8_i32 = arith.constant 8 : i32
    %1 = arith.muli %0, %c8_i32 : i32
    %c15_i32 = arith.constant 15 : i32
    %2 = arith.minsi %1, %c15_i32 : i32
    %c0_i32 = arith.constant 0 : i32
    %c0_i32_0 = arith.constant 0 : i32
    %c0_i32_1 = arith.constant 0 : i32
    return %arg0, %2, %c0_i32, %c0_i32_0 : i32, i32, i32, i32
  }
  func.func @transform_3(%arg0: i32, %arg1: i32) -> (i32, i32) {
    %c0_i32 = arith.constant 0 : i32
    %c0_i32_0 = arith.constant 0 : i32
    %c0_i32_1 = arith.constant 0 : i32
    return %c0_i32, %c0_i32_0 : i32, i32
  }
  func.func @transform_4(%arg0: i32, %arg1: i32) -> (i32, i32) {
    %c0_i32 = arith.constant 0 : i32
    %c0_i32_0 = arith.constant 0 : i32
    %c0_i32_1 = arith.constant 0 : i32
    return %c0_i32, %c0_i32_0 : i32, i32
  }
  func.func @transform_5(%arg0: i32, %arg1: i32) -> (i32, i32) {
    %c0_i32 = arith.constant 0 : i32
    %c0_i32_0 = arith.constant 0 : i32
    %c0_i32_1 = arith.constant 0 : i32
    return %c0_i32, %c0_i32_0 : i32, i32
  }
  func.func @transform_6(%arg0: i32, %arg1: i32) -> (i32, i32, i32) {
    %c0_i32 = arith.constant 0 : i32
    %c0_i32_0 = arith.constant 0 : i32
    %c0_i32_1 = arith.constant 0 : i32
    %c0_i32_2 = arith.constant 0 : i32
    return %c0_i32, %c0_i32_0, %c0_i32_1 : i32, i32, i32
  }
  func.func @transform_7(%arg0: i32, %arg1: i32) -> (i32, i32) {
    %c0_i32 = arith.constant 0 : i32
    %c0_i32_0 = arith.constant 0 : i32
    %c0_i32_1 = arith.constant 0 : i32
    return %c0_i32, %c0_i32_0 : i32, i32
  }
  func.func @transform_8(%arg0: i32, %arg1: i32) -> (i32, i32) {
    %c0_i32 = arith.constant 0 : i32
    %c0_i32_0 = arith.constant 0 : i32
    %c0_i32_1 = arith.constant 0 : i32
    return %c0_i32, %c0_i32_0 : i32, i32
  }
  func.func @transform_9(%arg0: i32, %arg1: i32) -> (i32, i32) {
    %c0_i32 = arith.constant 0 : i32
    %c0_i32_0 = arith.constant 0 : i32
    %c0_i32_1 = arith.constant 0 : i32
    return %c0_i32, %c0_i32_0 : i32, i32
  }
  func.func @transform_10(%arg0: i32, %arg1: i32) -> (i32, i32) {
    %c0_i32 = arith.constant 0 : i32
    %c0_i32_0 = arith.constant 0 : i32
    %c0_i32_1 = arith.constant 0 : i32
    return %c0_i32, %c0_i32_0 : i32, i32
  }
  func.func @transform_11(%arg0: i32, %arg1: i32) -> (i32, i32) {
    %c0_i32 = arith.constant 0 : i32
    %c0_i32_0 = arith.constant 0 : i32
    %c0_i32_1 = arith.constant 0 : i32
    return %c0_i32, %c0_i32_0 : i32, i32
  }
  func.func @transform_12(%arg0: i32, %arg1: i32) -> (i32, i32, i32, i32) {
    %c0_i32 = arith.constant 0 : i32
    %c0_i32_0 = arith.constant 0 : i32
    %c0_i32_1 = arith.constant 0 : i32
    return %arg0, %arg1, %c0_i32, %c0_i32_0 : i32, i32, i32, i32
  }
}

</mosaic_0001>

<llo_original>
// kernel: bottleneck_forward.1
$region0: #{bottleneck_forward.1}
  #allocation0 [shape = 'u32[]', space=smem, size = 0x4, offset = 0x4, fixed_abs, tag = 'smem constant byte address 0x4 - core index']
  #allocation1 [shape = 'u32[72,128]{1,0:T(1,128)}', space=vmem, size = 0x9000, scoped, tag = 'internal scratch']
  #allocation2 [shape = 'f32[248,4]{1,0:T(8,128)}', space=vmem, size = 0x1f000, scoped, tag = 'scratch operand']
  %s0 = inlined_call_operand.vmem [shape: f32[2,16,24,16], index: 0, kind: input, shape index: {}, may-alias: {0,1,2}]
  %s1 = inlined_call_operand.vmem [shape: f32[2,16,24,16], index: 1, kind: input, shape index: {}, may-alias: {0,1,2}]
  %s2 = inlined_call_operand.vmem [shape: f32[2,16,24,16], index: 2, kind: input, shape index: {}, may-alias: {0,1,2}]
  %s3 = inlined_call_operand.vmem [shape: f32[16,4], index: 3, kind: input, shape index: {}]
  %s4 = inlined_call_operand.vmem [shape: f32[1,4], index: 4, kind: input, shape index: {}]
  %s5 = inlined_call_operand.vmem [shape: f32[1,4], index: 5, kind: input, shape index: {}]
  %s6 = inlined_call_operand.vmem [shape: f32[9,4,4], index: 6, kind: input, shape index: {}]
  %s7 = inlined_call_operand.vmem [shape: f32[1,4], index: 7, kind: input, shape index: {}]
  %s8 = inlined_call_operand.vmem [shape: f32[1,4], index: 8, kind: input, shape index: {}]
  %s9 = inlined_call_operand.vmem [shape: f32[4,16], index: 9, kind: input, shape index: {}]
  %s10 = inlined_call_operand.vmem [shape: f32[1,16], index: 10, kind: input, shape index: {}]
  %s11 = inlined_call_operand.vmem [shape: f32[1,16], index: 11, kind: input, shape index: {}]
  %s12 = inlined_call_operand.vmem [shape: f32[2,16,16,16], index: 12, kind: output, shape index: {}]
  %s13 = sld [smem:[#allocation0]]
  $region81: #{bottleneck_forward.1} parent=0
    _
  %s15 = ssub.s32 1, %s13
  %s16 = scalar_select 0, %s15, %s13
  loop: start=0, step=1, limit=6
  $region2: #{bottleneck_forward.1} parent=0 // loop_pre_header
    _
  $region3: #{bottleneck_forward.1} parent=0 // loop_header
    %s18 = sphi 0, %s22
    %p19 = scmp.ge.s32.totalorder %s18, 6
    %s25 = sphi 0, %s37
    %s26 = sphi 0, %s33
    %s27 = sphi 0, %s25
    %s28 = sphi 0, %s26
    %s29 = sphi 0, %s27
    %s30 = sphi 0, %s28
    %s42 = sphi 0, %s44
    %s45 = sphi 0, %s42
    %s46 = sphi 0, %s45
    %s62 = sphi 0, %s46
    %s78 = sphi 0, %s80
    %s81 = sphi 0, %s78
    %s82 = sphi 0, %s81
    %s98 = sphi 0, %s82
    %s114 = sphi 0, %s116
    %s117 = sphi 0, %s114
    %s118 = sphi 0, %s117
    %s134 = sphi 0, %s118
    %s138 = sphi 0, %s138
    %s140 = sphi 0, %s138
    %s141 = sphi 0, %s140
    %s155 = sphi 0, %s141
    %s159 = sphi 0, %s159
    %s161 = sphi 0, %s159
    %s162 = sphi 0, %s161
    %s176 = sphi 0, %s162
    %s180 = sphi 0, %s180
    %s182 = sphi 0, %s180
    %s183 = sphi 0, %s182
    %s197 = sphi 0, %s183
    %s201 = sphi 0, %s201
    %s203 = sphi 0, %s201
    %s204 = sphi 0, %s203
    %s218 = sphi 0, %s204
    %s222 = sphi 0, %s222
    %s224 = sphi 0, %s222
    %s225 = sphi 0, %s224
    %s239 = sphi 0, %s225
    %s243 = sphi 0, %s243
    %s245 = sphi 0, %s243
    %s246 = sphi 0, %s245
    %s260 = sphi 0, %s246
    %s264 = sphi 0, %s264
    %s266 = sphi 0, %s264
    %s267 = sphi 0, %s266
    %s281 = sphi 0, %s267
    %s285 = sphi 0, %s285
    %s287 = sphi 0, %s285
    %s288 = sphi 0, %s287
    %s302 = sphi 0, %s288
    %s306 = sphi 0, %s306
    %s308 = sphi 0, %s306
    %s309 = sphi 0, %s308
    %s323 = sphi 0, %s309
    %s331 = sphi 0, %s333
    %s334 = sphi 0, %s331
    %s335 = sphi 0, %s334
    %s351 = sphi 0, %s335
  $region4: #{bottleneck_forward.1} parent=0 // loop_header_branch
    %21 = sbr.rel (%p19) target = $region8
  $region5: #{bottleneck_forward.1} parent=0 // loop_body
    %s23 = ssub.s32 %s18, 1
    %s24 = ssub.s32 %s18, 2
    %s31 = sadd.s32 1, %s26
    %p32 = scmp.ge.s32.totalorder %s31, 2
    %s33 = scalar_select %p32, 0, %s31
    %s34 = sadd.s32 1, %s25
    %s35 = scalar_select %p32, %s34, %s25
    %p36 = scmp.ge.s32.totalorder %s35, 2
    %s37 = scalar_select %p36, 0, %s35
    %s38 = ssub.s32 %s25, %s37
    %s39 = ssub.s32 %s26, %s33
    %s40 = sor.u32 %s38, %s39
    %p41 = scmp.eq.s32.totalorder %s40, 0
    %s43 = sadd.s32 %s42, 1
    %s44 = scalar_select %p41, %s42, %s43
    %p47 = pneg %p41
    %p48 = scmp.eq.s32.totalorder %s18, 3
    %p49 = por %p47, %p48
    %p50 = scmp.ne.s32.totalorder %s42, %s45
    %p51 = scmp.eq.s32.totalorder %s18, 0
    %p52 = por %p50, %p51
    %p53 = scmp.ne.s32.totalorder %s42, %s45
    %p54 = scmp.eq.s32.totalorder %s23, 3
    %p55 = por %p53, %p54
    %p56 = scmp.ne.s32.totalorder %s45, %s46
    %p57 = scmp.eq.s32.totalorder %s23, 0
    %p58 = por %p56, %p57
    %p59 = scmp.ne.s32.totalorder %s45, %s46
    %p60 = scmp.eq.s32.totalorder %s24, 3
    %p61 = por %p59, %p60
    %p63 = scmp.ne.s32.totalorder %s46, %s62
    %p64 = scmp.eq.s32.totalorder %s24, 0
    %p65 = por %p63, %p64
    %s66 = smul.u32 %s26, 8
    %s67 = ssub.s32 %s66, 1
    %p68 = scmp.gt.s32.totalorder %s67, 0
    %s69 = scalar_select %p68, %s67, 0
    %s70 = smul.u32 %s33, 8
    %s71 = ssub.s32 %s70, 1
    %p72 = scmp.gt.s32.totalorder %s71, 0
    %s73 = scalar_select %p72, %s71, 0
    %s74 = ssub.s32 %s25, %s37
    %s75 = ssub.s32 %s69, %s73
    %s76 = sor.u32 %s74, %s75
    %p77 = scmp.eq.s32.totalorder %s76, 0
    %s79 = sadd.s32 %s78, 1
    %s80 = scalar_select %p77, %s78, %s79
    %p83 = pneg %p77
    %p84 = scmp.eq.s32.totalorder %s18, 3
    %p85 = por %p83, %p84
    %p86 = scmp.ne.s32.totalorder %s78, %s81
    %p87 = scmp.eq.s32.totalorder %s18, 0
    %p88 = por %p86, %p87
    %p89 = scmp.ne.s32.totalorder %s78, %s81
    %p90 = scmp.eq.s32.totalorder %s23, 3
    %p91 = por %p89, %p90
    %p92 = scmp.ne.s32.totalorder %s81, %s82
    %p93 = scmp.eq.s32.totalorder %s23, 0
    %p94 = por %p92, %p93
    %p95 = scmp.ne.s32.totalorder %s81, %s82
    %p96 = scmp.eq.s32.totalorder %s24, 3
    %p97 = por %p95, %p96
    %p99 = scmp.ne.s32.totalorder %s82, %s98
    %p100 = scmp.eq.s32.totalorder %s24, 0
    %p101 = por %p99, %p100
    %s102 = sadd.s32 %s26, 1
    %s103 = smul.u32 %s102, 8
    %p104 = scmp.lt.s32.totalorder %s103, 15
    %s105 = scalar_select %p104, %s103, 15
    %s106 = sadd.s32 %s33, 1
    %s107 = smul.u32 %s106, 8
    %p108 = scmp.lt.s32.totalorder %s107, 15
    %s109 = scalar_select %p108, %s107, 15
    %s110 = ssub.s32 %s25, %s37
    %s111 = ssub.s32 %s105, %s109
    %s112 = sor.u32 %s110, %s111
    %p113 = scmp.eq.s32.totalorder %s112, 0
    %s115 = sadd.s32 %s114, 1
    %s116 = scalar_select %p113, %s114, %s115
    %p119 = pneg %p113
    %p120 = scmp.eq.s32.totalorder %s18, 3
    %p121 = por %p119, %p120
    %p122 = scmp.ne.s32.totalorder %s114, %s117
    %p123 = scmp.eq.s32.totalorder %s18, 0
    %p124 = por %p122, %p123
    %p125 = scmp.ne.s32.totalorder %s114, %s117
    %p126 = scmp.eq.s32.totalorder %s23, 3
    %p127 = por %p125, %p126
    %p128 = scmp.ne.s32.totalorder %s117, %s118
    %p129 = scmp.eq.s32.totalorder %s23, 0
    %p130 = por %p128, %p129
    %p131 = scmp.ne.s32.totalorder %s117, %s118
    %p132 = scmp.eq.s32.totalorder %s24, 3
    %p133 = por %p131, %p132
    %p135 = scmp.ne.s32.totalorder %s118, %s134
    %p136 = scmp.eq.s32.totalorder %s24, 0
    %p137 = por %p135, %p136
    %s139 = sadd.s32 %s138, 1
    %p142 = scmp.eq.s32.totalorder %s18, 3
    %p143 = scmp.ne.s32.totalorder %s138, %s140
    %p144 = scmp.eq.s32.totalorder %s18, 0
    %p145 = por %p143, %p144
    %p146 = scmp.ne.s32.totalorder %s138, %s140
    %p147 = scmp.eq.s32.totalorder %s23, 3
    %p148 = por %p146, %p147
    %p149 = scmp.ne.s32.totalorder %s140, %s141
    %p150 = scmp.eq.s32.totalorder %s23, 0
    %p151 = por %p149, %p150
    %p152 = scmp.ne.s32.totalorder %s140, %s141
    %p153 = scmp.eq.s32.totalorder %s24, 3
    %p154 = por %p152, %p153
    %p156 = scmp.ne.s32.totalorder %s141, %s155
    %p157 = scmp.eq.s32.totalorder %s24, 0
    %p158 = por %p156, %p157
    %s160 = sadd.s32 %s159, 1
    %p163 = scmp.eq.s32.totalorder %s18, 3
    %p164 = scmp.ne.s32.totalorder %s159, %s161
    %p165 = scmp.eq.s32.totalorder %s18, 0
    %p166 = por %p164, %p165
    %p167 = scmp.ne.s32.totalorder %s159, %s161
    %p168 = scmp.eq.s32.totalorder %s23, 3
    %p169 = por %p167, %p168
    %p170 = scmp.ne.s32.totalorder %s161, %s162
    %p171 = scmp.eq.s32.totalorder %s23, 0
    %p172 = por %p170, %p171
    %p173 = scmp.ne.s32.totalorder %s161, %s162
    %p174 = scmp.eq.s32.totalorder %s24, 3
    %p175 = por %p173, %p174
    %p177 = scmp.ne.s32.totalorder %s162, %s176
    %p178 = scmp.eq.s32.totalorder %s24, 0
    %p179 = por %p177, %p178
    %s181 = sadd.s32 %s180, 1
    %p184 = scmp.eq.s32.totalorder %s18, 3
    %p185 = scmp.ne.s32.totalorder %s180, %s182
    %p186 = scmp.eq.s32.totalorder %s18, 0
    %p187 = por %p185, %p186
    %p188 = scmp.ne.s32.totalorder %s180, %s182
    %p189 = scmp.eq.s32.totalorder %s23, 3
    %p190 = por %p188, %p189
    %p191 = scmp.ne.s32.totalorder %s182, %s183
    %p192 = scmp.eq.s32.totalorder %s23, 0
    %p193 = por %p191, %p192
    %p194 = scmp.ne.s32.totalorder %s182, %s183
    %p195 = scmp.eq.s32.totalorder %s24, 3
    %p196 = por %p194, %p195
    %p198 = scmp.ne.s32.totalorder %s183, %s197
    %p199 = scmp.eq.s32.totalorder %s24, 0
    %p200 = por %p198, %p199
    %s202 = sadd.s32 %s201, 1
    %p205 = scmp.eq.s32.totalorder %s18, 3
    %p206 = scmp.ne.s32.totalorder %s201, %s203
    %p207 = scmp.eq.s32.totalorder %s18, 0
    %p208 = por %p206, %p207
    %p209 = scmp.ne.s32.totalorder %s201, %s203
    %p210 = scmp.eq.s32.totalorder %s23, 3
    %p211 = por %p209, %p210
    %p212 = scmp.ne.s32.totalorder %s203, %s204
    %p213 = scmp.eq.s32.totalorder %s23, 0
    %p214 = por %p212, %p213
    %p215 = scmp.ne.s32.totalorder %s203, %s204
    %p216 = scmp.eq.s32.totalorder %s24, 3
    %p217 = por %p215, %p216
    %p219 = scmp.ne.s32.totalorder %s204, %s218
    %p220 = scmp.eq.s32.totalorder %s24, 0
    %p221 = por %p219, %p220
    %s223 = sadd.s32 %s222, 1
    %p226 = scmp.eq.s32.totalorder %s18, 3
    %p227 = scmp.ne.s32.totalorder %s222, %s224
    %p228 = scmp.eq.s32.totalorder %s18, 0
    %p229 = por %p227, %p228
    %p230 = scmp.ne.s32.totalorder %s222, %s224
    %p231 = scmp.eq.s32.totalorder %s23, 3
    %p232 = por %p230, %p231
    %p233 = scmp.ne.s32.totalorder %s224, %s225
    %p234 = scmp.eq.s32.totalorder %s23, 0
    %p235 = por %p233, %p234
    %p236 = scmp.ne.s32.totalorder %s224, %s225
    %p237 = scmp.eq.s32.totalorder %s24, 3
    %p238 = por %p236, %p237
    %p240 = scmp.ne.s32.totalorder %s225, %s239
    %p241 = scmp.eq.s32.totalorder %s24, 0
    %p242 = por %p240, %p241
    %s244 = sadd.s32 %s243, 1
    %p247 = scmp.eq.s32.totalorder %s18, 3
    %p248 = scmp.ne.s32.totalorder %s243, %s245
    %p249 = scmp.eq.s32.totalorder %s18, 0
    %p250 = por %p248, %p249
    %p251 = scmp.ne.s32.totalorder %s243, %s245
    %p252 = scmp.eq.s32.totalorder %s23, 3
    %p253 = por %p251, %p252
    %p254 = scmp.ne.s32.totalorder %s245, %s246
    %p255 = scmp.eq.s32.totalorder %s23, 0
    %p256 = por %p254, %p255
    %p257 = scmp.ne.s32.totalorder %s245, %s246
    %p258 = scmp.eq.s32.totalorder %s24, 3
    %p259 = por %p257, %p258
    %p261 = scmp.ne.s32.totalorder %s246, %s260
    %p262 = scmp.eq.s32.totalorder %s24, 0
    %p263 = por %p261, %p262
    %s265 = sadd.s32 %s264, 1
    %p268 = scmp.eq.s32.totalorder %s18, 3
    %p269 = scmp.ne.s32.totalorder %s264, %s266
    %p270 = scmp.eq.s32.totalorder %s18, 0
    %p271 = por %p269, %p270
    %p272 = scmp.ne.s32.totalorder %s264, %s266
    %p273 = scmp.eq.s32.totalorder %s23, 3
    %p274 = por %p272, %p273
    %p275 = scmp.ne.s32.totalorder %s266, %s267
    %p276 = scmp.eq.s32.totalorder %s23, 0
    %p277 = por %p275, %p276
    %p278 = scmp.ne.s32.totalorder %s266, %s267
    %p279 = scmp.eq.s32.totalorder %s24, 3
    %p280 = por %p278, %p279
    %p282 = scmp.ne.s32.totalorder %s267, %s281
    %p283 = scmp.eq.s32.totalorder %s24, 0
    %p284 = por %p282, %p283
    %s286 = sadd.s32 %s285, 1
    %p289 = scmp.eq.s32.totalorder %s18, 3
    %p290 = scmp.ne.s32.totalorder %s285, %s287
    %p291 = scmp.eq.s32.totalorder %s18, 0
    %p292 = por %p290, %p291
    %p293 = scmp.ne.s32.totalorder %s285, %s287
    %p294 = scmp.eq.s32.totalorder %s23, 3
    %p295 = por %p293, %p294
    %p296 = scmp.ne.s32.totalorder %s287, %s288
    %p297 = scmp.eq.s32.totalorder %s23, 0
    %p298 = por %p296, %p297
    %p299 = scmp.ne.s32.totalorder %s287, %s288
    %p300 = scmp.eq.s32.totalorder %s24, 3
    %p301 = por %p299, %p300
    %p303 = scmp.ne.s32.totalorder %s288, %s302
    %p304 = scmp.eq.s32.totalorder %s24, 0
    %p305 = por %p303, %p304
    %s307 = sadd.s32 %s306, 1
    %p310 = scmp.eq.s32.totalorder %s18, 3
    %p311 = scmp.ne.s32.totalorder %s306, %s308
    %p312 = scmp.eq.s32.totalorder %s18, 0
    %p313 = por %p311, %p312
    %p314 = scmp.ne.s32.totalorder %s306, %s308
    %p315 = scmp.eq.s32.totalorder %s23, 3
    %p316 = por %p314, %p315
    %p317 = scmp.ne.s32.totalorder %s308, %s309
    %p318 = scmp.eq.s32.totalorder %s23, 0
    %p319 = por %p317, %p318
    %p320 = scmp.ne.s32.totalorder %s308, %s309
    %p321 = scmp.eq.s32.totalorder %s24, 3
    %p322 = por %p320, %p321
    %p324 = scmp.ne.s32.totalorder %s309, %s323
    %p325 = scmp.eq.s32.totalorder %s24, 0
    %p326 = por %p324, %p325
    %s327 = ssub.s32 %s25, %s37
    %s328 = ssub.s32 %s26, %s33
    %s329 = sor.u32 %s327, %s328
    %p330 = scmp.eq.s32.totalorder %s329, 0
    %s332 = sadd.s32 %s331, 1
    %s333 = scalar_select %p330, %s331, %s332
    %p336 = pneg %p330
    %p337 = scmp.eq.s32.totalorder %s18, 3
    %p338 = por %p336, %p337
    %p339 = scmp.ne.s32.totalorder %s331, %s334
    %p340 = scmp.eq.s32.totalorder %s18, 0
    %p341 = por %p339, %p340
    %p342 = scmp.ne.s32.totalorder %s331, %s334
    %p343 = scmp.eq.s32.totalorder %s23, 3
    %p344 = por %p342, %p343
    %p345 = scmp.ne.s32.totalorder %s334, %s335
    %p346 = scmp.eq.s32.totalorder %s23, 0
    %p347 = por %p345, %p346
    %p348 = scmp.ne.s32.totalorder %s334, %s335
    %p349 = scmp.eq.s32.totalorder %s24, 3
    %p350 = por %p348, %p349
    %p352 = scmp.ne.s32.totalorder %s335, %s351
    %p353 = scmp.eq.s32.totalorder %s24, 0
    %p354 = por %p352, %p353
    %p355 = scmp.le.s32.totalorder 1, %s18
    %p356 = scmp.lt.s32.totalorder %s18, 5
    %p357 = pnand %p355, %p356
    %p358 = pneg %p357
    // Predicated region
    $region9: #{bottleneck_forward.1} parent=5 // pred_check
      _
    $region10: #{bottleneck_forward.1} parent=5 // pred_check_branch
      %360 = sbr.rel (%p357) target = $region12
    $region11: #{bottleneck_forward.1} parent=5 // pred_region
      %s361 = ssub.s32 %s18, 1
      // Predicated region
      $region13: #{bottleneck_forward.1} parent=11 // pred_check
        %p362 = pneg %p151
      $region14: #{bottleneck_forward.1} parent=11 // pred_check_branch
        %364 = sbr.rel (%p362) target = $region16
      $region15: #{bottleneck_forward.1} parent=11 // pred_region
        _
      $region16: #{bottleneck_forward.1} parent=11 // pred_fallthru
        _
      // Predicated region
      $region17: #{bottleneck_forward.1} parent=11 // pred_check
        %p365 = pneg %p172
      $region18: #{bottleneck_forward.1} parent=11 // pred_check_branch
        %367 = sbr.rel (%p365) target = $region20
      $region19: #{bottleneck_forward.1} parent=11 // pred_region
        _
      $region20: #{bottleneck_forward.1} parent=11 // pred_fallthru
        _
      // Predicated region
      $region21: #{bottleneck_forward.1} parent=11 // pred_check
        %p368 = pneg %p193
      $region22: #{bottleneck_forward.1} parent=11 // pred_check_branch
        %370 = sbr.rel (%p368) target = $region24
      $region23: #{bottleneck_forward.1} parent=11 // pred_region
        _
      $region24: #{bottleneck_forward.1} parent=11 // pred_fallthru
        _
      // Predicated region
      $region25: #{bottleneck_forward.1} parent=11 // pred_check
        %p371 = pneg %p214
      $region26: #{bottleneck_forward.1} parent=11 // pred_check_branch
        %373 = sbr.rel (%p371) target = $region28
      $region27: #{bottleneck_forward.1} parent=11 // pred_region
        _
      $region28: #{bottleneck_forward.1} parent=11 // pred_fallthru
        _
      // Predicated region
      $region29: #{bottleneck_forward.1} parent=11 // pred_check
        %p374 = pneg %p235
      $region30: #{bottleneck_forward.1} parent=11 // pred_check_branch
        %376 = sbr.rel (%p374) target = $region32
      $region31: #{bottleneck_forward.1} parent=11 // pred_region
        _
      $region32: #{bottleneck_forward.1} parent=11 // pred_fallthru
        _
      // Predicated region
      $region33: #{bottleneck_forward.1} parent=11 // pred_check
        %p377 = pneg %p256
      $region34: #{bottleneck_forward.1} parent=11 // pred_check_branch
        %379 = sbr.rel (%p377) target = $region36
      $region35: #{bottleneck_forward.1} parent=11 // pred_region
        _
      $region36: #{bottleneck_forward.1} parent=11 // pred_fallthru
        _
      // Predicated region
      $region37: #{bottleneck_forward.1} parent=11 // pred_check
        %p380 = pneg %p277
      $region38: #{bottleneck_forward.1} parent=11 // pred_check_branch
        %382 = sbr.rel (%p380) target = $region40
      $region39: #{bottleneck_forward.1} parent=11 // pred_region
        _
      $region40: #{bottleneck_forward.1} parent=11 // pred_fallthru
        _
      // Predicated region
      $region41: #{bottleneck_forward.1} parent=11 // pred_check
        %p383 = pneg %p298
      $region42: #{bottleneck_forward.1} parent=11 // pred_check_branch
        %385 = sbr.rel (%p383) target = $region44
      $region43: #{bottleneck_forward.1} parent=11 // pred_region
        _
      $region44: #{bottleneck_forward.1} parent=11 // pred_fallthru
        _
      // Predicated region
      $region45: #{bottleneck_forward.1} parent=11 // pred_check
        %p386 = pneg %p319
      $region46: #{bottleneck_forward.1} parent=11 // pred_check_branch
        %388 = sbr.rel (%p386) target = $region48
      $region47: #{bottleneck_forward.1} parent=11 // pred_region
        _
      $region48: #{bottleneck_forward.1} parent=11 // pred_fallthru
        _
    $region12: #{bottleneck_forward.1} parent=5 // pred_fallthru
      _
    %p389 = scmp.lt.s32.totalorder %s18, 4
    // Predicated region
    $region49: #{bottleneck_forward.1} parent=5 // pred_check
      %p390 = pneg %p389
    $region50: #{bottleneck_forward.1} parent=5 // pred_check_branch
      %392 = sbr.rel (%p390) target = $region52
    $region51: #{bottleneck_forward.1} parent=5 // pred_region
      // Predicated region
      $region53: #{bottleneck_forward.1} parent=51 // pred_check
        %p393 = pneg %p52
      $region54: #{bottleneck_forward.1} parent=51 // pred_check_branch
        %395 = sbr.rel (%p393) target = $region56
      $region55: #{bottleneck_forward.1} parent=51 // pred_region
        %s396 = smul.u32 8, %s26
        %p397 = scmp.lt.s32.totalorder %s25, 1
        %s398 = scalar_select %p397, %s25, 1
        %p399 = scmp.lt.s32.totalorder %s396, 15
        %s400 = scalar_select %p399, %s396, 15
        %s401 = smul.addr %s400, 3
        %s402 = smul.addr %s398, 48
        %s403 = sadd.s32 %s401, %s402
        %s404 = smul.addr %s403, 8
        %s405 = scalar_lea.vmem %s0, %s404
        %s406 = smul.u32 8, %s26
      $region56: #{bottleneck_forward.1} parent=51 // pred_fallthru
        _
      // Predicated region
      $region57: #{bottleneck_forward.1} parent=51 // pred_check
        %p407 = pneg %p88
      $region58: #{bottleneck_forward.1} parent=51 // pred_check_branch
        %409 = sbr.rel (%p407) target = $region60
      $region59: #{bottleneck_forward.1} parent=51 // pred_region
        %s410 = smul.u32 %s26, 8
        %s411 = ssub.s32 %s410, 1
        %p412 = scmp.gt.s32.totalorder %s411, 0
        %s413 = scalar_select %p412, %s411, 0
        %p414 = scmp.lt.s32.totalorder %s25, 1
        %s415 = scalar_select %p414, %s25, 1
        %p416 = scmp.lt.s32.totalorder %s413, 15
        %s417 = scalar_select %p416, %s413, 15
        %s418 = smul.addr %s417, 3
        %s419 = smul.addr %s415, 48
        %s420 = sadd.s32 %s418, %s419
        %s421 = smul.addr %s420, 8
        %s422 = scalar_lea.vmem %s1, %s421
        %s423 = smul.u32 %s26, 8
        %s424 = ssub.s32 %s423, 1
        %p425 = scmp.gt.s32.totalorder %s424, 0
        %s426 = scalar_select %p425, %s424, 0
      $region60: #{bottleneck_forward.1} parent=51 // pred_fallthru
        _
      // Predicated region
      $region61: #{bottleneck_forward.1} parent=51 // pred_check
        %p427 = pneg %p124
      $region62: #{bottleneck_forward.1} parent=51 // pred_check_branch
        %429 = sbr.rel (%p427) target = $region64
      $region63: #{bottleneck_forward.1} parent=51 // pred_region
        %s430 = sadd.s32 %s26, 1
        %s431 = smul.u32 %s430, 8
        %p432 = scmp.lt.s32.totalorder %s431, 15
        %s433 = scalar_select %p432, %s431, 15
        %p434 = scmp.lt.s32.totalorder %s25, 1
        %s435 = scalar_select %p434, %s25, 1
        %p436 = scmp.lt.s32.totalorder %s433, 15
        %s437 = scalar_select %p436, %s433, 15
        %s438 = smul.addr %s437, 3
        %s439 = smul.addr %s435, 48
        %s440 = sadd.s32 %s438, %s439
        %s441 = smul.addr %s440, 8
        %s442 = scalar_lea.vmem %s2, %s441
        %s443 = sadd.s32 %s26, 1
        %s444 = smul.u32 %s443, 8
        %p445 = scmp.lt.s32.totalorder %s444, 15
        %s446 = scalar_select %p445, %s444, 15
      $region64: #{bottleneck_forward.1} parent=51 // pred_fallthru
        _
    $region52: #{bottleneck_forward.1} parent=5 // pred_fallthru
      _
    %p447 = scmp.le.s32.totalorder 1, %s18
    %p448 = scmp.lt.s32.totalorder %s18, 5
    %p449 = pnand %p447, %p448
    %p450 = pneg %p449
    // Predicated region
    $region65: #{bottleneck_forward.1} parent=5 // pred_check
      _
    $region66: #{bottleneck_forward.1} parent=5 // pred_check_branch
      %452 = sbr.rel (%p449) target = $region68
    $region67: #{bottleneck_forward.1} parent=5 // pred_region
      %s453 = ssub.s32 %s18, 1
      %s454 = smul.u32 8, %s28
      %p455 = scmp.lt.s32.totalorder %s27, 1
      %s456 = scalar_select %p455, %s27, 1
      %p457 = scmp.lt.s32.totalorder %s454, 15
      %s458 = scalar_select %p457, %s454, 15
      %s459 = smul.addr %s458, 3
      %s460 = smul.addr %s456, 48
      %s461 = sadd.s32 %s459, %s460
      %s462 = smul.addr %s461, 8
      %s463 = scalar_lea.vmem %s0, %s462
      %p464 = pneg %p58
      %p465 = pneg %p55
      %s466 = smul.u32 %s28, 8
      %s467 = ssub.s32 %s466, 1
      %p468 = scmp.gt.s32.totalorder %s467, 0
      %s469 = scalar_select %p468, %s467, 0
      %p470 = scmp.lt.s32.totalorder %s27, 1
      %s471 = scalar_select %p470, %s27, 1
      %p472 = scmp.lt.s32.totalorder %s469, 15
      %s473 = scalar_select %p472, %s469, 15
      %s474 = smul.addr %s473, 3
      %s475 = smul.addr %s471, 48
      %s476 = sadd.s32 %s474, %s475
      %s477 = smul.addr %s476, 8
      %s478 = scalar_lea.vmem %s1, %s477
      %p479 = pneg %p94
      %p480 = pneg %p91
      %s481 = sadd.s32 %s28, 1
      %s482 = smul.u32 %s481, 8
      %p483 = scmp.lt.s32.totalorder %s482, 15
      %s484 = scalar_select %p483, %s482, 15
      %p485 = scmp.lt.s32.totalorder %s27, 1
      %s486 = scalar_select %p485, %s27, 1
      %p487 = scmp.lt.s32.totalorder %s484, 15
      %s488 = scalar_select %p487, %s484, 15
      %s489 = smul.addr %s488, 3
      %s490 = smul.addr %s486, 48
      %s491 = sadd.s32 %s489, %s490
      %s492 = smul.addr %s491, 8
      %s493 = scalar_lea.vmem %s2, %s492
      %p494 = pneg %p130
      %p495 = pneg %p127
      %p496 = pneg %p151
      %p497 = pneg %p148
      %p498 = pneg %p172
      %p499 = pneg %p169
      %p500 = pneg %p193
      %p501 = pneg %p190
      %p502 = pneg %p214
      %p503 = pneg %p211
      %p504 = pneg %p235
      %p505 = pneg %p232
      %p506 = pneg %p256
      %p507 = pneg %p253
      %p508 = pneg %p277
      %p509 = pneg %p274
      %p510 = pneg %p298
      %p511 = pneg %p295
      %p512 = pneg %p319
      %p513 = pneg %p316
      %p514 = pneg %p347
      %p515 = pneg %p344
      %s516 = smul.u32 8, %s28
      %p517 = scmp.lt.s32.totalorder %s27, 1
      %s518 = scalar_select %p517, %s27, 1
      %p519 = scmp.lt.s32.totalorder %s516, 15
      %s520 = scalar_select %p519, %s516, 15
      %s521 = smul.addr %s520, 2
      %s522 = smul.addr %s518, 32
      %s523 = sadd.s32 %s521, %s522
      %s524 = smul.addr %s523, 8
      %s525 = scalar_lea.vmem %s12, %s524
      %s526 = smul.u32 8, %s28
      %p527 = scmp.lt.s32.totalorder %s27, 1
      %s528 = scalar_select %p527, %s27, 1
      %p529 = scmp.lt.s32.totalorder %s526, 15
      %s530 = scalar_select %p529, %s526, 15
      %s531 = smul.addr %s530, 3
      %s532 = smul.addr %s528, 48
      %s533 = sadd.s32 %s531, %s532
      %s534 = smul.addr %s533, 8
      %s535 = scalar_lea.vmem %s0, %s534
      %s536 = smul.u32 8, %s28
      %s537 = smul.u32 %s28, 8
      %s538 = ssub.s32 %s537, 1
      %p539 = scmp.gt.s32.totalorder %s538, 0
      %s540 = scalar_select %p539, %s538, 0
      %p541 = scmp.lt.s32.totalorder %s27, 1
      %s542 = scalar_select %p541, %s27, 1
      %p543 = scmp.lt.s32.totalorder %s540, 15
      %s544 = scalar_select %p543, %s540, 15
      %s545 = smul.addr %s544, 3
      %s546 = smul.addr %s542, 48
      %s547 = sadd.s32 %s545, %s546
      %s548 = smul.addr %s547, 8
      %s549 = scalar_lea.vmem %s1, %s548
      %s550 = smul.u32 %s28, 8
      %s551 = ssub.s32 %s550, 1
      %p552 = scmp.gt.s32.totalorder %s551, 0
      %s553 = scalar_select %p552, %s551, 0
      %s554 = sadd.s32 %s28, 1
      %s555 = smul.u32 %s554, 8
      %p556 = scmp.lt.s32.totalorder %s555, 15
      %s557 = scalar_select %p556, %s555, 15
      %p558 = scmp.lt.s32.totalorder %s27, 1
      %s559 = scalar_select %p558, %s27, 1
      %p560 = scmp.lt.s32.totalorder %s557, 15
      %s561 = scalar_select %p560, %s557, 15
      %s562 = smul.addr %s561, 3
      %s563 = smul.addr %s559, 48
      %s564 = sadd.s32 %s562, %s563
      %s565 = smul.addr %s564, 8
      %s566 = scalar_lea.vmem %s2, %s565
      %s567 = sadd.s32 %s28, 1
      %s568 = smul.u32 %s567, 8
      %p569 = scmp.lt.s32.totalorder %s568, 15
      %s570 = scalar_select %p569, %s568, 15
      %s571 = smul.u32 8, %s28
      %p572 = scmp.lt.s32.totalorder %s27, 1
      %s573 = scalar_select %p572, %s27, 1
      %p574 = scmp.lt.s32.totalorder %s571, 15
      %s575 = scalar_select %p574, %s571, 15
      %s576 = smul.addr %s575, 2
      %s577 = smul.addr %s573, 32
      %s578 = sadd.s32 %s576, %s577
      %s579 = smul.addr %s578, 8
      %s580 = scalar_lea.vmem %s12, %s579
      %s581 = smul.u32 8, %s28
      %v582 = vlaneseq
      %v583 = vshrl.u32 %v582, 7
      %v584 = vadd.s32 %v583, 8
      %v585 = vadd.s32 %v583, 16
      %v586 = vadd.s32 %v583, 24
      %v587 = vadd.s32 %v583, 32
      %v588 = vadd.s32 %v583, 40
      %v589 = vadd.s32 %v583, 48
      %v590 = vadd.s32 %v583, 56
      %v591 = vadd.s32 %v583, 64
      %v592 = vadd.s32 %v583, 72
      %v593 = vadd.s32 %v583, 80
      %v594 = vadd.s32 %v583, 88
      %v595 = vadd.s32 %v583, 96
      %v596 = vadd.s32 %v583, 104
      %v597 = vadd.s32 %v583, 112
      %v598 = vadd.s32 %v583, 120
      %v599 = vadd.s32 %v583, 128
      %v600 = vadd.s32 %v583, 136
      %v601 = vadd.s32 %v583, 144
      %v602 = vadd.s32 %v583, 152
      %v603 = vadd.s32 %v583, 160
      %v604 = vadd.s32 %v583, 168
      %v605 = vadd.s32 %v583, 176
      %v606 = vadd.s32 %v583, 184
      %vm607 = vcmp.lt.s32.totalorder %v583, 0
      %v608 = vsub.s32 0, %v583
      %v609 = vsel %vm607, %v608, %v583
      %v610 = vand.u32 %v609, 65535
      %v611 = vshrl.u32 %v609, 16
      %v613 = vmul.u32 %v610, 43691
      %v614 = vmul.u32 %v610, 43690
      %v615 = vmul.u32 %v611, 43691
      %v616 = vmul.u32 %v611, 43690
      %v617 = vshll.u32 %v614, 16
      %v618 = vshrl.u32 %v614, 16
      %v619 = vshll.u32 %v615, 16
      %v620 = vshrl.u32 %v615, 16
      %vm621 = vc.u32 %v613, %v617
      %v622 = vsel %vm621, 1, 0
      %v623 = vadd.s32 %v613, %v617
      %v624 = vadd.s32 %v616, %v622
      %vm625 = vc.u32 %v623, %v619
      %v626 = vsel %vm625, 1, 0
      %v627 = vadd.s32 %v623, %v619
      %v628 = vadd.s32 %v624, %v626
      %v629 = vadd.s32 %v628, %v618
      %v630 = vadd.s32 %v629, %v620
      %v631 = vshrl.u32 %v630, 4
      %v632 = vmul.u32 %v631, 24
      %v633 = vsub.s32 %v609, %v632
      %v634 = vsub.s32 0, %v633
      %v635 = vsel %vm607, %v634, %v633
      %vm636 = vcmp.lt.s32.totalorder %v584, 0
      %v637 = vsub.s32 0, %v584
      %v638 = vsel %vm636, %v637, %v584
      %v639 = vand.u32 %v638, 65535
      %v640 = vshrl.u32 %v638, 16
      %v642 = vmul.u32 %v639, 43691
      %v643 = vmul.u32 %v639, 43690
      %v644 = vmul.u32 %v640, 43691
      %v645 = vmul.u32 %v640, 43690
      %v646 = vshll.u32 %v643, 16
      %v647 = vshrl.u32 %v643, 16
      %v648 = vshll.u32 %v644, 16
      %v649 = vshrl.u32 %v644, 16
      %vm650 = vc.u32 %v642, %v646
      %v651 = vsel %vm650, 1, 0
      %v652 = vadd.s32 %v642, %v646
      %v653 = vadd.s32 %v645, %v651
      %vm654 = vc.u32 %v652, %v648
      %v655 = vsel %vm654, 1, 0
      %v656 = vadd.s32 %v652, %v648
      %v657 = vadd.s32 %v653, %v655
      %v658 = vadd.s32 %v657, %v647
      %v659 = vadd.s32 %v658, %v649
      %v660 = vshrl.u32 %v659, 4
      %v661 = vmul.u32 %v660, 24
      %v662 = vsub.s32 %v638, %v661
      %v663 = vsub.s32 0, %v662
      %v664 = vsel %vm636, %v663, %v662
      %vm665 = vcmp.lt.s32.totalorder %v585, 0
      %v666 = vsub.s32 0, %v585
      %v667 = vsel %vm665, %v666, %v585
      %v668 = vand.u32 %v667, 65535
      %v669 = vshrl.u32 %v667, 16
      %v671 = vmul.u32 %v668, 43691
      %v672 = vmul.u32 %v668, 43690
      %v673 = vmul.u32 %v669, 43691
      %v674 = vmul.u32 %v669, 43690
      %v675 = vshll.u32 %v672, 16
      %v676 = vshrl.u32 %v672, 16
      %v677 = vshll.u32 %v673, 16
      %v678 = vshrl.u32 %v673, 16
      %vm679 = vc.u32 %v671, %v675
      %v680 = vsel %vm679, 1, 0
      %v681 = vadd.s32 %v671, %v675
      %v682 = vadd.s32 %v674, %v680
      %vm683 = vc.u32 %v681, %v677
      %v684 = vsel %vm683, 1, 0
      %v685 = vadd.s32 %v681, %v677
      %v686 = vadd.s32 %v682, %v684
      %v687 = vadd.s32 %v686, %v676
      %v688 = vadd.s32 %v687, %v678
      %v689 = vshrl.u32 %v688, 4
      %v690 = vmul.u32 %v689, 24
      %v691 = vsub.s32 %v667, %v690
      %v692 = vsub.s32 0, %v691
      %v693 = vsel %vm665, %v692, %v691
      %vm694 = vcmp.lt.s32.totalorder %v586, 0
      %v695 = vsub.s32 0, %v586
      %v696 = vsel %vm694, %v695, %v586
      %v697 = vand.u32 %v696, 65535
      %v698 = vshrl.u32 %v696, 16
      %v700 = vmul.u32 %v697, 43691
      %v701 = vmul.u32 %v697, 43690
      %v702 = vmul.u32 %v698, 43691
      %v703 = vmul.u32 %v698, 43690
      %v704 = vshll.u32 %v701, 16
      %v705 = vshrl.u32 %v701, 16
      %v706 = vshll.u32 %v702, 16
      %v707 = vshrl.u32 %v702, 16
      %vm708 = vc.u32 %v700, %v704
      %v709 = vsel %vm708, 1, 0
      %v710 = vadd.s32 %v700, %v704
      %v711 = vadd.s32 %v703, %v709
      %vm712 = vc.u32 %v710, %v706
      %v713 = vsel %vm712, 1, 0
      %v714 = vadd.s32 %v710, %v706
      %v715 = vadd.s32 %v711, %v713
      %v716 = vadd.s32 %v715, %v705
      %v717 = vadd.s32 %v716, %v707
      %v718 = vshrl.u32 %v717, 4
      %v719 = vmul.u32 %v718, 24
      %v720 = vsub.s32 %v696, %v719
      %v721 = vsub.s32 0, %v720
      %v722 = vsel %vm694, %v721, %v720
      %vm723 = vcmp.lt.s32.totalorder %v587, 0
      %v724 = vsub.s32 0, %v587
      %v725 = vsel %vm723, %v724, %v587
      %v726 = vand.u32 %v725, 65535
      %v727 = vshrl.u32 %v725, 16
      %v729 = vmul.u32 %v726, 43691
      %v730 = vmul.u32 %v726, 43690
      %v731 = vmul.u32 %v727, 43691
      %v732 = vmul.u32 %v727, 43690
      %v733 = vshll.u32 %v730, 16
      %v734 = vshrl.u32 %v730, 16
      %v735 = vshll.u32 %v731, 16
      %v736 = vshrl.u32 %v731, 16
      %vm737 = vc.u32 %v729, %v733
      %v738 = vsel %vm737, 1, 0
      %v739 = vadd.s32 %v729, %v733
      %v740 = vadd.s32 %v732, %v738
      %vm741 = vc.u32 %v739, %v735
      %v742 = vsel %vm741, 1, 0
      %v743 = vadd.s32 %v739, %v735
      %v744 = vadd.s32 %v740, %v742
      %v745 = vadd.s32 %v744, %v734
      %v746 = vadd.s32 %v745, %v736
      %v747 = vshrl.u32 %v746, 4
      %v748 = vmul.u32 %v747, 24
      %v749 = vsub.s32 %v725, %v748
      %v750 = vsub.s32 0, %v749
      %v751 = vsel %vm723, %v750, %v749
      %vm752 = vcmp.lt.s32.totalorder %v588, 0
      %v753 = vsub.s32 0, %v588
      %v754 = vsel %vm752, %v753, %v588
      %v755 = vand.u32 %v754, 65535
      %v756 = vshrl.u32 %v754, 16
      %v758 = vmul.u32 %v755, 43691
      %v759 = vmul.u32 %v755, 43690
      %v760 = vmul.u32 %v756, 43691
      %v761 = vmul.u32 %v756, 43690
      %v762 = vshll.u32 %v759, 16
      %v763 = vshrl.u32 %v759, 16
      %v764 = vshll.u32 %v760, 16
      %v765 = vshrl.u32 %v760, 16
      %vm766 = vc.u32 %v758, %v762
      %v767 = vsel %vm766, 1, 0
      %v768 = vadd.s32 %v758, %v762
      %v769 = vadd.s32 %v761, %v767
      %vm770 = vc.u32 %v768, %v764
      %v771 = vsel %vm770, 1, 0
      %v772 = vadd.s32 %v768, %v764
      %v773 = vadd.s32 %v769, %v771
      %v774 = vadd.s32 %v773, %v763
      %v775 = vadd.s32 %v774, %v765
      %v776 = vshrl.u32 %v775, 4
      %v777 = vmul.u32 %v776, 24
      %v778 = vsub.s32 %v754, %v777
      %v779 = vsub.s32 0, %v778
      %v780 = vsel %vm752, %v779, %v778
      %vm781 = vcmp.lt.s32.totalorder %v589, 0
      %v782 = vsub.s32 0, %v589
      %v783 = vsel %vm781, %v782, %v589
      %v784 = vand.u32 %v783, 65535
      %v785 = vshrl.u32 %v783, 16
      %v787 = vmul.u32 %v784, 43691
      %v788 = vmul.u32 %v784, 43690
      %v789 = vmul.u32 %v785, 43691
      %v790 = vmul.u32 %v785, 43690
      %v791 = vshll.u32 %v788, 16
      %v792 = vshrl.u32 %v788, 16
      %v793 = vshll.u32 %v789, 16
      %v794 = vshrl.u32 %v789, 16
      %vm795 = vc.u32 %v787, %v791
      %v796 = vsel %vm795, 1, 0
      %v797 = vadd.s32 %v787, %v791
      %v798 = vadd.s32 %v790, %v796
      %vm799 = vc.u32 %v797, %v793
      %v800 = vsel %vm799, 1, 0
      %v801 = vadd.s32 %v797, %v793
      %v802 = vadd.s32 %v798, %v800
      %v803 = vadd.s32 %v802, %v792
      %v804 = vadd.s32 %v803, %v794
      %v805 = vshrl.u32 %v804, 4
      %v806 = vmul.u32 %v805, 24
      %v807 = vsub.s32 %v783, %v806
      %v808 = vsub.s32 0, %v807
      %v809 = vsel %vm781, %v808, %v807
      %vm810 = vcmp.lt.s32.totalorder %v590, 0
      %v811 = vsub.s32 0, %v590
      %v812 = vsel %vm810, %v811, %v590
      %v813 = vand.u32 %v812, 65535
      %v814 = vshrl.u32 %v812, 16
      %v816 = vmul.u32 %v813, 43691
      %v817 = vmul.u32 %v813, 43690
      %v818 = vmul.u32 %v814, 43691
      %v819 = vmul.u32 %v814, 43690
      %v820 = vshll.u32 %v817, 16
      %v821 = vshrl.u32 %v817, 16
      %v822 = vshll.u32 %v818, 16
      %v823 = vshrl.u32 %v818, 16
      %vm824 = vc.u32 %v816, %v820
      %v825 = vsel %vm824, 1, 0
      %v826 = vadd.s32 %v816, %v820
      %v827 = vadd.s32 %v819, %v825
      %vm828 = vc.u32 %v826, %v822
      %v829 = vsel %vm828, 1, 0
      %v830 = vadd.s32 %v826, %v822
      %v831 = vadd.s32 %v827, %v829
      %v832 = vadd.s32 %v831, %v821
      %v833 = vadd.s32 %v832, %v823
      %v834 = vshrl.u32 %v833, 4
      %v835 = vmul.u32 %v834, 24
      %v836 = vsub.s32 %v812, %v835
      %v837 = vsub.s32 0, %v836
      %v838 = vsel %vm810, %v837, %v836
      %vm839 = vcmp.lt.s32.totalorder %v591, 0
      %v840 = vsub.s32 0, %v591
      %v841 = vsel %vm839, %v840, %v591
      %v842 = vand.u32 %v841, 65535
      %v843 = vshrl.u32 %v841, 16
      %v845 = vmul.u32 %v842, 43691
      %v846 = vmul.u32 %v842, 43690
      %v847 = vmul.u32 %v843, 43691
      %v848 = vmul.u32 %v843, 43690
      %v849 = vshll.u32 %v846, 16
      %v850 = vshrl.u32 %v846, 16
      %v851 = vshll.u32 %v847, 16
      %v852 = vshrl.u32 %v847, 16
      %vm853 = vc.u32 %v845, %v849
      %v854 = vsel %vm853, 1, 0
      %v855 = vadd.s32 %v845, %v849
      %v856 = vadd.s32 %v848, %v854
      %vm857 = vc.u32 %v855, %v851
      %v858 = vsel %vm857, 1, 0
      %v859 = vadd.s32 %v855, %v851
      %v860 = vadd.s32 %v856, %v858
      %v861 = vadd.s32 %v860, %v850
      %v862 = vadd.s32 %v861, %v852
      %v863 = vshrl.u32 %v862, 4
      %v864 = vmul.u32 %v863, 24
      %v865 = vsub.s32 %v841, %v864
      %v866 = vsub.s32 0, %v865
      %v867 = vsel %vm839, %v866, %v865
      %vm868 = vcmp.lt.s32.totalorder %v592, 0
      %v869 = vsub.s32 0, %v592
      %v870 = vsel %vm868, %v869, %v592
      %v871 = vand.u32 %v870, 65535
      %v872 = vshrl.u32 %v870, 16
      %v874 = vmul.u32 %v871, 43691
      %v875 = vmul.u32 %v871, 43690
      %v876 = vmul.u32 %v872, 43691
      %v877 = vmul.u32 %v872, 43690
      %v878 = vshll.u32 %v875, 16
      %v879 = vshrl.u32 %v875, 16
      %v880 = vshll.u32 %v876, 16
      %v881 = vshrl.u32 %v876, 16
      %vm882 = vc.u32 %v874, %v878
      %v883 = vsel %vm882, 1, 0
      %v884 = vadd.s32 %v874, %v878
      %v885 = vadd.s32 %v877, %v883
      %vm886 = vc.u32 %v884, %v880
      %v887 = vsel %vm886, 1, 0
      %v888 = vadd.s32 %v884, %v880
      %v889 = vadd.s32 %v885, %v887
      %v890 = vadd.s32 %v889, %v879
      %v891 = vadd.s32 %v890, %v881
      %v892 = vshrl.u32 %v891, 4
      %v893 = vmul.u32 %v892, 24
      %v894 = vsub.s32 %v870, %v893
      %v895 = vsub.s32 0, %v894
      %v896 = vsel %vm868, %v895, %v894
      %vm897 = vcmp.lt.s32.totalorder %v593, 0
      %v898 = vsub.s32 0, %v593
      %v899 = vsel %vm897, %v898, %v593
      %v900 = vand.u32 %v899, 65535
      %v901 = vshrl.u32 %v899, 16
      %v903 = vmul.u32 %v900, 43691
      %v904 = vmul.u32 %v900, 43690
      %v905 = vmul.u32 %v901, 43691
      %v906 = vmul.u32 %v901, 43690
      %v907 = vshll.u32 %v904, 16
      %v908 = vshrl.u32 %v904, 16
      %v909 = vshll.u32 %v905, 16
      %v910 = vshrl.u32 %v905, 16
      %vm911 = vc.u32 %v903, %v907
      %v912 = vsel %vm911, 1, 0
      %v913 = vadd.s32 %v903, %v907
      %v914 = vadd.s32 %v906, %v912
      %vm915 = vc.u32 %v913, %v909
      %v916 = vsel %vm915, 1, 0
      %v917 = vadd.s32 %v913, %v909
      %v918 = vadd.s32 %v914, %v916
      %v919 = vadd.s32 %v918, %v908
      %v920 = vadd.s32 %v919, %v910
      %v921 = vshrl.u32 %v920, 4
      %v922 = vmul.u32 %v921, 24
      %v923 = vsub.s32 %v899, %v922
      %v924 = vsub.s32 0, %v923
      %v925 = vsel %vm897, %v924, %v923
      %vm926 = vcmp.lt.s32.totalorder %v594, 0
      %v927 = vsub.s32 0, %v594
      %v928 = vsel %vm926, %v927, %v594
      %v929 = vand.u32 %v928, 65535
      %v930 = vshrl.u32 %v928, 16
      %v932 = vmul.u32 %v929, 43691
      %v933 = vmul.u32 %v929, 43690
      %v934 = vmul.u32 %v930, 43691
      %v935 = vmul.u32 %v930, 43690
      %v936 = vshll.u32 %v933, 16
      %v937 = vshrl.u32 %v933, 16
      %v938 = vshll.u32 %v934, 16
      %v939 = vshrl.u32 %v934, 16
      %vm940 = vc.u32 %v932, %v936
      %v941 = vsel %vm940, 1, 0
      %v942 = vadd.s32 %v932, %v936
      %v943 = vadd.s32 %v935, %v941
      %vm944 = vc.u32 %v942, %v938
      %v945 = vsel %vm944, 1, 0
      %v946 = vadd.s32 %v942, %v938
      %v947 = vadd.s32 %v943, %v945
      %v948 = vadd.s32 %v947, %v937
      %v949 = vadd.s32 %v948, %v939
      %v950 = vshrl.u32 %v949, 4
      %v951 = vmul.u32 %v950, 24
      %v952 = vsub.s32 %v928, %v951
      %v953 = vsub.s32 0, %v952
      %v954 = vsel %vm926, %v953, %v952
      %vm955 = vcmp.lt.s32.totalorder %v595, 0
      %v956 = vsub.s32 0, %v595
      %v957 = vsel %vm955, %v956, %v595
      %v958 = vand.u32 %v957, 65535
      %v959 = vshrl.u32 %v957, 16
      %v961 = vmul.u32 %v958, 43691
      %v962 = vmul.u32 %v958, 43690
      %v963 = vmul.u32 %v959, 43691
      %v964 = vmul.u32 %v959, 43690
      %v965 = vshll.u32 %v962, 16
      %v966 = vshrl.u32 %v962, 16
      %v967 = vshll.u32 %v963, 16
      %v968 = vshrl.u32 %v963, 16
      %vm969 = vc.u32 %v961, %v965
      %v970 = vsel %vm969, 1, 0
      %v971 = vadd.s32 %v961, %v965
      %v972 = vadd.s32 %v964, %v970
      %vm973 = vc.u32 %v971, %v967
      %v974 = vsel %vm973, 1, 0
      %v975 = vadd.s32 %v971, %v967
      %v976 = vadd.s32 %v972, %v974
      %v977 = vadd.s32 %v976, %v966
      %v978 = vadd.s32 %v977, %v968
      %v979 = vshrl.u32 %v978, 4
      %v980 = vmul.u32 %v979, 24
      %v981 = vsub.s32 %v957, %v980
      %v982 = vsub.s32 0, %v981
      %v983 = vsel %vm955, %v982, %v981
      %vm984 = vcmp.lt.s32.totalorder %v596, 0
      %v985 = vsub.s32 0, %v596
      %v986 = vsel %vm984, %v985, %v596
      %v987 = vand.u32 %v986, 65535
      %v988 = vshrl.u32 %v986, 16
      %v990 = vmul.u32 %v987, 43691
      %v991 = vmul.u32 %v987, 43690
      %v992 = vmul.u32 %v988, 43691
      %v993 = vmul.u32 %v988, 43690
      %v994 = vshll.u32 %v991, 16
      %v995 = vshrl.u32 %v991, 16
      %v996 = vshll.u32 %v992, 16
      %v997 = vshrl.u32 %v992, 16
      %vm998 = vc.u32 %v990, %v994
      %v999 = vsel %vm998, 1, 0
      %v1000 = vadd.s32 %v990, %v994
      %v1001 = vadd.s32 %v993, %v999
      %vm1002 = vc.u32 %v1000, %v996
      %v1003 = vsel %vm1002, 1, 0
      %v1004 = vadd.s32 %v1000, %v996
      %v1005 = vadd.s32 %v1001, %v1003
      %v1006 = vadd.s32 %v1005, %v995
      %v1007 = vadd.s32 %v1006, %v997
      %v1008 = vshrl.u32 %v1007, 4
      %v1009 = vmul.u32 %v1008, 24
      %v1010 = vsub.s32 %v986, %v1009
      %v1011 = vsub.s32 0, %v1010
      %v1012 = vsel %vm984, %v1011, %v1010
      %vm1013 = vcmp.lt.s32.totalorder %v597, 0
      %v1014 = vsub.s32 0, %v597
      %v1015 = vsel %vm1013, %v1014, %v597
      %v1016 = vand.u32 %v1015, 65535
      %v1017 = vshrl.u32 %v1015, 16
      %v1019 = vmul.u32 %v1016, 43691
      %v1020 = vmul.u32 %v1016, 43690
      %v1021 = vmul.u32 %v1017, 43691
      %v1022 = vmul.u32 %v1017, 43690
      %v1023 = vshll.u32 %v1020, 16
      %v1024 = vshrl.u32 %v1020, 16
      %v1025 = vshll.u32 %v1021, 16
      %v1026 = vshrl.u32 %v1021, 16
      %vm1027 = vc.u32 %v1019, %v1023
      %v1028 = vsel %vm1027, 1, 0
      %v1029 = vadd.s32 %v1019, %v1023
      %v1030 = vadd.s32 %v1022, %v1028
      %vm1031 = vc.u32 %v1029, %v1025
      %v1032 = vsel %vm1031, 1, 0
      %v1033 = vadd.s32 %v1029, %v1025
      %v1034 = vadd.s32 %v1030, %v1032
      %v1035 = vadd.s32 %v1034, %v1024
      %v1036 = vadd.s32 %v1035, %v1026
      %v1037 = vshrl.u32 %v1036, 4
      %v1038 = vmul.u32 %v1037, 24
      %v1039 = vsub.s32 %v1015, %v1038
      %v1040 = vsub.s32 0, %v1039
      %v1041 = vsel %vm1013, %v1040, %v1039
      %vm1042 = vcmp.lt.s32.totalorder %v598, 0
      %v1043 = vsub.s32 0, %v598
      %v1044 = vsel %vm1042, %v1043, %v598
      %v1045 = vand.u32 %v1044, 65535
      %v1046 = vshrl.u32 %v1044, 16
      %v1048 = vmul.u32 %v1045, 43691
      %v1049 = vmul.u32 %v1045, 43690
      %v1050 = vmul.u32 %v1046, 43691
      %v1051 = vmul.u32 %v1046, 43690
      %v1052 = vshll.u32 %v1049, 16
      %v1053 = vshrl.u32 %v1049, 16
      %v1054 = vshll.u32 %v1050, 16
      %v1055 = vshrl.u32 %v1050, 16
      %vm1056 = vc.u32 %v1048, %v1052
      %v1057 = vsel %vm1056, 1, 0
      %v1058 = vadd.s32 %v1048, %v1052
      %v1059 = vadd.s32 %v1051, %v1057
      %vm1060 = vc.u32 %v1058, %v1054
      %v1061 = vsel %vm1060, 1, 0
      %v1062 = vadd.s32 %v1058, %v1054
      %v1063 = vadd.s32 %v1059, %v1061
      %v1064 = vadd.s32 %v1063, %v1053
      %v1065 = vadd.s32 %v1064, %v1055
      %v1066 = vshrl.u32 %v1065, 4
      %v1067 = vmul.u32 %v1066, 24
      %v1068 = vsub.s32 %v1044, %v1067
      %v1069 = vsub.s32 0, %v1068
      %v1070 = vsel %vm1042, %v1069, %v1068
      %vm1071 = vcmp.lt.s32.totalorder %v599, 0
      %v1072 = vsub.s32 0, %v599
      %v1073 = vsel %vm1071, %v1072, %v599
      %v1074 = vand.u32 %v1073, 65535
      %v1075 = vshrl.u32 %v1073, 16
      %v1077 = vmul.u32 %v1074, 43691
      %v1078 = vmul.u32 %v1074, 43690
      %v1079 = vmul.u32 %v1075, 43691
      %v1080 = vmul.u32 %v1075, 43690
      %v1081 = vshll.u32 %v1078, 16
      %v1082 = vshrl.u32 %v1078, 16
      %v1083 = vshll.u32 %v1079, 16
      %v1084 = vshrl.u32 %v1079, 16
      %vm1085 = vc.u32 %v1077, %v1081
      %v1086 = vsel %vm1085, 1, 0
      %v1087 = vadd.s32 %v1077, %v1081
      %v1088 = vadd.s32 %v1080, %v1086
      %vm1089 = vc.u32 %v1087, %v1083
      %v1090 = vsel %vm1089, 1, 0
      %v1091 = vadd.s32 %v1087, %v1083
      %v1092 = vadd.s32 %v1088, %v1090
      %v1093 = vadd.s32 %v1092, %v1082
      %v1094 = vadd.s32 %v1093, %v1084
      %v1095 = vshrl.u32 %v1094, 4
      %v1096 = vmul.u32 %v1095, 24
      %v1097 = vsub.s32 %v1073, %v1096
      %v1098 = vsub.s32 0, %v1097
      %v1099 = vsel %vm1071, %v1098, %v1097
      %vm1100 = vcmp.lt.s32.totalorder %v600, 0
      %v1101 = vsub.s32 0, %v600
      %v1102 = vsel %vm1100, %v1101, %v600
      %v1103 = vand.u32 %v1102, 65535
      %v1104 = vshrl.u32 %v1102, 16
      %v1106 = vmul.u32 %v1103, 43691
      %v1107 = vmul.u32 %v1103, 43690
      %v1108 = vmul.u32 %v1104, 43691
      %v1109 = vmul.u32 %v1104, 43690
      %v1110 = vshll.u32 %v1107, 16
      %v1111 = vshrl.u32 %v1107, 16
      %v1112 = vshll.u32 %v1108, 16
      %v1113 = vshrl.u32 %v1108, 16
      %vm1114 = vc.u32 %v1106, %v1110
      %v1115 = vsel %vm1114, 1, 0
      %v1116 = vadd.s32 %v1106, %v1110
      %v1117 = vadd.s32 %v1109, %v1115
      %vm1118 = vc.u32 %v1116, %v1112
      %v1119 = vsel %vm1118, 1, 0
      %v1120 = vadd.s32 %v1116, %v1112
      %v1121 = vadd.s32 %v1117, %v1119
      %v1122 = vadd.s32 %v1121, %v1111
      %v1123 = vadd.s32 %v1122, %v1113
      %v1124 = vshrl.u32 %v1123, 4
      %v1125 = vmul.u32 %v1124, 24
      %v1126 = vsub.s32 %v1102, %v1125
      %v1127 = vsub.s32 0, %v1126
      %v1128 = vsel %vm1100, %v1127, %v1126
      %vm1129 = vcmp.lt.s32.totalorder %v601, 0
      %v1130 = vsub.s32 0, %v601
      %v1131 = vsel %vm1129, %v1130, %v601
      %v1132 = vand.u32 %v1131, 65535
      %v1133 = vshrl.u32 %v1131, 16
      %v1135 = vmul.u32 %v1132, 43691
      %v1136 = vmul.u32 %v1132, 43690
      %v1137 = vmul.u32 %v1133, 43691
      %v1138 = vmul.u32 %v1133, 43690
      %v1139 = vshll.u32 %v1136, 16
      %v1140 = vshrl.u32 %v1136, 16
      %v1141 = vshll.u32 %v1137, 16
      %v1142 = vshrl.u32 %v1137, 16
      %vm1143 = vc.u32 %v1135, %v1139
      %v1144 = vsel %vm1143, 1, 0
      %v1145 = vadd.s32 %v1135, %v1139
      %v1146 = vadd.s32 %v1138, %v1144
      %vm1147 = vc.u32 %v1145, %v1141
      %v1148 = vsel %vm1147, 1, 0
      %v1149 = vadd.s32 %v1145, %v1141
      %v1150 = vadd.s32 %v1146, %v1148
      %v1151 = vadd.s32 %v1150, %v1140
      %v1152 = vadd.s32 %v1151, %v1142
      %v1153 = vshrl.u32 %v1152, 4
      %v1154 = vmul.u32 %v1153, 24
      %v1155 = vsub.s32 %v1131, %v1154
      %v1156 = vsub.s32 0, %v1155
      %v1157 = vsel %vm1129, %v1156, %v1155
      %vm1158 = vcmp.lt.s32.totalorder %v602, 0
      %v1159 = vsub.s32 0, %v602
      %v1160 = vsel %vm1158, %v1159, %v602
      %v1161 = vand.u32 %v1160, 65535
      %v1162 = vshrl.u32 %v1160, 16
      %v1164 = vmul.u32 %v1161, 43691
      %v1165 = vmul.u32 %v1161, 43690
      %v1166 = vmul.u32 %v1162, 43691
      %v1167 = vmul.u32 %v1162, 43690
      %v1168 = vshll.u32 %v1165, 16
      %v1169 = vshrl.u32 %v1165, 16
      %v1170 = vshll.u32 %v1166, 16
      %v1171 = vshrl.u32 %v1166, 16
      %vm1172 = vc.u32 %v1164, %v1168
      %v1173 = vsel %vm1172, 1, 0
      %v1174 = vadd.s32 %v1164, %v1168
      %v1175 = vadd.s32 %v1167, %v1173
      %vm1176 = vc.u32 %v1174, %v1170
      %v1177 = vsel %vm1176, 1, 0
      %v1178 = vadd.s32 %v1174, %v1170
      %v1179 = vadd.s32 %v1175, %v1177
      %v1180 = vadd.s32 %v1179, %v1169
      %v1181 = vadd.s32 %v1180, %v1171
      %v1182 = vshrl.u32 %v1181, 4
      %v1183 = vmul.u32 %v1182, 24
      %v1184 = vsub.s32 %v1160, %v1183
      %v1185 = vsub.s32 0, %v1184
      %v1186 = vsel %vm1158, %v1185, %v1184
      %vm1187 = vcmp.lt.s32.totalorder %v603, 0
      %v1188 = vsub.s32 0, %v603
      %v1189 = vsel %vm1187, %v1188, %v603
      %v1190 = vand.u32 %v1189, 65535
      %v1191 = vshrl.u32 %v1189, 16
      %v1193 = vmul.u32 %v1190, 43691
      %v1194 = vmul.u32 %v1190, 43690
      %v1195 = vmul.u32 %v1191, 43691
      %v1196 = vmul.u32 %v1191, 43690
      %v1197 = vshll.u32 %v1194, 16
      %v1198 = vshrl.u32 %v1194, 16
      %v1199 = vshll.u32 %v1195, 16
      %v1200 = vshrl.u32 %v1195, 16
      %vm1201 = vc.u32 %v1193, %v1197
      %v1202 = vsel %vm1201, 1, 0
      %v1203 = vadd.s32 %v1193, %v1197
      %v1204 = vadd.s32 %v1196, %v1202
      %vm1205 = vc.u32 %v1203, %v1199
      %v1206 = vsel %vm1205, 1, 0
      %v1207 = vadd.s32 %v1203, %v1199
      %v1208 = vadd.s32 %v1204, %v1206
      %v1209 = vadd.s32 %v1208, %v1198
      %v1210 = vadd.s32 %v1209, %v1200
      %v1211 = vshrl.u32 %v1210, 4
      %v1212 = vmul.u32 %v1211, 24
      %v1213 = vsub.s32 %v1189, %v1212
      %v1214 = vsub.s32 0, %v1213
      %v1215 = vsel %vm1187, %v1214, %v1213
      %vm1216 = vcmp.lt.s32.totalorder %v604, 0
      %v1217 = vsub.s32 0, %v604
      %v1218 = vsel %vm1216, %v1217, %v604
      %v1219 = vand.u32 %v1218, 65535
      %v1220 = vshrl.u32 %v1218, 16
      %v1222 = vmul.u32 %v1219, 43691
      %v1223 = vmul.u32 %v1219, 43690
      %v1224 = vmul.u32 %v1220, 43691
      %v1225 = vmul.u32 %v1220, 43690
      %v1226 = vshll.u32 %v1223, 16
      %v1227 = vshrl.u32 %v1223, 16
      %v1228 = vshll.u32 %v1224, 16
      %v1229 = vshrl.u32 %v1224, 16
      %vm1230 = vc.u32 %v1222, %v1226
      %v1231 = vsel %vm1230, 1, 0
      %v1232 = vadd.s32 %v1222, %v1226
      %v1233 = vadd.s32 %v1225, %v1231
      %vm1234 = vc.u32 %v1232, %v1228
      %v1235 = vsel %vm1234, 1, 0
      %v1236 = vadd.s32 %v1232, %v1228
      %v1237 = vadd.s32 %v1233, %v1235
      %v1238 = vadd.s32 %v1237, %v1227
      %v1239 = vadd.s32 %v1238, %v1229
      %v1240 = vshrl.u32 %v1239, 4
      %v1241 = vmul.u32 %v1240, 24
      %v1242 = vsub.s32 %v1218, %v1241
      %v1243 = vsub.s32 0, %v1242
      %v1244 = vsel %vm1216, %v1243, %v1242
      %vm1245 = vcmp.lt.s32.totalorder %v605, 0
      %v1246 = vsub.s32 0, %v605
      %v1247 = vsel %vm1245, %v1246, %v605
      %v1248 = vand.u32 %v1247, 65535
      %v1249 = vshrl.u32 %v1247, 16
      %v1251 = vmul.u32 %v1248, 43691
      %v1252 = vmul.u32 %v1248, 43690
      %v1253 = vmul.u32 %v1249, 43691
      %v1254 = vmul.u32 %v1249, 43690
      %v1255 = vshll.u32 %v1252, 16
      %v1256 = vshrl.u32 %v1252, 16
      %v1257 = vshll.u32 %v1253, 16
      %v1258 = vshrl.u32 %v1253, 16
      %vm1259 = vc.u32 %v1251, %v1255
      %v1260 = vsel %vm1259, 1, 0
      %v1261 = vadd.s32 %v1251, %v1255
      %v1262 = vadd.s32 %v1254, %v1260
      %vm1263 = vc.u32 %v1261, %v1257
      %v1264 = vsel %vm1263, 1, 0
      %v1265 = vadd.s32 %v1261, %v1257
      %v1266 = vadd.s32 %v1262, %v1264
      %v1267 = vadd.s32 %v1266, %v1256
      %v1268 = vadd.s32 %v1267, %v1258
      %v1269 = vshrl.u32 %v1268, 4
      %v1270 = vmul.u32 %v1269, 24
      %v1271 = vsub.s32 %v1247, %v1270
      %v1272 = vsub.s32 0, %v1271
      %v1273 = vsel %vm1245, %v1272, %v1271
      %vm1274 = vcmp.lt.s32.totalorder %v606, 0
      %v1275 = vsub.s32 0, %v606
      %v1276 = vsel %vm1274, %v1275, %v606
      %v1277 = vand.u32 %v1276, 65535
      %v1278 = vshrl.u32 %v1276, 16
      %v1280 = vmul.u32 %v1277, 43691
      %v1281 = vmul.u32 %v1277, 43690
      %v1282 = vmul.u32 %v1278, 43691
      %v1283 = vmul.u32 %v1278, 43690
      %v1284 = vshll.u32 %v1281, 16
      %v1285 = vshrl.u32 %v1281, 16
      %v1286 = vshll.u32 %v1282, 16
      %v1287 = vshrl.u32 %v1282, 16
      %vm1288 = vc.u32 %v1280, %v1284
      %v1289 = vsel %vm1288, 1, 0
      %v1290 = vadd.s32 %v1280, %v1284
      %v1291 = vadd.s32 %v1283, %v1289
      %vm1292 = vc.u32 %v1290, %v1286
      %v1293 = vsel %vm1292, 1, 0
      %v1294 = vadd.s32 %v1290, %v1286
      %v1295 = vadd.s32 %v1291, %v1293
      %v1296 = vadd.s32 %v1295, %v1285
      %v1297 = vadd.s32 %v1296, %v1287
      %v1298 = vshrl.u32 %v1297, 4
      %v1299 = vmul.u32 %v1298, 24
      %v1300 = vsub.s32 %v1276, %v1299
      %v1301 = vsub.s32 0, %v1300
      %v1302 = vsel %vm1274, %v1301, %v1300
      %vm1303 = vcmp.ne.s32.totalorder %v635, 0
      %vm1304 = vcmp.ne.s32.totalorder %v664, 0
      %vm1305 = vcmp.ne.s32.totalorder %v693, 0
      %vm1306 = vcmp.ne.s32.totalorder %v722, 0
      %vm1307 = vcmp.ne.s32.totalorder %v751, 0
      %vm1308 = vcmp.ne.s32.totalorder %v780, 0
      %vm1309 = vcmp.ne.s32.totalorder %v809, 0
      %vm1310 = vcmp.ne.s32.totalorder %v838, 0
      %vm1311 = vcmp.ne.s32.totalorder %v867, 0
      %vm1312 = vcmp.ne.s32.totalorder %v896, 0
      %vm1313 = vcmp.ne.s32.totalorder %v925, 0
      %vm1314 = vcmp.ne.s32.totalorder %v954, 0
      %vm1315 = vcmp.ne.s32.totalorder %v983, 0
      %vm1316 = vcmp.ne.s32.totalorder %v1012, 0
      %vm1317 = vcmp.ne.s32.totalorder %v1041, 0
      %vm1318 = vcmp.ne.s32.totalorder %v1070, 0
      %vm1319 = vcmp.ne.s32.totalorder %v1099, 0
      %vm1320 = vcmp.ne.s32.totalorder %v1128, 0
      %vm1321 = vcmp.ne.s32.totalorder %v1157, 0
      %vm1322 = vcmp.ne.s32.totalorder %v1186, 0
      %vm1323 = vcmp.ne.s32.totalorder %v1215, 0
      %vm1324 = vcmp.ne.s32.totalorder %v1244, 0
      %vm1325 = vcmp.ne.s32.totalorder %v1273, 0
      %vm1326 = vcmp.ne.s32.totalorder %v1302, 0
      %vm1327 = vcmp.lt.s32.totalorder %v635, 0
      %vm1328 = vcmp.lt.s32.totalorder %v664, 0
      %vm1329 = vcmp.lt.s32.totalorder %v693, 0
      %vm1330 = vcmp.lt.s32.totalorder %v722, 0
      %vm1331 = vcmp.lt.s32.totalorder %v751, 0
      %vm1332 = vcmp.lt.s32.totalorder %v780, 0
      %vm1333 = vcmp.lt.s32.totalorder %v809, 0
      %vm1334 = vcmp.lt.s32.totalorder %v838, 0
      %vm1335 = vcmp.lt.s32.totalorder %v867, 0
      %vm1336 = vcmp.lt.s32.totalorder %v896, 0
      %vm1337 = vcmp.lt.s32.totalorder %v925, 0
      %vm1338 = vcmp.lt.s32.totalorder %v954, 0
      %vm1339 = vcmp.lt.s32.totalorder %v983, 0
      %vm1340 = vcmp.lt.s32.totalorder %v1012, 0
      %vm1341 = vcmp.lt.s32.totalorder %v1041, 0
      %vm1342 = vcmp.lt.s32.totalorder %v1070, 0
      %vm1343 = vcmp.lt.s32.totalorder %v1099, 0
      %vm1344 = vcmp.lt.s32.totalorder %v1128, 0
      %vm1345 = vcmp.lt.s32.totalorder %v1157, 0
      %vm1346 = vcmp.lt.s32.totalorder %v1186, 0
      %vm1347 = vcmp.lt.s32.totalorder %v1215, 0
      %vm1348 = vcmp.lt.s32.totalorder %v1244, 0
      %vm1349 = vcmp.lt.s32.totalorder %v1273, 0
      %vm1350 = vcmp.lt.s32.totalorder %v1302, 0
      %vm1351 = vmand %vm1327, %vm1303
      %vm1352 = vmand %vm1328, %vm1304
      %vm1353 = vmand %vm1329, %vm1305
      %vm1354 = vmand %vm1330, %vm1306
      %vm1355 = vmand %vm1331, %vm1307
      %vm1356 = vmand %vm1332, %vm1308
      %vm1357 = vmand %vm1333, %vm1309
      %vm1358 = vmand %vm1334, %vm1310
      %vm1359 = vmand %vm1335, %vm1311
      %vm1360 = vmand %vm1336, %vm1312
      %vm1361 = vmand %vm1337, %vm1313
      %vm1362 = vmand %vm1338, %vm1314
      %vm1363 = vmand %vm1339, %vm1315
      %vm1364 = vmand %vm1340, %vm1316
      %vm1365 = vmand %vm1341, %vm1317
      %vm1366 = vmand %vm1342, %vm1318
      %vm1367 = vmand %vm1343, %vm1319
      %vm1368 = vmand %vm1344, %vm1320
      %vm1369 = vmand %vm1345, %vm1321
      %vm1370 = vmand %vm1346, %vm1322
      %vm1371 = vmand %vm1347, %vm1323
      %vm1372 = vmand %vm1348, %vm1324
      %vm1373 = vmand %vm1349, %vm1325
      %vm1374 = vmand %vm1350, %vm1326
      %v1375 = vadd.s32 %v635, 24
      %v1376 = vadd.s32 %v664, 24
      %v1377 = vadd.s32 %v693, 24
      %v1378 = vadd.s32 %v722, 24
      %v1379 = vadd.s32 %v751, 24
      %v1380 = vadd.s32 %v780, 24
      %v1381 = vadd.s32 %v809, 24
      %v1382 = vadd.s32 %v838, 24
      %v1383 = vadd.s32 %v867, 24
      %v1384 = vadd.s32 %v896, 24
      %v1385 = vadd.s32 %v925, 24
      %v1386 = vadd.s32 %v954, 24
      %v1387 = vadd.s32 %v983, 24
      %v1388 = vadd.s32 %v1012, 24
      %v1389 = vadd.s32 %v1041, 24
      %v1390 = vadd.s32 %v1070, 24
      %v1391 = vadd.s32 %v1099, 24
      %v1392 = vadd.s32 %v1128, 24
      %v1393 = vadd.s32 %v1157, 24
      %v1394 = vadd.s32 %v1186, 24
      %v1395 = vadd.s32 %v1215, 24
      %v1396 = vadd.s32 %v1244, 24
      %v1397 = vadd.s32 %v1273, 24
      %v1398 = vadd.s32 %v1302, 24
      %v1399 = vsel %vm1351, %v1375, %v635
      %v1400 = vsel %vm1352, %v1376, %v664
      %v1401 = vsel %vm1353, %v1377, %v693
      %v1402 = vsel %vm1354, %v1378, %v722
      %v1403 = vsel %vm1355, %v1379, %v751
      %v1404 = vsel %vm1356, %v1380, %v780
      %v1405 = vsel %vm1357, %v1381, %v809
      %v1406 = vsel %vm1358, %v1382, %v838
      %v1407 = vsel %vm1359, %v1383, %v867
      %v1408 = vsel %vm1360, %v1384, %v896
      %v1409 = vsel %vm1361, %v1385, %v925
      %v1410 = vsel %vm1362, %v1386, %v954
      %v1411 = vsel %vm1363, %v1387, %v983
      %v1412 = vsel %vm1364, %v1388, %v1012
      %v1413 = vsel %vm1365, %v1389, %v1041
      %v1414 = vsel %vm1366, %v1390, %v1070
      %v1415 = vsel %vm1367, %v1391, %v1099
      %v1416 = vsel %vm1368, %v1392, %v1128
      %v1417 = vsel %vm1369, %v1393, %v1157
      %v1418 = vsel %vm1370, %v1394, %v1186
      %v1419 = vsel %vm1371, %v1395, %v1215
      %v1420 = vsel %vm1372, %v1396, %v1244
      %v1421 = vsel %vm1373, %v1397, %v1273
      %v1422 = vsel %vm1374, %v1398, %v1302
      %vm1423 = vcmp.ge.s32.totalorder %v1399, 1
      %vm1424 = vcmp.ge.s32.totalorder %v1400, 1
      %vm1425 = vcmp.ge.s32.totalorder %v1401, 1
      %vm1426 = vcmp.ge.s32.totalorder %v1402, 1
      %vm1427 = vcmp.ge.s32.totalorder %v1403, 1
      %vm1428 = vcmp.ge.s32.totalorder %v1404, 1
      %vm1429 = vcmp.ge.s32.totalorder %v1405, 1
      %vm1430 = vcmp.ge.s32.totalorder %v1406, 1
      %vm1431 = vcmp.ge.s32.totalorder %v1407, 1
      %vm1432 = vcmp.ge.s32.totalorder %v1408, 1
      %vm1433 = vcmp.ge.s32.totalorder %v1409, 1
      %vm1434 = vcmp.ge.s32.totalorder %v1410, 1
      %vm1435 = vcmp.ge.s32.totalorder %v1411, 1
      %vm1436 = vcmp.ge.s32.totalorder %v1412, 1
      %vm1437 = vcmp.ge.s32.totalorder %v1413, 1
      %vm1438 = vcmp.ge.s32.totalorder %v1414, 1
      %vm1439 = vcmp.ge.s32.totalorder %v1415, 1
      %vm1440 = vcmp.ge.s32.totalorder %v1416, 1
      %vm1441 = vcmp.ge.s32.totalorder %v1417, 1
      %vm1442 = vcmp.ge.s32.totalorder %v1418, 1
      %vm1443 = vcmp.ge.s32.totalorder %v1419, 1
      %vm1444 = vcmp.ge.s32.totalorder %v1420, 1
      %vm1445 = vcmp.ge.s32.totalorder %v1421, 1
      %vm1446 = vcmp.ge.s32.totalorder %v1422, 1
      %vm1447 = vcmp.le.s32.totalorder %v1399, 16
      %vm1448 = vcmp.le.s32.totalorder %v1400, 16
      %vm1449 = vcmp.le.s32.totalorder %v1401, 16
      %vm1450 = vcmp.le.s32.totalorder %v1402, 16
      %vm1451 = vcmp.le.s32.totalorder %v1403, 16
      %vm1452 = vcmp.le.s32.totalorder %v1404, 16
      %vm1453 = vcmp.le.s32.totalorder %v1405, 16
      %vm1454 = vcmp.le.s32.totalorder %v1406, 16
      %vm1455 = vcmp.le.s32.totalorder %v1407, 16
      %vm1456 = vcmp.le.s32.totalorder %v1408, 16
      %vm1457 = vcmp.le.s32.totalorder %v1409, 16
      %vm1458 = vcmp.le.s32.totalorder %v1410, 16
      %vm1459 = vcmp.le.s32.totalorder %v1411, 16
      %vm1460 = vcmp.le.s32.totalorder %v1412, 16
      %vm1461 = vcmp.le.s32.totalorder %v1413, 16
      %vm1462 = vcmp.le.s32.totalorder %v1414, 16
      %vm1463 = vcmp.le.s32.totalorder %v1415, 16
      %vm1464 = vcmp.le.s32.totalorder %v1416, 16
      %vm1465 = vcmp.le.s32.totalorder %v1417, 16
      %vm1466 = vcmp.le.s32.totalorder %v1418, 16
      %vm1467 = vcmp.le.s32.totalorder %v1419, 16
      %vm1468 = vcmp.le.s32.totalorder %v1420, 16
      %vm1469 = vcmp.le.s32.totalorder %v1421, 16
      %vm1470 = vcmp.le.s32.totalorder %v1422, 16
      %vm1471 = vmand %vm1423, %vm1447
      %vm1472 = vmand %vm1424, %vm1448
      %vm1473 = vmand %vm1425, %vm1449
      %vm1474 = vmand %vm1426, %vm1450
      %vm1475 = vmand %vm1427, %vm1451
      %vm1476 = vmand %vm1428, %vm1452
      %vm1477 = vmand %vm1429, %vm1453
      %vm1478 = vmand %vm1430, %vm1454
      %vm1479 = vmand %vm1431, %vm1455
      %vm1480 = vmand %vm1432, %vm1456
      %vm1481 = vmand %vm1433, %vm1457
      %vm1482 = vmand %vm1434, %vm1458
      %vm1483 = vmand %vm1435, %vm1459
      %vm1484 = vmand %vm1436, %vm1460
      %vm1485 = vmand %vm1437, %vm1461
      %vm1486 = vmand %vm1438, %vm1462
      %vm1487 = vmand %vm1439, %vm1463
      %vm1488 = vmand %vm1440, %vm1464
      %vm1489 = vmand %vm1441, %vm1465
      %vm1490 = vmand %vm1442, %vm1466
      %vm1491 = vmand %vm1443, %vm1467
      %vm1492 = vmand %vm1444, %vm1468
      %vm1493 = vmand %vm1445, %vm1469
      %vm1494 = vmand %vm1446, %vm1470
      %vm1495 = vcmp.ge.s32.totalorder %v583, 1
      %vm1496 = vcmp.ge.s32.totalorder %v584, 1
      %vm1497 = vcmp.ge.s32.totalorder %v585, 1
      %vm1498 = vcmp.le.s32.totalorder %v583, 16
      %vm1499 = vcmp.le.s32.totalorder %v584, 16
      %vm1500 = vcmp.le.s32.totalorder %v585, 16
      %vm1501 = vmand %vm1495, %vm1498
      %vm1502 = vmand %vm1496, %vm1499
      %vm1503 = vmand %vm1497, %vm1500
      %v1504 = vld [vmem:[%s535] sm:$0xff]
      %v1505 = vld [vmem:[%s535 + $0x8] sm:$0xff]
      %v1506 = vld [vmem:[%s535 + $0x10] sm:$0xff]
      %v1507 = vld [vmem:[%s535 + $0x18] sm:$0xff]
      %v1508 = vld [vmem:[%s535 + $0x20] sm:$0xff]
      %v1509 = vld [vmem:[%s535 + $0x28] sm:$0xff]
      %v1510 = vld [vmem:[%s535 + $0x30] sm:$0xff]
      %v1511 = vld [vmem:[%s535 + $0x38] sm:$0xff]
      %v1512 = vld [vmem:[%s535 + $0x40] sm:$0xff]
      %v1513 = vld [vmem:[%s535 + $0x48] sm:$0xff]
      %v1514 = vld [vmem:[%s535 + $0x50] sm:$0xff]
      %v1515 = vld [vmem:[%s535 + $0x58] sm:$0xff]
      %v1516 = vld [vmem:[%s535 + $0x60] sm:$0xff]
      %v1517 = vld [vmem:[%s535 + $0x68] sm:$0xff]
      %v1518 = vld [vmem:[%s535 + $0x70] sm:$0xff]
      %v1519 = vld [vmem:[%s535 + $0x78] sm:$0xff]
      %v1520 = vld [vmem:[%s535 + $0x80] sm:$0xff]
      %v1521 = vld [vmem:[%s535 + $0x88] sm:$0xff]
      %v1522 = vld [vmem:[%s535 + $0x90] sm:$0xff]
      %v1523 = vld [vmem:[%s535 + $0x98] sm:$0xff]
      %v1524 = vld [vmem:[%s535 + $0xa0] sm:$0xff]
      %v1525 = vld [vmem:[%s535 + $0xa8] sm:$0xff]
      %v1526 = vld [vmem:[%s535 + $0xb0] sm:$0xff]
      %v1527 = vld [vmem:[%s535 + $0xb8] sm:$0xff]
      %v1528 = vld [vmem:[%s3] sm:$0xff]
      %v1529 = vld [vmem:[%s3 + $0x8] sm:$0xff]
      %vm1530 = vcmask 130048
      %v1532 = vsel %vm1530, %v1504, 0
      %v1535 = vsel %vm1530, %v1505, 0
      %v1538 = vsel %vm1530, %v1506, 0
      %v1541 = vsel %vm1530, %v1507, 0
      %v1544 = vsel %vm1530, %v1508, 0
      %v1547 = vsel %vm1530, %v1509, 0
      %v1550 = vsel %vm1530, %v1510, 0
      %v1553 = vsel %vm1530, %v1511, 0
      %v1556 = vsel %vm1530, %v1512, 0
      %v1559 = vsel %vm1530, %v1513, 0
      %v1562 = vsel %vm1530, %v1514, 0
      %v1565 = vsel %vm1530, %v1515, 0
      %v1568 = vsel %vm1530, %v1516, 0
      %v1571 = vsel %vm1530, %v1517, 0
      %v1574 = vsel %vm1530, %v1518, 0
      %v1577 = vsel %vm1530, %v1519, 0
      %v1580 = vsel %vm1530, %v1520, 0
      %v1583 = vsel %vm1530, %v1521, 0
      %v1586 = vsel %vm1530, %v1522, 0
      %v1589 = vsel %vm1530, %v1523, 0
      %v1592 = vsel %vm1530, %v1524, 0
      %v1595 = vsel %vm1530, %v1525, 0
      %v1598 = vsel %vm1530, %v1526, 0
      %v1601 = vsel %vm1530, %v1527, 0
      %1603 = vmatpush.msra.mxu0 0.0
      %1604 = vmatpush.msra.mxu0 0.0
      %1605 = vmatpush.msra.mxu0 0.0
      %1606 = vmatpush.msra.mxu0 0.0
      %1607 = vmatpush.msra.mxu0 0.0
      %1608 = vmatpush.msra.mxu0 0.0
      %1609 = vmatpush.msra.mxu0 0.0
      %1610 = vmatpush.msra.mxu0 0.0
      %1611 = vmatpush.msra.mxu0 0.0
      %1612 = vmatpush.msra.mxu0 0.0
      %1613 = vmatpush.msra.mxu0 0.0
      %1614 = vmatpush.msra.mxu0 0.0
      %1615 = vmatpush.msra.mxu0 0.0
      %1616 = vmatpush.msra.mxu0 0.0
      %1617 = vmatpush.msra.mxu0 %v1529
      %1618 = vmatpush.msra.mxu0 %v1528
      %1619 = vmatmul.f32.gmra.mxu0 %v1532
      %v1620 = vpop.f32.mrf.mxu0
      %v1621 = vadd.f32 0.0, %v1620
      %1622 = vmatmul.f32.gmra.mxu0 %v1535
      %v1623 = vpop.f32.mrf.mxu0
      %v1624 = vadd.f32 0.0, %v1623
      %1625 = vmatmul.f32.gmra.mxu0 %v1538
      %v1626 = vpop.f32.mrf.mxu0
      %v1627 = vadd.f32 0.0, %v1626
      %1628 = vmatmul.f32.gmra.mxu0 %v1541
      %v1629 = vpop.f32.mrf.mxu0
      %v1630 = vadd.f32 0.0, %v1629
      %1631 = vmatmul.f32.gmra.mxu0 %v1544
      %v1632 = vpop.f32.mrf.mxu0
      %v1633 = vadd.f32 0.0, %v1632
      %1634 = vmatmul.f32.gmra.mxu0 %v1547
      %v1635 = vpop.f32.mrf.mxu0
      %v1636 = vadd.f32 0.0, %v1635
      %1637 = vmatmul.f32.gmra.mxu0 %v1550
      %v1638 = vpop.f32.mrf.mxu0
      %v1639 = vadd.f32 0.0, %v1638
      %1640 = vmatmul.f32.gmra.mxu0 %v1553
      %v1641 = vpop.f32.mrf.mxu0
      %v1642 = vadd.f32 0.0, %v1641
      %1643 = vmatmul.f32.gmra.mxu0 %v1556
      %v1644 = vpop.f32.mrf.mxu0
      %v1645 = vadd.f32 0.0, %v1644
      %1646 = vmatmul.f32.gmra.mxu0 %v1559
      %v1647 = vpop.f32.mrf.mxu0
      %v1648 = vadd.f32 0.0, %v1647
      %1649 = vmatmul.f32.gmra.mxu0 %v1562
      %v1650 = vpop.f32.mrf.mxu0
      %v1651 = vadd.f32 0.0, %v1650
      %1652 = vmatmul.f32.gmra.mxu0 %v1565
      %v1653 = vpop.f32.mrf.mxu0
      %v1654 = vadd.f32 0.0, %v1653
      %1655 = vmatmul.f32.gmra.mxu0 %v1568
      %v1656 = vpop.f32.mrf.mxu0
      %v1657 = vadd.f32 0.0, %v1656
      %1658 = vmatmul.f32.gmra.mxu0 %v1571
      %v1659 = vpop.f32.mrf.mxu0
      %v1660 = vadd.f32 0.0, %v1659
      %1661 = vmatmul.f32.gmra.mxu0 %v1574
      %v1662 = vpop.f32.mrf.mxu0
      %v1663 = vadd.f32 0.0, %v1662
      %1664 = vmatmul.f32.gmra.mxu0 %v1577
      %v1665 = vpop.f32.mrf.mxu0
      %v1666 = vadd.f32 0.0, %v1665
      %1667 = vmatmul.f32.gmra.mxu0 %v1580
      %v1668 = vpop.f32.mrf.mxu0
      %v1669 = vadd.f32 0.0, %v1668
      %1670 = vmatmul.f32.gmra.mxu0 %v1583
      %v1671 = vpop.f32.mrf.mxu0
      %v1672 = vadd.f32 0.0, %v1671
      %1673 = vmatmul.f32.gmra.mxu0 %v1586
      %v1674 = vpop.f32.mrf.mxu0
      %v1675 = vadd.f32 0.0, %v1674
      %1676 = vmatmul.f32.gmra.mxu0 %v1589
      %v1677 = vpop.f32.mrf.mxu0
      %v1678 = vadd.f32 0.0, %v1677
      %1679 = vmatmul.f32.gmra.mxu0 %v1592
      %v1680 = vpop.f32.mrf.mxu0
      %v1681 = vadd.f32 0.0, %v1680
      %1682 = vmatmul.f32.gmra.mxu0 %v1595
      %v1683 = vpop.f32.mrf.mxu0
      %v1684 = vadd.f32 0.0, %v1683
      %1685 = vmatmul.f32.gmra.mxu0 %v1598
      %v1686 = vpop.f32.mrf.mxu0
      %v1687 = vadd.f32 0.0, %v1686
      %1688 = vmatmul.f32.gmra.mxu0 %v1601
      %v1689 = vpop.f32.mrf.mxu0
      %v1690 = vadd.f32 0.0, %v1689
      %1691 = vdwg.mxu0
      %v1692 = vld [vmem:[%s4] sm:$0x1]
      %v1694 = vperm.slane %v1692, 0
      %v1696 = vmul.f32 %v1621, %v1694
      %v1697 = vmul.f32 %v1624, %v1694
      %v1698 = vmul.f32 %v1627, %v1694
      %v1699 = vmul.f32 %v1630, %v1694
      %v1700 = vmul.f32 %v1633, %v1694
      %v1701 = vmul.f32 %v1636, %v1694
      %v1702 = vmul.f32 %v1639, %v1694
      %v1703 = vmul.f32 %v1642, %v1694
      %v1704 = vmul.f32 %v1645, %v1694
      %v1705 = vmul.f32 %v1648, %v1694
      %v1706 = vmul.f32 %v1651, %v1694
      %v1707 = vmul.f32 %v1654, %v1694
      %v1708 = vmul.f32 %v1657, %v1694
      %v1709 = vmul.f32 %v1660, %v1694
      %v1710 = vmul.f32 %v1663, %v1694
      %v1711 = vmul.f32 %v1666, %v1694
      %v1712 = vmul.f32 %v1669, %v1694
      %v1713 = vmul.f32 %v1672, %v1694
      %v1714 = vmul.f32 %v1675, %v1694
      %v1715 = vmul.f32 %v1678, %v1694
      %v1716 = vmul.f32 %v1681, %v1694
      %v1717 = vmul.f32 %v1684, %v1694
      %v1718 = vmul.f32 %v1687, %v1694
      %v1719 = vmul.f32 %v1690, %v1694
      %v1720 = vld [vmem:[%s5] sm:$0x1]
      %v1722 = vperm.slane %v1720, 0
      %v1724 = vadd.f32 %v1696, %v1722
      %v1725 = vadd.f32 %v1697, %v1722
      %v1726 = vadd.f32 %v1698, %v1722
      %v1727 = vadd.f32 %v1699, %v1722
      %v1728 = vadd.f32 %v1700, %v1722
      %v1729 = vadd.f32 %v1701, %v1722
      %v1730 = vadd.f32 %v1702, %v1722
      %v1731 = vadd.f32 %v1703, %v1722
      %v1732 = vadd.f32 %v1704, %v1722
      %v1733 = vadd.f32 %v1705, %v1722
      %v1734 = vadd.f32 %v1706, %v1722
      %v1735 = vadd.f32 %v1707, %v1722
      %v1736 = vadd.f32 %v1708, %v1722
      %v1737 = vadd.f32 %v1709, %v1722
      %v1738 = vadd.f32 %v1710, %v1722
      %v1739 = vadd.f32 %v1711, %v1722
      %v1740 = vadd.f32 %v1712, %v1722
      %v1741 = vadd.f32 %v1713, %v1722
      %v1742 = vadd.f32 %v1714, %v1722
      %v1743 = vadd.f32 %v1715, %v1722
      %v1744 = vadd.f32 %v1716, %v1722
      %v1745 = vadd.f32 %v1717, %v1722
      %v1746 = vadd.f32 %v1718, %v1722
      %v1747 = vadd.f32 %v1719, %v1722
      %v1748 = vmax.f32 %v1724, 0.0
      %v1749 = vmax.f32 %v1725, 0.0
      %v1750 = vmax.f32 %v1726, 0.0
      %v1751 = vmax.f32 %v1727, 0.0
      %v1752 = vmax.f32 %v1728, 0.0
      %v1753 = vmax.f32 %v1729, 0.0
      %v1754 = vmax.f32 %v1730, 0.0
      %v1755 = vmax.f32 %v1731, 0.0
      %v1756 = vmax.f32 %v1732, 0.0
      %v1757 = vmax.f32 %v1733, 0.0
      %v1758 = vmax.f32 %v1734, 0.0
      %v1759 = vmax.f32 %v1735, 0.0
      %v1760 = vmax.f32 %v1736, 0.0
      %v1761 = vmax.f32 %v1737, 0.0
      %v1762 = vmax.f32 %v1738, 0.0
      %v1763 = vmax.f32 %v1739, 0.0
      %v1764 = vmax.f32 %v1740, 0.0
      %v1765 = vmax.f32 %v1741, 0.0
      %v1766 = vmax.f32 %v1742, 0.0
      %v1767 = vmax.f32 %v1743, 0.0
      %v1768 = vmax.f32 %v1744, 0.0
      %v1769 = vmax.f32 %v1745, 0.0
      %v1770 = vmax.f32 %v1746, 0.0
      %v1771 = vmax.f32 %v1747, 0.0
      %v1772 = vsel %vm1471, 1, 0
      %v1773 = vsel %vm1472, 1, 0
      %v1774 = vsel %vm1473, 1, 0
      %v1775 = vsel %vm1474, 1, 0
      %v1776 = vsel %vm1475, 1, 0
      %v1777 = vsel %vm1476, 1, 0
      %v1778 = vsel %vm1477, 1, 0
      %v1779 = vsel %vm1478, 1, 0
      %v1780 = vsel %vm1479, 1, 0
      %v1781 = vsel %vm1480, 1, 0
      %v1782 = vsel %vm1481, 1, 0
      %v1783 = vsel %vm1482, 1, 0
      %v1784 = vsel %vm1483, 1, 0
      %v1785 = vsel %vm1484, 1, 0
      %v1786 = vsel %vm1485, 1, 0
      %v1787 = vsel %vm1486, 1, 0
      %v1788 = vsel %vm1487, 1, 0
      %v1789 = vsel %vm1488, 1, 0
      %v1790 = vsel %vm1489, 1, 0
      %v1791 = vsel %vm1490, 1, 0
      %v1792 = vsel %vm1491, 1, 0
      %v1793 = vsel %vm1492, 1, 0
      %v1794 = vsel %vm1493, 1, 0
      %v1795 = vsel %vm1494, 1, 0
      %vm1796 = vcmp.eq.s32.totalorder %v1772, 1
      %vm1797 = vcmp.eq.s32.totalorder %v1773, 1
      %vm1798 = vcmp.eq.s32.totalorder %v1774, 1
      %vm1799 = vcmp.eq.s32.totalorder %v1775, 1
      %vm1800 = vcmp.eq.s32.totalorder %v1776, 1
      %vm1801 = vcmp.eq.s32.totalorder %v1777, 1
      %vm1802 = vcmp.eq.s32.totalorder %v1778, 1
      %vm1803 = vcmp.eq.s32.totalorder %v1779, 1
      %vm1804 = vcmp.eq.s32.totalorder %v1780, 1
      %vm1805 = vcmp.eq.s32.totalorder %v1781, 1
      %vm1806 = vcmp.eq.s32.totalorder %v1782, 1
      %vm1807 = vcmp.eq.s32.totalorder %v1783, 1
      %vm1808 = vcmp.eq.s32.totalorder %v1784, 1
      %vm1809 = vcmp.eq.s32.totalorder %v1785, 1
      %vm1810 = vcmp.eq.s32.totalorder %v1786, 1
      %vm1811 = vcmp.eq.s32.totalorder %v1787, 1
      %vm1812 = vcmp.eq.s32.totalorder %v1788, 1
      %vm1813 = vcmp.eq.s32.totalorder %v1789, 1
      %vm1814 = vcmp.eq.s32.totalorder %v1790, 1
      %vm1815 = vcmp.eq.s32.totalorder %v1791, 1
      %vm1816 = vcmp.eq.s32.totalorder %v1792, 1
      %vm1817 = vcmp.eq.s32.totalorder %v1793, 1
      %vm1818 = vcmp.eq.s32.totalorder %v1794, 1
      %vm1819 = vcmp.eq.s32.totalorder %v1795, 1
      %v1820 = vsel %vm1796, %v1748, 0.0
      %v1821 = vsel %vm1797, %v1749, 0.0
      %v1822 = vsel %vm1798, %v1750, 0.0
      %v1823 = vsel %vm1799, %v1751, 0.0
      %v1824 = vsel %vm1800, %v1752, 0.0
      %v1825 = vsel %vm1801, %v1753, 0.0
      %v1826 = vsel %vm1802, %v1754, 0.0
      %v1827 = vsel %vm1803, %v1755, 0.0
      %v1828 = vsel %vm1804, %v1756, 0.0
      %v1829 = vsel %vm1805, %v1757, 0.0
      %v1830 = vsel %vm1806, %v1758, 0.0
      %v1831 = vsel %vm1807, %v1759, 0.0
      %v1832 = vsel %vm1808, %v1760, 0.0
      %v1833 = vsel %vm1809, %v1761, 0.0
      %v1834 = vsel %vm1810, %v1762, 0.0
      %v1835 = vsel %vm1811, %v1763, 0.0
      %v1836 = vsel %vm1812, %v1764, 0.0
      %v1837 = vsel %vm1813, %v1765, 0.0
      %v1838 = vsel %vm1814, %v1766, 0.0
      %v1839 = vsel %vm1815, %v1767, 0.0
      %v1840 = vsel %vm1816, %v1768, 0.0
      %v1841 = vsel %vm1817, %v1769, 0.0
      %v1842 = vsel %vm1818, %v1770, 0.0
      %v1843 = vsel %vm1819, %v1771, 0.0
      %vm1844 = vcmask 31744
      %1845 = vst.msk [vmem:[#allocation2 + $0x18] sm:$0xff] %vm1844, %v1820
      %1846 = vst.msk [vmem:[#allocation2 + $0x20] sm:$0xff] %vm1844, %v1821
      %1847 = vst.msk [vmem:[#allocation2 + $0x28] sm:$0xff] %vm1844, %v1822
      %1848 = vst.msk [vmem:[#allocation2 + $0x30] sm:$0xff] %vm1844, %v1823
      %1849 = vst.msk [vmem:[#allocation2 + $0x38] sm:$0xff] %vm1844, %v1824
      %1850 = vst.msk [vmem:[#allocation2 + $0x40] sm:$0xff] %vm1844, %v1825
      %1851 = vst.msk [vmem:[#allocation2 + $0x48] sm:$0xff] %vm1844, %v1826
      %1852 = vst.msk [vmem:[#allocation2 + $0x50] sm:$0xff] %vm1844, %v1827
      %1853 = vst.msk [vmem:[#allocation2 + $0x58] sm:$0xff] %vm1844, %v1828
      %1854 = vst.msk [vmem:[#allocation2 + $0x60] sm:$0xff] %vm1844, %v1829
      %1855 = vst.msk [vmem:[#allocation2 + $0x68] sm:$0xff] %vm1844, %v1830
      %1856 = vst.msk [vmem:[#allocation2 + $0x70] sm:$0xff] %vm1844, %v1831
      %1857 = vst.msk [vmem:[#allocation2 + $0x78] sm:$0xff] %vm1844, %v1832
      %1858 = vst.msk [vmem:[#allocation2 + $0x80] sm:$0xff] %vm1844, %v1833
      %1859 = vst.msk [vmem:[#allocation2 + $0x88] sm:$0xff] %vm1844, %v1834
      %1860 = vst.msk [vmem:[#allocation2 + $0x90] sm:$0xff] %vm1844, %v1835
      %1861 = vst.msk [vmem:[#allocation2 + $0x98] sm:$0xff] %vm1844, %v1836
      %1862 = vst.msk [vmem:[#allocation2 + $0xa0] sm:$0xff] %vm1844, %v1837
      %1863 = vst.msk [vmem:[#allocation2 + $0xa8] sm:$0xff] %vm1844, %v1838
      %1864 = vst.msk [vmem:[#allocation2 + $0xb0] sm:$0xff] %vm1844, %v1839
      %1865 = vst.msk [vmem:[#allocation2 + $0xb8] sm:$0xff] %vm1844, %v1840
      %1866 = vst.msk [vmem:[#allocation2 + $0xc0] sm:$0xff] %vm1844, %v1841
      %1867 = vst.msk [vmem:[#allocation2 + $0xc8] sm:$0xff] %vm1844, %v1842
      %1868 = vst.msk [vmem:[#allocation2 + $0xd0] sm:$0xff] %vm1844, %v1843
      %v1869 = vld [vmem:[%s549] sm:$0xff]
      %v1870 = vld [vmem:[%s549 + $0x8] sm:$0xff]
      %v1871 = vld [vmem:[%s549 + $0x10] sm:$0xff]
      %v1872 = vld [vmem:[%s3] sm:$0xff]
      %v1873 = vld [vmem:[%s3 + $0x8] sm:$0xff]
      %v1875 = vsel %vm1530, %v1869, 0
      %v1878 = vsel %vm1530, %v1870, 0
      %v1881 = vsel %vm1530, %v1871, 0
      %1883 = vmatpush.msra.mxu0 0.0
      %1884 = vmatpush.msra.mxu0 0.0
      %1885 = vmatpush.msra.mxu0 0.0
      %1886 = vmatpush.msra.mxu0 0.0
      %1887 = vmatpush.msra.mxu0 0.0
      %1888 = vmatpush.msra.mxu0 0.0
      %1889 = vmatpush.msra.mxu0 0.0
      %1890 = vmatpush.msra.mxu0 0.0
      %1891 = vmatpush.msra.mxu0 0.0
      %1892 = vmatpush.msra.mxu0 0.0
      %1893 = vmatpush.msra.mxu0 0.0
      %1894 = vmatpush.msra.mxu0 0.0
      %1895 = vmatpush.msra.mxu0 0.0
      %1896 = vmatpush.msra.mxu0 0.0
      %1897 = vmatpush.msra.mxu0 %v1873
      %1898 = vmatpush.msra.mxu0 %v1872
      %1899 = vmatmul.f32.gmra.mxu0 %v1875
      %v1900 = vpop.f32.mrf.mxu0
      %v1901 = vadd.f32 0.0, %v1900
      %1902 = vmatmul.f32.gmra.mxu0 %v1878
      %v1903 = vpop.f32.mrf.mxu0
      %v1904 = vadd.f32 0.0, %v1903
      %1905 = vmatmul.f32.gmra.mxu0 %v1881
      %v1906 = vpop.f32.mrf.mxu0
      %v1907 = vadd.f32 0.0, %v1906
      %1908 = vdwg.mxu0
      %v1909 = vld [vmem:[%s4] sm:$0x1]
      %v1911 = vperm.slane %v1909, 0
      %v1913 = vmul.f32 %v1901, %v1911
      %v1914 = vmul.f32 %v1904, %v1911
      %v1915 = vmul.f32 %v1907, %v1911
      %v1916 = vld [vmem:[%s5] sm:$0x1]
      %v1918 = vperm.slane %v1916, 0
      %v1920 = vadd.f32 %v1913, %v1918
      %v1921 = vadd.f32 %v1914, %v1918
      %v1922 = vadd.f32 %v1915, %v1918
      %v1923 = vmax.f32 %v1920, 0.0
      %v1924 = vmax.f32 %v1921, 0.0
      %v1925 = vmax.f32 %v1922, 0.0
      %v1926 = vld [vmem:[%s566] sm:$0xff]
      %v1927 = vld [vmem:[%s566 + $0x8] sm:$0xff]
      %v1928 = vld [vmem:[%s566 + $0x10] sm:$0xff]
      %v1930 = vsel %vm1530, %v1926, 0
      %v1933 = vsel %vm1530, %v1927, 0
      %v1936 = vsel %vm1530, %v1928, 0
      %1938 = vmatpush.msra.mxu0 0.0
      %1939 = vmatpush.msra.mxu0 0.0
      %1940 = vmatpush.msra.mxu0 0.0
      %1941 = vmatpush.msra.mxu0 0.0
      %1942 = vmatpush.msra.mxu0 0.0
      %1943 = vmatpush.msra.mxu0 0.0
      %1944 = vmatpush.msra.mxu0 0.0
      %1945 = vmatpush.msra.mxu0 0.0
      %1946 = vmatpush.msra.mxu0 0.0
      %1947 = vmatpush.msra.mxu0 0.0
      %1948 = vmatpush.msra.mxu0 0.0
      %1949 = vmatpush.msra.mxu0 0.0
      %1950 = vmatpush.msra.mxu0 0.0
      %1951 = vmatpush.msra.mxu0 0.0
      %1952 = vmatpush.msra.mxu0 %v1873
      %1953 = vmatpush.msra.mxu0 %v1872
      %1954 = vmatmul.f32.gmra.mxu0 %v1930
      %v1955 = vpop.f32.mrf.mxu0
      %v1956 = vadd.f32 0.0, %v1955
      %1957 = vmatmul.f32.gmra.mxu0 %v1933
      %v1958 = vpop.f32.mrf.mxu0
      %v1959 = vadd.f32 0.0, %v1958
      %1960 = vmatmul.f32.gmra.mxu0 %v1936
      %v1961 = vpop.f32.mrf.mxu0
      %v1962 = vadd.f32 0.0, %v1961
      %1963 = vdwg.mxu0
      %v1964 = vmul.f32 %v1956, %v1911
      %v1965 = vmul.f32 %v1959, %v1911
      %v1966 = vmul.f32 %v1962, %v1911
      %v1967 = vadd.f32 %v1964, %v1918
      %v1968 = vadd.f32 %v1965, %v1918
      %v1969 = vadd.f32 %v1966, %v1918
      %v1970 = vmax.f32 %v1967, 0.0
      %v1971 = vmax.f32 %v1968, 0.0
      %v1972 = vmax.f32 %v1969, 0.0
      %p1973 = scmp.gt.s32.totalorder %s28, 0
      %s1974 = scalar_select %p1973, 1, 0
      %v1975 = vstv %s1974
      %vm1976 = vcmp.eq.s32.totalorder %v1975, 1
      %vm1977 = vmand %vm1501, %vm1976
      %vm1978 = vmand %vm1502, %vm1976
      %vm1979 = vmand %vm1503, %vm1976
      %v1980 = vsel %vm1977, 1, 0
      %v1981 = vsel %vm1978, 1, 0
      %v1982 = vsel %vm1979, 1, 0
      %vm1983 = vcmp.eq.s32.totalorder %v1980, 1
      %vm1984 = vcmp.eq.s32.totalorder %v1981, 1
      %vm1985 = vcmp.eq.s32.totalorder %v1982, 1
      %v1986 = vsel %vm1983, %v1923, 0.0
      %v1987 = vsel %vm1984, %v1924, 0.0
      %v1988 = vsel %vm1985, %v1925, 0.0
      %1989 = vst.msk [vmem:[#allocation2] sm:$0xff] %vm1844, %v1986
      %1990 = vst.msk [vmem:[#allocation2 + $0x8] sm:$0xff] %vm1844, %v1987
      %1991 = vst.msk [vmem:[#allocation2 + $0x10] sm:$0xff] %vm1844, %v1988
      %p1992 = scmp.lt.s32.totalorder %s28, 1
      %s1993 = scalar_select %p1992, 1, 0
      %v1994 = vstv %s1993
      %vm1995 = vcmp.eq.s32.totalorder %v1994, 1
      %vm1996 = vmand %vm1501, %vm1995
      %vm1997 = vmand %vm1502, %vm1995
      %vm1998 = vmand %vm1503, %vm1995
      %v1999 = vsel %vm1996, 1, 0
      %v2000 = vsel %vm1997, 1, 0
      %v2001 = vsel %vm1998, 1, 0
      %vm2002 = vcmp.eq.s32.totalorder %v1999, 1
      %vm2003 = vcmp.eq.s32.totalorder %v2000, 1
      %vm2004 = vcmp.eq.s32.totalorder %v2001, 1
      %v2005 = vsel %vm2002, %v1970, 0.0
      %v2006 = vsel %vm2003, %v1971, 0.0
      %v2007 = vsel %vm2004, %v1972, 0.0
      %2008 = vst.msk [vmem:[#allocation2 + $0xd8] sm:$0xff] %vm1844, %v2005
      %2009 = vst.msk [vmem:[#allocation2 + $0xe0] sm:$0xff] %vm1844, %v2006
      %2010 = vst.msk [vmem:[#allocation2 + $0xe8] sm:$0xff] %vm1844, %v2007
      %2011 = vst.msk [vmem:[#allocation2 + $0xf0] sm:$0xff] %vm1844, 0.0
      %v2012 = vld [vmem:[#allocation2] sm:$0xff]
      %v2013 = vld [vmem:[#allocation2 + $0x8] sm:$0xff]
      %v2014 = vld [vmem:[#allocation2 + $0x10] sm:$0xff]
      %v2015 = vld [vmem:[#allocation2 + $0x18] sm:$0xff]
      %v2016 = vld [vmem:[#allocation2 + $0x20] sm:$0xff]
      %v2017 = vld [vmem:[#allocation2 + $0x28] sm:$0xff]
      %v2018 = vld [vmem:[#allocation2 + $0x30] sm:$0xff]
      %v2019 = vld [vmem:[#allocation2 + $0x38] sm:$0xff]
      %v2020 = vld [vmem:[#allocation2 + $0x40] sm:$0xff]
      %v2021 = vld [vmem:[#allocation2 + $0x48] sm:$0xff]
      %v2022 = vld [vmem:[#allocation2 + $0x50] sm:$0xff]
      %v2023 = vld [vmem:[#allocation2 + $0x58] sm:$0xff]
      %v2024 = vld [vmem:[#allocation2 + $0x60] sm:$0xff]
      %v2025 = vld [vmem:[#allocation2 + $0x68] sm:$0xff]
      %v2026 = vld [vmem:[#allocation2 + $0x70] sm:$0xff]
      %v2027 = vld [vmem:[#allocation2 + $0x78] sm:$0xff]
      %v2028 = vld [vmem:[#allocation2 + $0x80] sm:$0xff]
      %v2029 = vld [vmem:[#allocation2 + $0x88] sm:$0xff]
      %v2030 = vld [vmem:[#allocation2 + $0x90] sm:$0xff]
      %v2031 = vld [vmem:[#allocation2 + $0x98] sm:$0xff]
      %v2032 = vld [vmem:[#allocation2 + $0xa0] sm:$0xff]
      %v2033 = vld [vmem:[#allocation2 + $0xa8] sm:$0xff]
      %v2034 = vld [vmem:[#allocation2 + $0xb0] sm:$0xff]
      %v2035 = vld [vmem:[#allocation2 + $0xb8] sm:$0xff]
      %v2036 = vld [vmem:[%s6] sm:$0xf]
      %v2037 = vld [vmem:[#allocation2 + $0x1] sm:$0xff]
      %v2038 = vld [vmem:[#allocation2 + $0x9] sm:$0xff]
      %v2039 = vld [vmem:[#allocation2 + $0x11] sm:$0xff]
      %v2040 = vld [vmem:[#allocation2 + $0x19] sm:$0xff]
      %v2041 = vld [vmem:[#allocation2 + $0x21] sm:$0xff]
      %v2042 = vld [vmem:[#allocation2 + $0x29] sm:$0xff]
      %v2043 = vld [vmem:[#allocation2 + $0x31] sm:$0xff]
      %v2044 = vld [vmem:[#allocation2 + $0x39] sm:$0xff]
      %v2045 = vld [vmem:[#allocation2 + $0x41] sm:$0xff]
      %v2046 = vld [vmem:[#allocation2 + $0x49] sm:$0xff]
      %v2047 = vld [vmem:[#allocation2 + $0x51] sm:$0xff]
      %v2048 = vld [vmem:[#allocation2 + $0x59] sm:$0xff]
      %v2049 = vld [vmem:[#allocation2 + $0x61] sm:$0xff]
      %v2050 = vld [vmem:[#allocation2 + $0x69] sm:$0xff]
      %v2051 = vld [vmem:[#allocation2 + $0x71] sm:$0xff]
      %v2052 = vld [vmem:[#allocation2 + $0x79] sm:$0xff]
      %v2053 = vld [vmem:[#allocation2 + $0x81] sm:$0xff]
      %v2054 = vld [vmem:[#allocation2 + $0x89] sm:$0xff]
      %v2055 = vld [vmem:[#allocation2 + $0x91] sm:$0xff]
      %v2056 = vld [vmem:[#allocation2 + $0x99] sm:$0xff]
      %v2057 = vld [vmem:[#allocation2 + $0xa1] sm:$0xff]
      %v2058 = vld [vmem:[#allocation2 + $0xa9] sm:$0xff]
      %v2059 = vld [vmem:[#allocation2 + $0xb1] sm:$0xff]
      %v2060 = vld [vmem:[#allocation2 + $0xb9] sm:$0xff]
      %s2061 = scalar_lea.vmem %s6, 4
      %v2062 = vld [vmem:[%s2061] sm:$0xf]
      %v2064 = vsel %vm1844, %v2037, 0
      %v2067 = vsel %vm1844, %v2038, 0
      %v2070 = vsel %vm1844, %v2039, 0
      %v2073 = vsel %vm1844, %v2040, 0
      %v2076 = vsel %vm1844, %v2041, 0
      %v2079 = vsel %vm1844, %v2042, 0
      %v2082 = vsel %vm1844, %v2043, 0
      %v2085 = vsel %vm1844, %v2044, 0
      %v2088 = vsel %vm1844, %v2045, 0
      %v2091 = vsel %vm1844, %v2046, 0
      %v2094 = vsel %vm1844, %v2047, 0
      %v2097 = vsel %vm1844, %v2048, 0
      %v2100 = vsel %vm1844, %v2049, 0
      %v2103 = vsel %vm1844, %v2050, 0
      %v2106 = vsel %vm1844, %v2051, 0
      %v2109 = vsel %vm1844, %v2052, 0
      %v2112 = vsel %vm1844, %v2053, 0
      %v2115 = vsel %vm1844, %v2054, 0
      %v2118 = vsel %vm1844, %v2055, 0
      %v2121 = vsel %vm1844, %v2056, 0
      %v2124 = vsel %vm1844, %v2057, 0
      %v2127 = vsel %vm1844, %v2058, 0
      %v2130 = vsel %vm1844, %v2059, 0
      %v2133 = vsel %vm1844, %v2060, 0
      %vm2135 = vcmask 1043456
      %v2137 = vsel %vm2135, %v2062, 0
      %2139 = vmatpush.msra.mxu0 0.0
      %2140 = vmatpush.msra.mxu0 0.0
      %2141 = vmatpush.msra.mxu0 0.0
      %2142 = vmatpush.msra.mxu0 0.0
      %2143 = vmatpush.msra.mxu0 0.0
      %2144 = vmatpush.msra.mxu0 0.0
      %2145 = vmatpush.msra.mxu0 0.0
      %2146 = vmatpush.msra.mxu0 0.0
      %2147 = vmatpush.msra.mxu0 0.0
      %2148 = vmatpush.msra.mxu0 0.0
      %2149 = vmatpush.msra.mxu0 0.0
      %2150 = vmatpush.msra.mxu0 0.0
      %2151 = vmatpush.msra.mxu0 0.0
      %2152 = vmatpush.msra.mxu0 0.0
      %2153 = vmatpush.msra.mxu0 0.0
      %2154 = vmatpush.msra.mxu0 %v2137
      %2155 = vmatmul.f32.gmra.mxu0 %v2064
      %v2156 = vpop.f32.mrf.mxu0
      %v2157 = vadd.f32 0.0, %v2156
      %2158 = vmatmul.f32.gmra.mxu0 %v2067
      %v2159 = vpop.f32.mrf.mxu0
      %v2160 = vadd.f32 0.0, %v2159
      %2161 = vmatmul.f32.gmra.mxu0 %v2070
      %v2162 = vpop.f32.mrf.mxu0
      %v2163 = vadd.f32 0.0, %v2162
      %2164 = vmatmul.f32.gmra.mxu0 %v2073
      %v2165 = vpop.f32.mrf.mxu0
      %v2166 = vadd.f32 0.0, %v2165
      %2167 = vmatmul.f32.gmra.mxu0 %v2076
      %v2168 = vpop.f32.mrf.mxu0
      %v2169 = vadd.f32 0.0, %v2168
      %2170 = vmatmul.f32.gmra.mxu0 %v2079
      %v2171 = vpop.f32.mrf.mxu0
      %v2172 = vadd.f32 0.0, %v2171
      %2173 = vmatmul.f32.gmra.mxu0 %v2082
      %v2174 = vpop.f32.mrf.mxu0
      %v2175 = vadd.f32 0.0, %v2174
      %2176 = vmatmul.f32.gmra.mxu0 %v2085
      %v2177 = vpop.f32.mrf.mxu0
      %v2178 = vadd.f32 0.0, %v2177
      %2179 = vmatmul.f32.gmra.mxu0 %v2088
      %v2180 = vpop.f32.mrf.mxu0
      %v2181 = vadd.f32 0.0, %v2180
      %2182 = vmatmul.f32.gmra.mxu0 %v2091
      %v2183 = vpop.f32.mrf.mxu0
      %v2184 = vadd.f32 0.0, %v2183
      %2185 = vmatmul.f32.gmra.mxu0 %v2094
      %v2186 = vpop.f32.mrf.mxu0
      %v2187 = vadd.f32 0.0, %v2186
      %2188 = vmatmul.f32.gmra.mxu0 %v2097
      %v2189 = vpop.f32.mrf.mxu0
      %v2190 = vadd.f32 0.0, %v2189
      %2191 = vmatmul.f32.gmra.mxu0 %v2100
      %v2192 = vpop.f32.mrf.mxu0
      %v2193 = vadd.f32 0.0, %v2192
      %2194 = vmatmul.f32.gmra.mxu0 %v2103
      %v2195 = vpop.f32.mrf.mxu0
      %v2196 = vadd.f32 0.0, %v2195
      %2197 = vmatmul.f32.gmra.mxu0 %v2106
      %v2198 = vpop.f32.mrf.mxu0
      %v2199 = vadd.f32 0.0, %v2198
      %2200 = vmatmul.f32.gmra.mxu0 %v2109
      %v2201 = vpop.f32.mrf.mxu0
      %v2202 = vadd.f32 0.0, %v2201
      %2203 = vmatmul.f32.gmra.mxu0 %v2112
      %v2204 = vpop.f32.mrf.mxu0
      %v2205 = vadd.f32 0.0, %v2204
      %2206 = vmatmul.f32.gmra.mxu0 %v2115
      %v2207 = vpop.f32.mrf.mxu0
      %v2208 = vadd.f32 0.0, %v2207
      %2209 = vmatmul.f32.gmra.mxu0 %v2118
      %v2210 = vpop.f32.mrf.mxu0
      %v2211 = vadd.f32 0.0, %v2210
      %2212 = vmatmul.f32.gmra.mxu0 %v2121
      %v2213 = vpop.f32.mrf.mxu0
      %v2214 = vadd.f32 0.0, %v2213
      %2215 = vmatmul.f32.gmra.mxu0 %v2124
      %v2216 = vpop.f32.mrf.mxu0
      %v2217 = vadd.f32 0.0, %v2216
      %2218 = vmatmul.f32.gmra.mxu0 %v2127
      %v2219 = vpop.f32.mrf.mxu0
      %v2220 = vadd.f32 0.0, %v2219
      %2221 = vmatmul.f32.gmra.mxu0 %v2130
      %v2222 = vpop.f32.mrf.mxu0
      %v2223 = vadd.f32 0.0, %v2222
      %2224 = vmatmul.f32.gmra.mxu0 %v2133
      %v2225 = vpop.f32.mrf.mxu0
      %v2226 = vadd.f32 0.0, %v2225
      %2227 = vdwg.mxu0
      %v2229 = vsel %vm1844, %v2012, 0
      %v2232 = vsel %vm1844, %v2013, 0
      %v2235 = vsel %vm1844, %v2014, 0
      %v2238 = vsel %vm1844, %v2015, 0
      %v2241 = vsel %vm1844, %v2016, 0
      %v2244 = vsel %vm1844, %v2017, 0
      %v2247 = vsel %vm1844, %v2018, 0
      %v2250 = vsel %vm1844, %v2019, 0
      %v2253 = vsel %vm1844, %v2020, 0
      %v2256 = vsel %vm1844, %v2021, 0
      %v2259 = vsel %vm1844, %v2022, 0
      %v2262 = vsel %vm1844, %v2023, 0
      %v2265 = vsel %vm1844, %v2024, 0
      %v2268 = vsel %vm1844, %v2025, 0
      %v2271 = vsel %vm1844, %v2026, 0
      %v2274 = vsel %vm1844, %v2027, 0
      %v2277 = vsel %vm1844, %v2028, 0
      %v2280 = vsel %vm1844, %v2029, 0
      %v2283 = vsel %vm1844, %v2030, 0
      %v2286 = vsel %vm1844, %v2031, 0
      %v2289 = vsel %vm1844, %v2032, 0
      %v2292 = vsel %vm1844, %v2033, 0
      %v2295 = vsel %vm1844, %v2034, 0
      %v2298 = vsel %vm1844, %v2035, 0
      %v2301 = vsel %vm2135, %v2036, 0
      %2303 = vmatpush.msra.mxu0 0.0
      %2304 = vmatpush.msra.mxu0 0.0
      %2305 = vmatpush.msra.mxu0 0.0
      %2306 = vmatpush.msra.mxu0 0.0
      %2307 = vmatpush.msra.mxu0 0.0
      %2308 = vmatpush.msra.mxu0 0.0
      %2309 = vmatpush.msra.mxu0 0.0
      %2310 = vmatpush.msra.mxu0 0.0
      %2311 = vmatpush.msra.mxu0 0.0
      %2312 = vmatpush.msra.mxu0 0.0
      %2313 = vmatpush.msra.mxu0 0.0
      %2314 = vmatpush.msra.mxu0 0.0
      %2315 = vmatpush.msra.mxu0 0.0
      %2316 = vmatpush.msra.mxu0 0.0
      %2317 = vmatpush.msra.mxu0 0.0
      %2318 = vmatpush.msra.mxu0 %v2301
      %2319 = vmatmul.f32.gmra.mxu0 %v2229
      %v2320 = vpop.f32.mrf.mxu0
      %v2321 = vadd.f32 %v2157, %v2320
      %2322 = vmatmul.f32.gmra.mxu0 %v2232
      %v2323 = vpop.f32.mrf.mxu0
      %v2324 = vadd.f32 %v2160, %v2323
      %2325 = vmatmul.f32.gmra.mxu0 %v2235
      %v2326 = vpop.f32.mrf.mxu0
      %v2327 = vadd.f32 %v2163, %v2326
      %2328 = vmatmul.f32.gmra.mxu0 %v2238
      %v2329 = vpop.f32.mrf.mxu0
      %v2330 = vadd.f32 %v2166, %v2329
      %2331 = vmatmul.f32.gmra.mxu0 %v2241
      %v2332 = vpop.f32.mrf.mxu0
      %v2333 = vadd.f32 %v2169, %v2332
      %2334 = vmatmul.f32.gmra.mxu0 %v2244
      %v2335 = vpop.f32.mrf.mxu0
      %v2336 = vadd.f32 %v2172, %v2335
      %2337 = vmatmul.f32.gmra.mxu0 %v2247
      %v2338 = vpop.f32.mrf.mxu0
      %v2339 = vadd.f32 %v2175, %v2338
      %2340 = vmatmul.f32.gmra.mxu0 %v2250
      %v2341 = vpop.f32.mrf.mxu0
      %v2342 = vadd.f32 %v2178, %v2341
      %2343 = vmatmul.f32.gmra.mxu0 %v2253
      %v2344 = vpop.f32.mrf.mxu0
      %v2345 = vadd.f32 %v2181, %v2344
      %2346 = vmatmul.f32.gmra.mxu0 %v2256
      %v2347 = vpop.f32.mrf.mxu0
      %v2348 = vadd.f32 %v2184, %v2347
      %2349 = vmatmul.f32.gmra.mxu0 %v2259
      %v2350 = vpop.f32.mrf.mxu0
      %v2351 = vadd.f32 %v2187, %v2350
      %2352 = vmatmul.f32.gmra.mxu0 %v2262
      %v2353 = vpop.f32.mrf.mxu0
      %v2354 = vadd.f32 %v2190, %v2353
      %2355 = vmatmul.f32.gmra.mxu0 %v2265
      %v2356 = vpop.f32.mrf.mxu0
      %v2357 = vadd.f32 %v2193, %v2356
      %2358 = vmatmul.f32.gmra.mxu0 %v2268
      %v2359 = vpop.f32.mrf.mxu0
      %v2360 = vadd.f32 %v2196, %v2359
      %2361 = vmatmul.f32.gmra.mxu0 %v2271
      %v2362 = vpop.f32.mrf.mxu0
      %v2363 = vadd.f32 %v2199, %v2362
      %2364 = vmatmul.f32.gmra.mxu0 %v2274
      %v2365 = vpop.f32.mrf.mxu0
      %v2366 = vadd.f32 %v2202, %v2365
      %2367 = vmatmul.f32.gmra.mxu0 %v2277
      %v2368 = vpop.f32.mrf.mxu0
      %v2369 = vadd.f32 %v2205, %v2368
      %2370 = vmatmul.f32.gmra.mxu0 %v2280
      %v2371 = vpop.f32.mrf.mxu0
      %v2372 = vadd.f32 %v2208, %v2371
      %2373 = vmatmul.f32.gmra.mxu0 %v2283
      %v2374 = vpop.f32.mrf.mxu0
      %v2375 = vadd.f32 %v2211, %v2374
      %2376 = vmatmul.f32.gmra.mxu0 %v2286
      %v2377 = vpop.f32.mrf.mxu0
      %v2378 = vadd.f32 %v2214, %v2377
      %2379 = vmatmul.f32.gmra.mxu0 %v2289
      %v2380 = vpop.f32.mrf.mxu0
      %v2381 = vadd.f32 %v2217, %v2380
      %2382 = vmatmul.f32.gmra.mxu0 %v2292
      %v2383 = vpop.f32.mrf.mxu0
      %v2384 = vadd.f32 %v2220, %v2383
      %2385 = vmatmul.f32.gmra.mxu0 %v2295
      %v2386 = vpop.f32.mrf.mxu0
      %v2387 = vadd.f32 %v2223, %v2386
      %2388 = vmatmul.f32.gmra.mxu0 %v2298
      %v2389 = vpop.f32.mrf.mxu0
      %v2390 = vadd.f32 %v2226, %v2389
      %2391 = vdwg.mxu0
      %v2392 = vld [vmem:[#allocation2 + $0x2] sm:$0xff]
      %v2393 = vld [vmem:[#allocation2 + $0xa] sm:$0xff]
      %v2394 = vld [vmem:[#allocation2 + $0x12] sm:$0xff]
      %v2395 = vld [vmem:[#allocation2 + $0x1a] sm:$0xff]
      %v2396 = vld [vmem:[#allocation2 + $0x22] sm:$0xff]
      %v2397 = vld [vmem:[#allocation2 + $0x2a] sm:$0xff]
      %v2398 = vld [vmem:[#allocation2 + $0x32] sm:$0xff]
      %v2399 = vld [vmem:[#allocation2 + $0x3a] sm:$0xff]
      %v2400 = vld [vmem:[#allocation2 + $0x42] sm:$0xff]
      %v2401 = vld [vmem:[#allocation2 + $0x4a] sm:$0xff]
      %v2402 = vld [vmem:[#allocation2 + $0x52] sm:$0xff]
      %v2403 = vld [vmem:[#allocation2 + $0x5a] sm:$0xff]
      %v2404 = vld [vmem:[#allocation2 + $0x62] sm:$0xff]
      %v2405 = vld [vmem:[#allocation2 + $0x6a] sm:$0xff]
      %v2406 = vld [vmem:[#allocation2 + $0x72] sm:$0xff]
      %v2407 = vld [vmem:[#allocation2 + $0x7a] sm:$0xff]
      %v2408 = vld [vmem:[#allocation2 + $0x82] sm:$0xff]
      %v2409 = vld [vmem:[#allocation2 + $0x8a] sm:$0xff]
      %v2410 = vld [vmem:[#allocation2 + $0x92] sm:$0xff]
      %v2411 = vld [vmem:[#allocation2 + $0x9a] sm:$0xff]
      %v2412 = vld [vmem:[#allocation2 + $0xa2] sm:$0xff]
      %v2413 = vld [vmem:[#allocation2 + $0xaa] sm:$0xff]
      %v2414 = vld [vmem:[#allocation2 + $0xb2] sm:$0xff]
      %v2415 = vld [vmem:[#allocation2 + $0xba] sm:$0xff]
      %s2416 = scalar_lea.vmem %s6, 8
      %v2417 = vld [vmem:[%s2416] sm:$0xf]
      %v2419 = vsel %vm1844, %v2392, 0
      %v2422 = vsel %vm1844, %v2393, 0
      %v2425 = vsel %vm1844, %v2394, 0
      %v2428 = vsel %vm1844, %v2395, 0
      %v2431 = vsel %vm1844, %v2396, 0
      %v2434 = vsel %vm1844, %v2397, 0
      %v2437 = vsel %vm1844, %v2398, 0
      %v2440 = vsel %vm1844, %v2399, 0
      %v2443 = vsel %vm1844, %v2400, 0
      %v2446 = vsel %vm1844, %v2401, 0
      %v2449 = vsel %vm1844, %v2402, 0
      %v2452 = vsel %vm1844, %v2403, 0
      %v2455 = vsel %vm1844, %v2404, 0
      %v2458 = vsel %vm1844, %v2405, 0
      %v2461 = vsel %vm1844, %v2406, 0
      %v2464 = vsel %vm1844, %v2407, 0
      %v2467 = vsel %vm1844, %v2408, 0
      %v2470 = vsel %vm1844, %v2409, 0
      %v2473 = vsel %vm1844, %v2410, 0
      %v2476 = vsel %vm1844, %v2411, 0
      %v2479 = vsel %vm1844, %v2412, 0
      %v2482 = vsel %vm1844, %v2413, 0
      %v2485 = vsel %vm1844, %v2414, 0
      %v2488 = vsel %vm1844, %v2415, 0
      %v2491 = vsel %vm2135, %v2417, 0
      %2493 = vmatpush.msra.mxu0 0.0
      %2494 = vmatpush.msra.mxu0 0.0
      %2495 = vmatpush.msra.mxu0 0.0
      %2496 = vmatpush.msra.mxu0 0.0
      %2497 = vmatpush.msra.mxu0 0.0
      %2498 = vmatpush.msra.mxu0 0.0
      %2499 = vmatpush.msra.mxu0 0.0
      %2500 = vmatpush.msra.mxu0 0.0
      %2501 = vmatpush.msra.mxu0 0.0
      %2502 = vmatpush.msra.mxu0 0.0
      %2503 = vmatpush.msra.mxu0 0.0
      %2504 = vmatpush.msra.mxu0 0.0
      %2505 = vmatpush.msra.mxu0 0.0
      %2506 = vmatpush.msra.mxu0 0.0
      %2507 = vmatpush.msra.mxu0 0.0
      %2508 = vmatpush.msra.mxu0 %v2491
      %2509 = vmatmul.f32.gmra.mxu0 %v2419
      %v2510 = vpop.f32.mrf.mxu0
      %v2511 = vadd.f32 0.0, %v2510
      %2512 = vmatmul.f32.gmra.mxu0 %v2422
      %v2513 = vpop.f32.mrf.mxu0
      %v2514 = vadd.f32 0.0, %v2513
      %2515 = vmatmul.f32.gmra.mxu0 %v2425
      %v2516 = vpop.f32.mrf.mxu0
      %v2517 = vadd.f32 0.0, %v2516
      %2518 = vmatmul.f32.gmra.mxu0 %v2428
      %v2519 = vpop.f32.mrf.mxu0
      %v2520 = vadd.f32 0.0, %v2519
      %2521 = vmatmul.f32.gmra.mxu0 %v2431
      %v2522 = vpop.f32.mrf.mxu0
      %v2523 = vadd.f32 0.0, %v2522
      %2524 = vmatmul.f32.gmra.mxu0 %v2434
      %v2525 = vpop.f32.mrf.mxu0
      %v2526 = vadd.f32 0.0, %v2525
      %2527 = vmatmul.f32.gmra.mxu0 %v2437
      %v2528 = vpop.f32.mrf.mxu0
      %v2529 = vadd.f32 0.0, %v2528
      %2530 = vmatmul.f32.gmra.mxu0 %v2440
      %v2531 = vpop.f32.mrf.mxu0
      %v2532 = vadd.f32 0.0, %v2531
      %2533 = vmatmul.f32.gmra.mxu0 %v2443
      %v2534 = vpop.f32.mrf.mxu0
      %v2535 = vadd.f32 0.0, %v2534
      %2536 = vmatmul.f32.gmra.mxu0 %v2446
      %v2537 = vpop.f32.mrf.mxu0
      %v2538 = vadd.f32 0.0, %v2537
      %2539 = vmatmul.f32.gmra.mxu0 %v2449
      %v2540 = vpop.f32.mrf.mxu0
      %v2541 = vadd.f32 0.0, %v2540
      %2542 = vmatmul.f32.gmra.mxu0 %v2452
      %v2543 = vpop.f32.mrf.mxu0
      %v2544 = vadd.f32 0.0, %v2543
      %2545 = vmatmul.f32.gmra.mxu0 %v2455
      %v2546 = vpop.f32.mrf.mxu0
      %v2547 = vadd.f32 0.0, %v2546
      %2548 = vmatmul.f32.gmra.mxu0 %v2458
      %v2549 = vpop.f32.mrf.mxu0
      %v2550 = vadd.f32 0.0, %v2549
      %2551 = vmatmul.f32.gmra.mxu0 %v2461
      %v2552 = vpop.f32.mrf.mxu0
      %v2553 = vadd.f32 0.0, %v2552
      %2554 = vmatmul.f32.gmra.mxu0 %v2464
      %v2555 = vpop.f32.mrf.mxu0
      %v2556 = vadd.f32 0.0, %v2555
      %2557 = vmatmul.f32.gmra.mxu0 %v2467
      %v2558 = vpop.f32.mrf.mxu0
      %v2559 = vadd.f32 0.0, %v2558
      %2560 = vmatmul.f32.gmra.mxu0 %v2470
      %v2561 = vpop.f32.mrf.mxu0
      %v2562 = vadd.f32 0.0, %v2561
      %2563 = vmatmul.f32.gmra.mxu0 %v2473
      %v2564 = vpop.f32.mrf.mxu0
      %v2565 = vadd.f32 0.0, %v2564
      %2566 = vmatmul.f32.gmra.mxu0 %v2476
      %v2567 = vpop.f32.mrf.mxu0
      %v2568 = vadd.f32 0.0, %v2567
      %2569 = vmatmul.f32.gmra.mxu0 %v2479
      %v2570 = vpop.f32.mrf.mxu0
      %v2571 = vadd.f32 0.0, %v2570
      %2572 = vmatmul.f32.gmra.mxu0 %v2482
      %v2573 = vpop.f32.mrf.mxu0
      %v2574 = vadd.f32 0.0, %v2573
      %2575 = vmatmul.f32.gmra.mxu0 %v2485
      %v2576 = vpop.f32.mrf.mxu0
      %v2577 = vadd.f32 0.0, %v2576
      %2578 = vmatmul.f32.gmra.mxu0 %v2488
      %v2579 = vpop.f32.mrf.mxu0
      %v2580 = vadd.f32 0.0, %v2579
      %2581 = vdwg.mxu0
      %v2582 = vadd.f32 %v2321, %v2511
      %v2583 = vadd.f32 %v2324, %v2514
      %v2584 = vadd.f32 %v2327, %v2517
      %v2585 = vadd.f32 %v2330, %v2520
      %v2586 = vadd.f32 %v2333, %v2523
      %v2587 = vadd.f32 %v2336, %v2526
      %v2588 = vadd.f32 %v2339, %v2529
      %v2589 = vadd.f32 %v2342, %v2532
      %v2590 = vadd.f32 %v2345, %v2535
      %v2591 = vadd.f32 %v2348, %v2538
      %v2592 = vadd.f32 %v2351, %v2541
      %v2593 = vadd.f32 %v2354, %v2544
      %v2594 = vadd.f32 %v2357, %v2547
      %v2595 = vadd.f32 %v2360, %v2550
      %v2596 = vadd.f32 %v2363, %v2553
      %v2597 = vadd.f32 %v2366, %v2556
      %v2598 = vadd.f32 %v2369, %v2559
      %v2599 = vadd.f32 %v2372, %v2562
      %v2600 = vadd.f32 %v2375, %v2565
      %v2601 = vadd.f32 %v2378, %v2568
      %v2602 = vadd.f32 %v2381, %v2571
      %v2603 = vadd.f32 %v2384, %v2574
      %v2604 = vadd.f32 %v2387, %v2577
      %v2605 = vadd.f32 %v2390, %v2580
      %v2606 = vld [vmem:[#allocation2 + $0x18] sm:$0xff]
      %v2607 = vld [vmem:[#allocation2 + $0x20] sm:$0xff]
      %v2608 = vld [vmem:[#allocation2 + $0x28] sm:$0xff]
      %v2609 = vld [vmem:[#allocation2 + $0x30] sm:$0xff]
      %v2610 = vld [vmem:[#allocation2 + $0x38] sm:$0xff]
      %v2611 = vld [vmem:[#allocation2 + $0x40] sm:$0xff]
      %v2612 = vld [vmem:[#allocation2 + $0x48] sm:$0xff]
      %v2613 = vld [vmem:[#allocation2 + $0x50] sm:$0xff]
      %v2614 = vld [vmem:[#allocation2 + $0x58] sm:$0xff]
      %v2615 = vld [vmem:[#allocation2 + $0x60] sm:$0xff]
      %v2616 = vld [vmem:[#allocation2 + $0x68] sm:$0xff]
      %v2617 = vld [vmem:[#allocation2 + $0x70] sm:$0xff]
      %v2618 = vld [vmem:[#allocation2 + $0x78] sm:$0xff]
      %v2619 = vld [vmem:[#allocation2 + $0x80] sm:$0xff]
      %v2620 = vld [vmem:[#allocation2 + $0x88] sm:$0xff]
      %v2621 = vld [vmem:[#allocation2 + $0x90] sm:$0xff]
      %v2622 = vld [vmem:[#allocation2 + $0x98] sm:$0xff]
      %v2623 = vld [vmem:[#allocation2 + $0xa0] sm:$0xff]
      %v2624 = vld [vmem:[#allocation2 + $0xa8] sm:$0xff]
      %v2625 = vld [vmem:[#allocation2 + $0xb0] sm:$0xff]
      %v2626 = vld [vmem:[#allocation2 + $0xb8] sm:$0xff]
      %v2627 = vld [vmem:[#allocation2 + $0xc0] sm:$0xff]
      %v2628 = vld [vmem:[#allocation2 + $0xc8] sm:$0xff]
      %v2629 = vld [vmem:[#allocation2 + $0xd0] sm:$0xff]
      %s2630 = scalar_lea.vmem %s6, 12
      %v2631 = vld [vmem:[%s2630] sm:$0xf]
      %v2633 = vsel %vm1844, %v2606, 0
      %v2636 = vsel %vm1844, %v2607, 0
      %v2639 = vsel %vm1844, %v2608, 0
      %v2642 = vsel %vm1844, %v2609, 0
      %v2645 = vsel %vm1844, %v2610, 0
      %v2648 = vsel %vm1844, %v2611, 0
      %v2651 = vsel %vm1844, %v2612, 0
      %v2654 = vsel %vm1844, %v2613, 0
      %v2657 = vsel %vm1844, %v2614, 0
      %v2660 = vsel %vm1844, %v2615, 0
      %v2663 = vsel %vm1844, %v2616, 0
      %v2666 = vsel %vm1844, %v2617, 0
      %v2669 = vsel %vm1844, %v2618, 0
      %v2672 = vsel %vm1844, %v2619, 0
      %v2675 = vsel %vm1844, %v2620, 0
      %v2678 = vsel %vm1844, %v2621, 0
      %v2681 = vsel %vm1844, %v2622, 0
      %v2684 = vsel %vm1844, %v2623, 0
      %v2687 = vsel %vm1844, %v2624, 0
      %v2690 = vsel %vm1844, %v2625, 0
      %v2693 = vsel %vm1844, %v2626, 0
      %v2696 = vsel %vm1844, %v2627, 0
      %v2699 = vsel %vm1844, %v2628, 0
      %v2702 = vsel %vm1844, %v2629, 0
      %v2705 = vsel %vm2135, %v2631, 0
      %2707 = vmatpush.msra.mxu0 0.0
      %2708 = vmatpush.msra.mxu0 0.0
      %2709 = vmatpush.msra.mxu0 0.0
      %2710 = vmatpush.msra.mxu0 0.0
      %2711 = vmatpush.msra.mxu0 0.0
      %2712 = vmatpush.msra.mxu0 0.0
      %2713 = vmatpush.msra.mxu0 0.0
      %2714 = vmatpush.msra.mxu0 0.0
      %2715 = vmatpush.msra.mxu0 0.0
      %2716 = vmatpush.msra.mxu0 0.0
      %2717 = vmatpush.msra.mxu0 0.0
      %2718 = vmatpush.msra.mxu0 0.0
      %2719 = vmatpush.msra.mxu0 0.0
      %2720 = vmatpush.msra.mxu0 0.0
      %2721 = vmatpush.msra.mxu0 0.0
      %2722 = vmatpush.msra.mxu0 %v2705
      %2723 = vmatmul.f32.gmra.mxu0 %v2633
      %v2724 = vpop.f32.mrf.mxu0
      %v2725 = vadd.f32 0.0, %v2724
      %2726 = vmatmul.f32.gmra.mxu0 %v2636
      %v2727 = vpop.f32.mrf.mxu0
      %v2728 = vadd.f32 0.0, %v2727
      %2729 = vmatmul.f32.gmra.mxu0 %v2639
      %v2730 = vpop.f32.mrf.mxu0
      %v2731 = vadd.f32 0.0, %v2730
      %2732 = vmatmul.f32.gmra.mxu0 %v2642
      %v2733 = vpop.f32.mrf.mxu0
      %v2734 = vadd.f32 0.0, %v2733
      %2735 = vmatmul.f32.gmra.mxu0 %v2645
      %v2736 = vpop.f32.mrf.mxu0
      %v2737 = vadd.f32 0.0, %v2736
      %2738 = vmatmul.f32.gmra.mxu0 %v2648
      %v2739 = vpop.f32.mrf.mxu0
      %v2740 = vadd.f32 0.0, %v2739
      %2741 = vmatmul.f32.gmra.mxu0 %v2651
      %v2742 = vpop.f32.mrf.mxu0
      %v2743 = vadd.f32 0.0, %v2742
      %2744 = vmatmul.f32.gmra.mxu0 %v2654
      %v2745 = vpop.f32.mrf.mxu0
      %v2746 = vadd.f32 0.0, %v2745
      %2747 = vmatmul.f32.gmra.mxu0 %v2657
      %v2748 = vpop.f32.mrf.mxu0
      %v2749 = vadd.f32 0.0, %v2748
      %2750 = vmatmul.f32.gmra.mxu0 %v2660
      %v2751 = vpop.f32.mrf.mxu0
      %v2752 = vadd.f32 0.0, %v2751
      %2753 = vmatmul.f32.gmra.mxu0 %v2663
      %v2754 = vpop.f32.mrf.mxu0
      %v2755 = vadd.f32 0.0, %v2754
      %2756 = vmatmul.f32.gmra.mxu0 %v2666
      %v2757 = vpop.f32.mrf.mxu0
      %v2758 = vadd.f32 0.0, %v2757
      %2759 = vmatmul.f32.gmra.mxu0 %v2669
      %v2760 = vpop.f32.mrf.mxu0
      %v2761 = vadd.f32 0.0, %v2760
      %2762 = vmatmul.f32.gmra.mxu0 %v2672
      %v2763 = vpop.f32.mrf.mxu0
      %v2764 = vadd.f32 0.0, %v2763
      %2765 = vmatmul.f32.gmra.mxu0 %v2675
      %v2766 = vpop.f32.mrf.mxu0
      %v2767 = vadd.f32 0.0, %v2766
      %2768 = vmatmul.f32.gmra.mxu0 %v2678
      %v2769 = vpop.f32.mrf.mxu0
      %v2770 = vadd.f32 0.0, %v2769
      %2771 = vmatmul.f32.gmra.mxu0 %v2681
      %v2772 = vpop.f32.mrf.mxu0
      %v2773 = vadd.f32 0.0, %v2772
      %2774 = vmatmul.f32.gmra.mxu0 %v2684
      %v2775 = vpop.f32.mrf.mxu0
      %v2776 = vadd.f32 0.0, %v2775
      %2777 = vmatmul.f32.gmra.mxu0 %v2687
      %v2778 = vpop.f32.mrf.mxu0
      %v2779 = vadd.f32 0.0, %v2778
      %2780 = vmatmul.f32.gmra.mxu0 %v2690
      %v2781 = vpop.f32.mrf.mxu0
      %v2782 = vadd.f32 0.0, %v2781
      %2783 = vmatmul.f32.gmra.mxu0 %v2693
      %v2784 = vpop.f32.mrf.mxu0
      %v2785 = vadd.f32 0.0, %v2784
      %2786 = vmatmul.f32.gmra.mxu0 %v2696
      %v2787 = vpop.f32.mrf.mxu0
      %v2788 = vadd.f32 0.0, %v2787
      %2789 = vmatmul.f32.gmra.mxu0 %v2699
      %v2790 = vpop.f32.mrf.mxu0
      %v2791 = vadd.f32 0.0, %v2790
      %2792 = vmatmul.f32.gmra.mxu0 %v2702
      %v2793 = vpop.f32.mrf.mxu0
      %v2794 = vadd.f32 0.0, %v2793
      %2795 = vdwg.mxu0
      %v2796 = vadd.f32 %v2582, %v2725
      %v2797 = vadd.f32 %v2583, %v2728
      %v2798 = vadd.f32 %v2584, %v2731
      %v2799 = vadd.f32 %v2585, %v2734
      %v2800 = vadd.f32 %v2586, %v2737
      %v2801 = vadd.f32 %v2587, %v2740
      %v2802 = vadd.f32 %v2588, %v2743
      %v2803 = vadd.f32 %v2589, %v2746
      %v2804 = vadd.f32 %v2590, %v2749
      %v2805 = vadd.f32 %v2591, %v2752
      %v2806 = vadd.f32 %v2592, %v2755
      %v2807 = vadd.f32 %v2593, %v2758
      %v2808 = vadd.f32 %v2594, %v2761
      %v2809 = vadd.f32 %v2595, %v2764
      %v2810 = vadd.f32 %v2596, %v2767
      %v2811 = vadd.f32 %v2597, %v2770
      %v2812 = vadd.f32 %v2598, %v2773
      %v2813 = vadd.f32 %v2599, %v2776
      %v2814 = vadd.f32 %v2600, %v2779
      %v2815 = vadd.f32 %v2601, %v2782
      %v2816 = vadd.f32 %v2602, %v2785
      %v2817 = vadd.f32 %v2603, %v2788
      %v2818 = vadd.f32 %v2604, %v2791
      %v2819 = vadd.f32 %v2605, %v2794
      %v2820 = vld [vmem:[#allocation2 + $0x19] sm:$0xff]
      %v2821 = vld [vmem:[#allocation2 + $0x21] sm:$0xff]
      %v2822 = vld [vmem:[#allocation2 + $0x29] sm:$0xff]
      %v2823 = vld [vmem:[#allocation2 + $0x31] sm:$0xff]
      %v2824 = vld [vmem:[#allocation2 + $0x39] sm:$0xff]
      %v2825 = vld [vmem:[#allocation2 + $0x41] sm:$0xff]
      %v2826 = vld [vmem:[#allocation2 + $0x49] sm:$0xff]
      %v2827 = vld [vmem:[#allocation2 + $0x51] sm:$0xff]
      %v2828 = vld [vmem:[#allocation2 + $0x59] sm:$0xff]
      %v2829 = vld [vmem:[#allocation2 + $0x61] sm:$0xff]
      %v2830 = vld [vmem:[#allocation2 + $0x69] sm:$0xff]
      %v2831 = vld [vmem:[#allocation2 + $0x71] sm:$0xff]
      %v2832 = vld [vmem:[#allocation2 + $0x79] sm:$0xff]
      %v2833 = vld [vmem:[#allocation2 + $0x81] sm:$0xff]
      %v2834 = vld [vmem:[#allocation2 + $0x89] sm:$0xff]
      %v2835 = vld [vmem:[#allocation2 + $0x91] sm:$0xff]
      %v2836 = vld [vmem:[#allocation2 + $0x99] sm:$0xff]
      %v2837 = vld [vmem:[#allocation2 + $0xa1] sm:$0xff]
      %v2838 = vld [vmem:[#allocation2 + $0xa9] sm:$0xff]
      %v2839 = vld [vmem:[#allocation2 + $0xb1] sm:$0xff]
      %v2840 = vld [vmem:[#allocation2 + $0xb9] sm:$0xff]
      %v2841 = vld [vmem:[#allocation2 + $0xc1] sm:$0xff]
      %v2842 = vld [vmem:[#allocation2 + $0xc9] sm:$0xff]
      %v2843 = vld [vmem:[#allocation2 + $0xd1] sm:$0xff]
      %s2844 = scalar_lea.vmem %s6, 16
      %v2845 = vld [vmem:[%s2844] sm:$0xf]
      %v2847 = vsel %vm1844, %v2820, 0
      %v2850 = vsel %vm1844, %v2821, 0
      %v2853 = vsel %vm1844, %v2822, 0
      %v2856 = vsel %vm1844, %v2823, 0
      %v2859 = vsel %vm1844, %v2824, 0
      %v2862 = vsel %vm1844, %v2825, 0
      %v2865 = vsel %vm1844, %v2826, 0
      %v2868 = vsel %vm1844, %v2827, 0
      %v2871 = vsel %vm1844, %v2828, 0
      %v2874 = vsel %vm1844, %v2829, 0
      %v2877 = vsel %vm1844, %v2830, 0
      %v2880 = vsel %vm1844, %v2831, 0
      %v2883 = vsel %vm1844, %v2832, 0
      %v2886 = vsel %vm1844, %v2833, 0
      %v2889 = vsel %vm1844, %v2834, 0
      %v2892 = vsel %vm1844, %v2835, 0
      %v2895 = vsel %vm1844, %v2836, 0
      %v2898 = vsel %vm1844, %v2837, 0
      %v2901 = vsel %vm1844, %v2838, 0
      %v2904 = vsel %vm1844, %v2839, 0
      %v2907 = vsel %vm1844, %v2840, 0
      %v2910 = vsel %vm1844, %v2841, 0
      %v2913 = vsel %vm1844, %v2842, 0
      %v2916 = vsel %vm1844, %v2843, 0
      %v2919 = vsel %vm2135, %v2845, 0
      %2921 = vmatpush.msra.mxu0 0.0
      %2922 = vmatpush.msra.mxu0 0.0
      %2923 = vmatpush.msra.mxu0 0.0
      %2924 = vmatpush.msra.mxu0 0.0
      %2925 = vmatpush.msra.mxu0 0.0
      %2926 = vmatpush.msra.mxu0 0.0
      %2927 = vmatpush.msra.mxu0 0.0
      %2928 = vmatpush.msra.mxu0 0.0
      %2929 = vmatpush.msra.mxu0 0.0
      %2930 = vmatpush.msra.mxu0 0.0
      %2931 = vmatpush.msra.mxu0 0.0
      %2932 = vmatpush.msra.mxu0 0.0
      %2933 = vmatpush.msra.mxu0 0.0
      %2934 = vmatpush.msra.mxu0 0.0
      %2935 = vmatpush.msra.mxu0 0.0
      %2936 = vmatpush.msra.mxu0 %v2919
      %2937 = vmatmul.f32.gmra.mxu0 %v2847
      %v2938 = vpop.f32.mrf.mxu0
      %v2939 = vadd.f32 0.0, %v2938
      %2940 = vmatmul.f32.gmra.mxu0 %v2850
      %v2941 = vpop.f32.mrf.mxu0
      %v2942 = vadd.f32 0.0, %v2941
      %2943 = vmatmul.f32.gmra.mxu0 %v2853
      %v2944 = vpop.f32.mrf.mxu0
      %v2945 = vadd.f32 0.0, %v2944
      %2946 = vmatmul.f32.gmra.mxu0 %v2856
      %v2947 = vpop.f32.mrf.mxu0
      %v2948 = vadd.f32 0.0, %v2947
      %2949 = vmatmul.f32.gmra.mxu0 %v2859
      %v2950 = vpop.f32.mrf.mxu0
      %v2951 = vadd.f32 0.0, %v2950
      %2952 = vmatmul.f32.gmra.mxu0 %v2862
      %v2953 = vpop.f32.mrf.mxu0
      %v2954 = vadd.f32 0.0, %v2953
      %2955 = vmatmul.f32.gmra.mxu0 %v2865
      %v2956 = vpop.f32.mrf.mxu0
      %v2957 = vadd.f32 0.0, %v2956
      %2958 = vmatmul.f32.gmra.mxu0 %v2868
      %v2959 = vpop.f32.mrf.mxu0
      %v2960 = vadd.f32 0.0, %v2959
      %2961 = vmatmul.f32.gmra.mxu0 %v2871
      %v2962 = vpop.f32.mrf.mxu0
      %v2963 = vadd.f32 0.0, %v2962
      %2964 = vmatmul.f32.gmra.mxu0 %v2874
      %v2965 = vpop.f32.mrf.mxu0
      %v2966 = vadd.f32 0.0, %v2965
      %2967 = vmatmul.f32.gmra.mxu0 %v2877
      %v2968 = vpop.f32.mrf.mxu0
      %v2969 = vadd.f32 0.0, %v2968
      %2970 = vmatmul.f32.gmra.mxu0 %v2880
      %v2971 = vpop.f32.mrf.mxu0
      %v2972 = vadd.f32 0.0, %v2971
      %2973 = vmatmul.f32.gmra.mxu0 %v2883
      %v2974 = vpop.f32.mrf.mxu0
      %v2975 = vadd.f32 0.0, %v2974
      %2976 = vmatmul.f32.gmra.mxu0 %v2886
      %v2977 = vpop.f32.mrf.mxu0
      %v2978 = vadd.f32 0.0, %v2977
      %2979 = vmatmul.f32.gmra.mxu0 %v2889
      %v2980 = vpop.f32.mrf.mxu0
      %v2981 = vadd.f32 0.0, %v2980
      %2982 = vmatmul.f32.gmra.mxu0 %v2892
      %v2983 = vpop.f32.mrf.mxu0
      %v2984 = vadd.f32 0.0, %v2983
      %2985 = vmatmul.f32.gmra.mxu0 %v2895
      %v2986 = vpop.f32.mrf.mxu0
      %v2987 = vadd.f32 0.0, %v2986
      %2988 = vmatmul.f32.gmra.mxu0 %v2898
      %v2989 = vpop.f32.mrf.mxu0
      %v2990 = vadd.f32 0.0, %v2989
      %2991 = vmatmul.f32.gmra.mxu0 %v2901
      %v2992 = vpop.f32.mrf.mxu0
      %v2993 = vadd.f32 0.0, %v2992
      %2994 = vmatmul.f32.gmra.mxu0 %v2904
      %v2995 = vpop.f32.mrf.mxu0
      %v2996 = vadd.f32 0.0, %v2995
      %2997 = vmatmul.f32.gmra.mxu0 %v2907
      %v2998 = vpop.f32.mrf.mxu0
      %v2999 = vadd.f32 0.0, %v2998
      %3000 = vmatmul.f32.gmra.mxu0 %v2910
      %v3001 = vpop.f32.mrf.mxu0
      %v3002 = vadd.f32 0.0, %v3001
      %3003 = vmatmul.f32.gmra.mxu0 %v2913
      %v3004 = vpop.f32.mrf.mxu0
      %v3005 = vadd.f32 0.0, %v3004
      %3006 = vmatmul.f32.gmra.mxu0 %v2916
      %v3007 = vpop.f32.mrf.mxu0
      %v3008 = vadd.f32 0.0, %v3007
      %3009 = vdwg.mxu0
      %v3010 = vadd.f32 %v2796, %v2939
      %v3011 = vadd.f32 %v2797, %v2942
      %v3012 = vadd.f32 %v2798, %v2945
      %v3013 = vadd.f32 %v2799, %v2948
      %v3014 = vadd.f32 %v2800, %v2951
      %v3015 = vadd.f32 %v2801, %v2954
      %v3016 = vadd.f32 %v2802, %v2957
      %v3017 = vadd.f32 %v2803, %v2960
      %v3018 = vadd.f32 %v2804, %v2963
      %v3019 = vadd.f32 %v2805, %v2966
      %v3020 = vadd.f32 %v2806, %v2969
      %v3021 = vadd.f32 %v2807, %v2972
      %v3022 = vadd.f32 %v2808, %v2975
      %v3023 = vadd.f32 %v2809, %v2978
      %v3024 = vadd.f32 %v2810, %v2981
      %v3025 = vadd.f32 %v2811, %v2984
      %v3026 = vadd.f32 %v2812, %v2987
      %v3027 = vadd.f32 %v2813, %v2990
      %v3028 = vadd.f32 %v2814, %v2993
      %v3029 = vadd.f32 %v2815, %v2996
      %v3030 = vadd.f32 %v2816, %v2999
      %v3031 = vadd.f32 %v2817, %v3002
      %v3032 = vadd.f32 %v2818, %v3005
      %v3033 = vadd.f32 %v2819, %v3008
      %v3034 = vld [vmem:[#allocation2 + $0x1a] sm:$0xff]
      %v3035 = vld [vmem:[#allocation2 + $0x22] sm:$0xff]
      %v3036 = vld [vmem:[#allocation2 + $0x2a] sm:$0xff]
      %v3037 = vld [vmem:[#allocation2 + $0x32] sm:$0xff]
      %v3038 = vld [vmem:[#allocation2 + $0x3a] sm:$0xff]
      %v3039 = vld [vmem:[#allocation2 + $0x42] sm:$0xff]
      %v3040 = vld [vmem:[#allocation2 + $0x4a] sm:$0xff]
      %v3041 = vld [vmem:[#allocation2 + $0x52] sm:$0xff]
      %v3042 = vld [vmem:[#allocation2 + $0x5a] sm:$0xff]
      %v3043 = vld [vmem:[#allocation2 + $0x62] sm:$0xff]
      %v3044 = vld [vmem:[#allocation2 + $0x6a] sm:$0xff]
      %v3045 = vld [vmem:[#allocation2 + $0x72] sm:$0xff]
      %v3046 = vld [vmem:[#allocation2 + $0x7a] sm:$0xff]
      %v3047 = vld [vmem:[#allocation2 + $0x82] sm:$0xff]
      %v3048 = vld [vmem:[#allocation2 + $0x8a] sm:$0xff]
      %v3049 = vld [vmem:[#allocation2 + $0x92] sm:$0xff]
      %v3050 = vld [vmem:[#allocation2 + $0x9a] sm:$0xff]
      %v3051 = vld [vmem:[#allocation2 + $0xa2] sm:$0xff]
      %v3052 = vld [vmem:[#allocation2 + $0xaa] sm:$0xff]
      %v3053 = vld [vmem:[#allocation2 + $0xb2] sm:$0xff]
      %v3054 = vld [vmem:[#allocation2 + $0xba] sm:$0xff]
      %v3055 = vld [vmem:[#allocation2 + $0xc2] sm:$0xff]
      %v3056 = vld [vmem:[#allocation2 + $0xca] sm:$0xff]
      %v3057 = vld [vmem:[#allocation2 + $0xd2] sm:$0xff]
      %s3058 = scalar_lea.vmem %s6, 20
      %v3059 = vld [vmem:[%s3058] sm:$0xf]
      %v3061 = vsel %vm1844, %v3034, 0
      %v3064 = vsel %vm1844, %v3035, 0
      %v3067 = vsel %vm1844, %v3036, 0
      %v3070 = vsel %vm1844, %v3037, 0
      %v3073 = vsel %vm1844, %v3038, 0
      %v3076 = vsel %vm1844, %v3039, 0
      %v3079 = vsel %vm1844, %v3040, 0
      %v3082 = vsel %vm1844, %v3041, 0
      %v3085 = vsel %vm1844, %v3042, 0
      %v3088 = vsel %vm1844, %v3043, 0
      %v3091 = vsel %vm1844, %v3044, 0
      %v3094 = vsel %vm1844, %v3045, 0
      %v3097 = vsel %vm1844, %v3046, 0
      %v3100 = vsel %vm1844, %v3047, 0
      %v3103 = vsel %vm1844, %v3048, 0
      %v3106 = vsel %vm1844, %v3049, 0
      %v3109 = vsel %vm1844, %v3050, 0
      %v3112 = vsel %vm1844, %v3051, 0
      %v3115 = vsel %vm1844, %v3052, 0
      %v3118 = vsel %vm1844, %v3053, 0
      %v3121 = vsel %vm1844, %v3054, 0
      %v3124 = vsel %vm1844, %v3055, 0
      %v3127 = vsel %vm1844, %v3056, 0
      %v3130 = vsel %vm1844, %v3057, 0
      %v3133 = vsel %vm2135, %v3059, 0
      %3135 = vmatpush.msra.mxu0 0.0
      %3136 = vmatpush.msra.mxu0 0.0
      %3137 = vmatpush.msra.mxu0 0.0
      %3138 = vmatpush.msra.mxu0 0.0
      %3139 = vmatpush.msra.mxu0 0.0
      %3140 = vmatpush.msra.mxu0 0.0
      %3141 = vmatpush.msra.mxu0 0.0
      %3142 = vmatpush.msra.mxu0 0.0
      %3143 = vmatpush.msra.mxu0 0.0
      %3144 = vmatpush.msra.mxu0 0.0
      %3145 = vmatpush.msra.mxu0 0.0
      %3146 = vmatpush.msra.mxu0 0.0
      %3147 = vmatpush.msra.mxu0 0.0
      %3148 = vmatpush.msra.mxu0 0.0
      %3149 = vmatpush.msra.mxu0 0.0
      %3150 = vmatpush.msra.mxu0 %v3133
      %3151 = vmatmul.f32.gmra.mxu0 %v3061
      %v3152 = vpop.f32.mrf.mxu0
      %v3153 = vadd.f32 0.0, %v3152
      %3154 = vmatmul.f32.gmra.mxu0 %v3064
      %v3155 = vpop.f32.mrf.mxu0
      %v3156 = vadd.f32 0.0, %v3155
      %3157 = vmatmul.f32.gmra.mxu0 %v3067
      %v3158 = vpop.f32.mrf.mxu0
      %v3159 = vadd.f32 0.0, %v3158
      %3160 = vmatmul.f32.gmra.mxu0 %v3070
      %v3161 = vpop.f32.mrf.mxu0
      %v3162 = vadd.f32 0.0, %v3161
      %3163 = vmatmul.f32.gmra.mxu0 %v3073
      %v3164 = vpop.f32.mrf.mxu0
      %v3165 = vadd.f32 0.0, %v3164
      %3166 = vmatmul.f32.gmra.mxu0 %v3076
      %v3167 = vpop.f32.mrf.mxu0
      %v3168 = vadd.f32 0.0, %v3167
      %3169 = vmatmul.f32.gmra.mxu0 %v3079
      %v3170 = vpop.f32.mrf.mxu0
      %v3171 = vadd.f32 0.0, %v3170
      %3172 = vmatmul.f32.gmra.mxu0 %v3082
      %v3173 = vpop.f32.mrf.mxu0
      %v3174 = vadd.f32 0.0, %v3173
      %3175 = vmatmul.f32.gmra.mxu0 %v3085
      %v3176 = vpop.f32.mrf.mxu0
      %v3177 = vadd.f32 0.0, %v3176
      %3178 = vmatmul.f32.gmra.mxu0 %v3088
      %v3179 = vpop.f32.mrf.mxu0
      %v3180 = vadd.f32 0.0, %v3179
      %3181 = vmatmul.f32.gmra.mxu0 %v3091
      %v3182 = vpop.f32.mrf.mxu0
      %v3183 = vadd.f32 0.0, %v3182
      %3184 = vmatmul.f32.gmra.mxu0 %v3094
      %v3185 = vpop.f32.mrf.mxu0
      %v3186 = vadd.f32 0.0, %v3185
      %3187 = vmatmul.f32.gmra.mxu0 %v3097
      %v3188 = vpop.f32.mrf.mxu0
      %v3189 = vadd.f32 0.0, %v3188
      %3190 = vmatmul.f32.gmra.mxu0 %v3100
      %v3191 = vpop.f32.mrf.mxu0
      %v3192 = vadd.f32 0.0, %v3191
      %3193 = vmatmul.f32.gmra.mxu0 %v3103
      %v3194 = vpop.f32.mrf.mxu0
      %v3195 = vadd.f32 0.0, %v3194
      %3196 = vmatmul.f32.gmra.mxu0 %v3106
      %v3197 = vpop.f32.mrf.mxu0
      %v3198 = vadd.f32 0.0, %v3197
      %3199 = vmatmul.f32.gmra.mxu0 %v3109
      %v3200 = vpop.f32.mrf.mxu0
      %v3201 = vadd.f32 0.0, %v3200
      %3202 = vmatmul.f32.gmra.mxu0 %v3112
      %v3203 = vpop.f32.mrf.mxu0
      %v3204 = vadd.f32 0.0, %v3203
      %3205 = vmatmul.f32.gmra.mxu0 %v3115
      %v3206 = vpop.f32.mrf.mxu0
      %v3207 = vadd.f32 0.0, %v3206
      %3208 = vmatmul.f32.gmra.mxu0 %v3118
      %v3209 = vpop.f32.mrf.mxu0
      %v3210 = vadd.f32 0.0, %v3209
      %3211 = vmatmul.f32.gmra.mxu0 %v3121
      %v3212 = vpop.f32.mrf.mxu0
      %v3213 = vadd.f32 0.0, %v3212
      %3214 = vmatmul.f32.gmra.mxu0 %v3124
      %v3215 = vpop.f32.mrf.mxu0
      %v3216 = vadd.f32 0.0, %v3215
      %3217 = vmatmul.f32.gmra.mxu0 %v3127
      %v3218 = vpop.f32.mrf.mxu0
      %v3219 = vadd.f32 0.0, %v3218
      %3220 = vmatmul.f32.gmra.mxu0 %v3130
      %v3221 = vpop.f32.mrf.mxu0
      %v3222 = vadd.f32 0.0, %v3221
      %3223 = vdwg.mxu0
      %v3224 = vadd.f32 %v3010, %v3153
      %v3225 = vadd.f32 %v3011, %v3156
      %v3226 = vadd.f32 %v3012, %v3159
      %v3227 = vadd.f32 %v3013, %v3162
      %v3228 = vadd.f32 %v3014, %v3165
      %v3229 = vadd.f32 %v3015, %v3168
      %v3230 = vadd.f32 %v3016, %v3171
      %v3231 = vadd.f32 %v3017, %v3174
      %v3232 = vadd.f32 %v3018, %v3177
      %v3233 = vadd.f32 %v3019, %v3180
      %v3234 = vadd.f32 %v3020, %v3183
      %v3235 = vadd.f32 %v3021, %v3186
      %v3236 = vadd.f32 %v3022, %v3189
      %v3237 = vadd.f32 %v3023, %v3192
      %v3238 = vadd.f32 %v3024, %v3195
      %v3239 = vadd.f32 %v3025, %v3198
      %v3240 = vadd.f32 %v3026, %v3201
      %v3241 = vadd.f32 %v3027, %v3204
      %v3242 = vadd.f32 %v3028, %v3207
      %v3243 = vadd.f32 %v3029, %v3210
      %v3244 = vadd.f32 %v3030, %v3213
      %v3245 = vadd.f32 %v3031, %v3216
      %v3246 = vadd.f32 %v3032, %v3219
      %v3247 = vadd.f32 %v3033, %v3222
      %v3248 = vld [vmem:[#allocation2 + $0x30] sm:$0xff]
      %v3249 = vld [vmem:[#allocation2 + $0x38] sm:$0xff]
      %v3250 = vld [vmem:[#allocation2 + $0x40] sm:$0xff]
      %v3251 = vld [vmem:[#allocation2 + $0x48] sm:$0xff]
      %v3252 = vld [vmem:[#allocation2 + $0x50] sm:$0xff]
      %v3253 = vld [vmem:[#allocation2 + $0x58] sm:$0xff]
      %v3254 = vld [vmem:[#allocation2 + $0x60] sm:$0xff]
      %v3255 = vld [vmem:[#allocation2 + $0x68] sm:$0xff]
      %v3256 = vld [vmem:[#allocation2 + $0x70] sm:$0xff]
      %v3257 = vld [vmem:[#allocation2 + $0x78] sm:$0xff]
      %v3258 = vld [vmem:[#allocation2 + $0x80] sm:$0xff]
      %v3259 = vld [vmem:[#allocation2 + $0x88] sm:$0xff]
      %v3260 = vld [vmem:[#allocation2 + $0x90] sm:$0xff]
      %v3261 = vld [vmem:[#allocation2 + $0x98] sm:$0xff]
      %v3262 = vld [vmem:[#allocation2 + $0xa0] sm:$0xff]
      %v3263 = vld [vmem:[#allocation2 + $0xa8] sm:$0xff]
      %v3264 = vld [vmem:[#allocation2 + $0xb0] sm:$0xff]
      %v3265 = vld [vmem:[#allocation2 + $0xb8] sm:$0xff]
      %v3266 = vld [vmem:[#allocation2 + $0xc0] sm:$0xff]
      %v3267 = vld [vmem:[#allocation2 + $0xc8] sm:$0xff]
      %v3268 = vld [vmem:[#allocation2 + $0xd0] sm:$0xff]
      %v3269 = vld [vmem:[#allocation2 + $0xd8] sm:$0xff]
      %v3270 = vld [vmem:[#allocation2 + $0xe0] sm:$0xff]
      %v3271 = vld [vmem:[#allocation2 + $0xe8] sm:$0xff]
      %s3272 = scalar_lea.vmem %s6, 24
      %v3273 = vld [vmem:[%s3272] sm:$0xf]
      %v3275 = vsel %vm1844, %v3248, 0
      %v3278 = vsel %vm1844, %v3249, 0
      %v3281 = vsel %vm1844, %v3250, 0
      %v3284 = vsel %vm1844, %v3251, 0
      %v3287 = vsel %vm1844, %v3252, 0
      %v3290 = vsel %vm1844, %v3253, 0
      %v3293 = vsel %vm1844, %v3254, 0
      %v3296 = vsel %vm1844, %v3255, 0
      %v3299 = vsel %vm1844, %v3256, 0
      %v3302 = vsel %vm1844, %v3257, 0
      %v3305 = vsel %vm1844, %v3258, 0
      %v3308 = vsel %vm1844, %v3259, 0
      %v3311 = vsel %vm1844, %v3260, 0
      %v3314 = vsel %vm1844, %v3261, 0
      %v3317 = vsel %vm1844, %v3262, 0
      %v3320 = vsel %vm1844, %v3263, 0
      %v3323 = vsel %vm1844, %v3264, 0
      %v3326 = vsel %vm1844, %v3265, 0
      %v3329 = vsel %vm1844, %v3266, 0
      %v3332 = vsel %vm1844, %v3267, 0
      %v3335 = vsel %vm1844, %v3268, 0
      %v3338 = vsel %vm1844, %v3269, 0
      %v3341 = vsel %vm1844, %v3270, 0
      %v3344 = vsel %vm1844, %v3271, 0
      %v3347 = vsel %vm2135, %v3273, 0
      %3349 = vmatpush.msra.mxu0 0.0
      %3350 = vmatpush.msra.mxu0 0.0
      %3351 = vmatpush.msra.mxu0 0.0
      %3352 = vmatpush.msra.mxu0 0.0
      %3353 = vmatpush.msra.mxu0 0.0
      %3354 = vmatpush.msra.mxu0 0.0
      %3355 = vmatpush.msra.mxu0 0.0
      %3356 = vmatpush.msra.mxu0 0.0
      %3357 = vmatpush.msra.mxu0 0.0
      %3358 = vmatpush.msra.mxu0 0.0
      %3359 = vmatpush.msra.mxu0 0.0
      %3360 = vmatpush.msra.mxu0 0.0
      %3361 = vmatpush.msra.mxu0 0.0
      %3362 = vmatpush.msra.mxu0 0.0
      %3363 = vmatpush.msra.mxu0 0.0
      %3364 = vmatpush.msra.mxu0 %v3347
      %3365 = vmatmul.f32.gmra.mxu0 %v3275
      %v3366 = vpop.f32.mrf.mxu0
      %v3367 = vadd.f32 0.0, %v3366
      %3368 = vmatmul.f32.gmra.mxu0 %v3278
      %v3369 = vpop.f32.mrf.mxu0
      %v3370 = vadd.f32 0.0, %v3369
      %3371 = vmatmul.f32.gmra.mxu0 %v3281
      %v3372 = vpop.f32.mrf.mxu0
      %v3373 = vadd.f32 0.0, %v3372
      %3374 = vmatmul.f32.gmra.mxu0 %v3284
      %v3375 = vpop.f32.mrf.mxu0
      %v3376 = vadd.f32 0.0, %v3375
      %3377 = vmatmul.f32.gmra.mxu0 %v3287
      %v3378 = vpop.f32.mrf.mxu0
      %v3379 = vadd.f32 0.0, %v3378
      %3380 = vmatmul.f32.gmra.mxu0 %v3290
      %v3381 = vpop.f32.mrf.mxu0
      %v3382 = vadd.f32 0.0, %v3381
      %3383 = vmatmul.f32.gmra.mxu0 %v3293
      %v3384 = vpop.f32.mrf.mxu0
      %v3385 = vadd.f32 0.0, %v3384
      %3386 = vmatmul.f32.gmra.mxu0 %v3296
      %v3387 = vpop.f32.mrf.mxu0
      %v3388 = vadd.f32 0.0, %v3387
      %3389 = vmatmul.f32.gmra.mxu0 %v3299
      %v3390 = vpop.f32.mrf.mxu0
      %v3391 = vadd.f32 0.0, %v3390
      %3392 = vmatmul.f32.gmra.mxu0 %v3302
      %v3393 = vpop.f32.mrf.mxu0
      %v3394 = vadd.f32 0.0, %v3393
      %3395 = vmatmul.f32.gmra.mxu0 %v3305
      %v3396 = vpop.f32.mrf.mxu0
      %v3397 = vadd.f32 0.0, %v3396
      %3398 = vmatmul.f32.gmra.mxu0 %v3308
      %v3399 = vpop.f32.mrf.mxu0
      %v3400 = vadd.f32 0.0, %v3399
      %3401 = vmatmul.f32.gmra.mxu0 %v3311
      %v3402 = vpop.f32.mrf.mxu0
      %v3403 = vadd.f32 0.0, %v3402
      %3404 = vmatmul.f32.gmra.mxu0 %v3314
      %v3405 = vpop.f32.mrf.mxu0
      %v3406 = vadd.f32 0.0, %v3405
      %3407 = vmatmul.f32.gmra.mxu0 %v3317
      %v3408 = vpop.f32.mrf.mxu0
      %v3409 = vadd.f32 0.0, %v3408
      %3410 = vmatmul.f32.gmra.mxu0 %v3320
      %v3411 = vpop.f32.mrf.mxu0
      %v3412 = vadd.f32 0.0, %v3411
      %3413 = vmatmul.f32.gmra.mxu0 %v3323
      %v3414 = vpop.f32.mrf.mxu0
      %v3415 = vadd.f32 0.0, %v3414
      %3416 = vmatmul.f32.gmra.mxu0 %v3326
      %v3417 = vpop.f32.mrf.mxu0
      %v3418 = vadd.f32 0.0, %v3417
      %3419 = vmatmul.f32.gmra.mxu0 %v3329
      %v3420 = vpop.f32.mrf.mxu0
      %v3421 = vadd.f32 0.0, %v3420
      %3422 = vmatmul.f32.gmra.mxu0 %v3332
      %v3423 = vpop.f32.mrf.mxu0
      %v3424 = vadd.f32 0.0, %v3423
      %3425 = vmatmul.f32.gmra.mxu0 %v3335
      %v3426 = vpop.f32.mrf.mxu0
      %v3427 = vadd.f32 0.0, %v3426
      %3428 = vmatmul.f32.gmra.mxu0 %v3338
      %v3429 = vpop.f32.mrf.mxu0
      %v3430 = vadd.f32 0.0, %v3429
      %3431 = vmatmul.f32.gmra.mxu0 %v3341
      %v3432 = vpop.f32.mrf.mxu0
      %v3433 = vadd.f32 0.0, %v3432
      %3434 = vmatmul.f32.gmra.mxu0 %v3344
      %v3435 = vpop.f32.mrf.mxu0
      %v3436 = vadd.f32 0.0, %v3435
      %3437 = vdwg.mxu0
      %v3438 = vadd.f32 %v3224, %v3367
      %v3439 = vadd.f32 %v3225, %v3370
      %v3440 = vadd.f32 %v3226, %v3373
      %v3441 = vadd.f32 %v3227, %v3376
      %v3442 = vadd.f32 %v3228, %v3379
      %v3443 = vadd.f32 %v3229, %v3382
      %v3444 = vadd.f32 %v3230, %v3385
      %v3445 = vadd.f32 %v3231, %v3388
      %v3446 = vadd.f32 %v3232, %v3391
      %v3447 = vadd.f32 %v3233, %v3394
      %v3448 = vadd.f32 %v3234, %v3397
      %v3449 = vadd.f32 %v3235, %v3400
      %v3450 = vadd.f32 %v3236, %v3403
      %v3451 = vadd.f32 %v3237, %v3406
      %v3452 = vadd.f32 %v3238, %v3409
      %v3453 = vadd.f32 %v3239, %v3412
      %v3454 = vadd.f32 %v3240, %v3415
      %v3455 = vadd.f32 %v3241, %v3418
      %v3456 = vadd.f32 %v3242, %v3421
      %v3457 = vadd.f32 %v3243, %v3424
      %v3458 = vadd.f32 %v3244, %v3427
      %v3459 = vadd.f32 %v3245, %v3430
      %v3460 = vadd.f32 %v3246, %v3433
      %v3461 = vadd.f32 %v3247, %v3436
      %v3462 = vld [vmem:[#allocation2 + $0x31] sm:$0xff]
      %v3463 = vld [vmem:[#allocation2 + $0x39] sm:$0xff]
      %v3464 = vld [vmem:[#allocation2 + $0x41] sm:$0xff]
      %v3465 = vld [vmem:[#allocation2 + $0x49] sm:$0xff]
      %v3466 = vld [vmem:[#allocation2 + $0x51] sm:$0xff]
      %v3467 = vld [vmem:[#allocation2 + $0x59] sm:$0xff]
      %v3468 = vld [vmem:[#allocation2 + $0x61] sm:$0xff]
      %v3469 = vld [vmem:[#allocation2 + $0x69] sm:$0xff]
      %v3470 = vld [vmem:[#allocation2 + $0x71] sm:$0xff]
      %v3471 = vld [vmem:[#allocation2 + $0x79] sm:$0xff]
      %v3472 = vld [vmem:[#allocation2 + $0x81] sm:$0xff]
      %v3473 = vld [vmem:[#allocation2 + $0x89] sm:$0xff]
      %v3474 = vld [vmem:[#allocation2 + $0x91] sm:$0xff]
      %v3475 = vld [vmem:[#allocation2 + $0x99] sm:$0xff]
      %v3476 = vld [vmem:[#allocation2 + $0xa1] sm:$0xff]
      %v3477 = vld [vmem:[#allocation2 + $0xa9] sm:$0xff]
      %v3478 = vld [vmem:[#allocation2 + $0xb1] sm:$0xff]
      %v3479 = vld [vmem:[#allocation2 + $0xb9] sm:$0xff]
      %v3480 = vld [vmem:[#allocation2 + $0xc1] sm:$0xff]
      %v3481 = vld [vmem:[#allocation2 + $0xc9] sm:$0xff]
      %v3482 = vld [vmem:[#allocation2 + $0xd1] sm:$0xff]
      %v3483 = vld [vmem:[#allocation2 + $0xd9] sm:$0xff]
      %v3484 = vld [vmem:[#allocation2 + $0xe1] sm:$0xff]
      %v3485 = vld [vmem:[#allocation2 + $0xe9] sm:$0xff]
      %s3486 = scalar_lea.vmem %s6, 28
      %v3487 = vld [vmem:[%s3486] sm:$0xf]
      %v3489 = vsel %vm1844, %v3462, 0
      %v3492 = vsel %vm1844, %v3463, 0
      %v3495 = vsel %vm1844, %v3464, 0
      %v3498 = vsel %vm1844, %v3465, 0
      %v3501 = vsel %vm1844, %v3466, 0
      %v3504 = vsel %vm1844, %v3467, 0
      %v3507 = vsel %vm1844, %v3468, 0
      %v3510 = vsel %vm1844, %v3469, 0
      %v3513 = vsel %vm1844, %v3470, 0
      %v3516 = vsel %vm1844, %v3471, 0
      %v3519 = vsel %vm1844, %v3472, 0
      %v3522 = vsel %vm1844, %v3473, 0
      %v3525 = vsel %vm1844, %v3474, 0
      %v3528 = vsel %vm1844, %v3475, 0
      %v3531 = vsel %vm1844, %v3476, 0
      %v3534 = vsel %vm1844, %v3477, 0
      %v3537 = vsel %vm1844, %v3478, 0
      %v3540 = vsel %vm1844, %v3479, 0
      %v3543 = vsel %vm1844, %v3480, 0
      %v3546 = vsel %vm1844, %v3481, 0
      %v3549 = vsel %vm1844, %v3482, 0
      %v3552 = vsel %vm1844, %v3483, 0
      %v3555 = vsel %vm1844, %v3484, 0
      %v3558 = vsel %vm1844, %v3485, 0
      %v3561 = vsel %vm2135, %v3487, 0
      %3563 = vmatpush.msra.mxu0 0.0
      %3564 = vmatpush.msra.mxu0 0.0
      %3565 = vmatpush.msra.mxu0 0.0
      %3566 = vmatpush.msra.mxu0 0.0
      %3567 = vmatpush.msra.mxu0 0.0
      %3568 = vmatpush.msra.mxu0 0.0
      %3569 = vmatpush.msra.mxu0 0.0
      %3570 = vmatpush.msra.mxu0 0.0
      %3571 = vmatpush.msra.mxu0 0.0
      %3572 = vmatpush.msra.mxu0 0.0
      %3573 = vmatpush.msra.mxu0 0.0
      %3574 = vmatpush.msra.mxu0 0.0
      %3575 = vmatpush.msra.mxu0 0.0
      %3576 = vmatpush.msra.mxu0 0.0
      %3577 = vmatpush.msra.mxu0 0.0
      %3578 = vmatpush.msra.mxu0 %v3561
      %3579 = vmatmul.f32.gmra.mxu0 %v3489
      %v3580 = vpop.f32.mrf.mxu0
      %v3581 = vadd.f32 0.0, %v3580
      %3582 = vmatmul.f32.gmra.mxu0 %v3492
      %v3583 = vpop.f32.mrf.mxu0
      %v3584 = vadd.f32 0.0, %v3583
      %3585 = vmatmul.f32.gmra.mxu0 %v3495
      %v3586 = vpop.f32.mrf.mxu0
      %v3587 = vadd.f32 0.0, %v3586
      %3588 = vmatmul.f32.gmra.mxu0 %v3498
      %v3589 = vpop.f32.mrf.mxu0
      %v3590 = vadd.f32 0.0, %v3589
      %3591 = vmatmul.f32.gmra.mxu0 %v3501
      %v3592 = vpop.f32.mrf.mxu0
      %v3593 = vadd.f32 0.0, %v3592
      %3594 = vmatmul.f32.gmra.mxu0 %v3504
      %v3595 = vpop.f32.mrf.mxu0
      %v3596 = vadd.f32 0.0, %v3595
      %3597 = vmatmul.f32.gmra.mxu0 %v3507
      %v3598 = vpop.f32.mrf.mxu0
      %v3599 = vadd.f32 0.0, %v3598
      %3600 = vmatmul.f32.gmra.mxu0 %v3510
      %v3601 = vpop.f32.mrf.mxu0
      %v3602 = vadd.f32 0.0, %v3601
      %3603 = vmatmul.f32.gmra.mxu0 %v3513
      %v3604 = vpop.f32.mrf.mxu0
      %v3605 = vadd.f32 0.0, %v3604
      %3606 = vmatmul.f32.gmra.mxu0 %v3516
      %v3607 = vpop.f32.mrf.mxu0
      %v3608 = vadd.f32 0.0, %v3607
      %3609 = vmatmul.f32.gmra.mxu0 %v3519
      %v3610 = vpop.f32.mrf.mxu0
      %v3611 = vadd.f32 0.0, %v3610
      %3612 = vmatmul.f32.gmra.mxu0 %v3522
      %v3613 = vpop.f32.mrf.mxu0
      %v3614 = vadd.f32 0.0, %v3613
      %3615 = vmatmul.f32.gmra.mxu0 %v3525
      %v3616 = vpop.f32.mrf.mxu0
      %v3617 = vadd.f32 0.0, %v3616
      %3618 = vmatmul.f32.gmra.mxu0 %v3528
      %v3619 = vpop.f32.mrf.mxu0
      %v3620 = vadd.f32 0.0, %v3619
      %3621 = vmatmul.f32.gmra.mxu0 %v3531
      %v3622 = vpop.f32.mrf.mxu0
      %v3623 = vadd.f32 0.0, %v3622
      %3624 = vmatmul.f32.gmra.mxu0 %v3534
      %v3625 = vpop.f32.mrf.mxu0
      %v3626 = vadd.f32 0.0, %v3625
      %3627 = vmatmul.f32.gmra.mxu0 %v3537
      %v3628 = vpop.f32.mrf.mxu0
      %v3629 = vadd.f32 0.0, %v3628
      %3630 = vmatmul.f32.gmra.mxu0 %v3540
      %v3631 = vpop.f32.mrf.mxu0
      %v3632 = vadd.f32 0.0, %v3631
      %3633 = vmatmul.f32.gmra.mxu0 %v3543
      %v3634 = vpop.f32.mrf.mxu0
      %v3635 = vadd.f32 0.0, %v3634
      %3636 = vmatmul.f32.gmra.mxu0 %v3546
      %v3637 = vpop.f32.mrf.mxu0
      %v3638 = vadd.f32 0.0, %v3637
      %3639 = vmatmul.f32.gmra.mxu0 %v3549
      %v3640 = vpop.f32.mrf.mxu0
      %v3641 = vadd.f32 0.0, %v3640
      %3642 = vmatmul.f32.gmra.mxu0 %v3552
      %v3643 = vpop.f32.mrf.mxu0
      %v3644 = vadd.f32 0.0, %v3643
      %3645 = vmatmul.f32.gmra.mxu0 %v3555
      %v3646 = vpop.f32.mrf.mxu0
      %v3647 = vadd.f32 0.0, %v3646
      %3648 = vmatmul.f32.gmra.mxu0 %v3558
      %v3649 = vpop.f32.mrf.mxu0
      %v3650 = vadd.f32 0.0, %v3649
      %3651 = vdwg.mxu0
      %v3652 = vadd.f32 %v3438, %v3581
      %v3653 = vadd.f32 %v3439, %v3584
      %v3654 = vadd.f32 %v3440, %v3587
      %v3655 = vadd.f32 %v3441, %v3590
      %v3656 = vadd.f32 %v3442, %v3593
      %v3657 = vadd.f32 %v3443, %v3596
      %v3658 = vadd.f32 %v3444, %v3599
      %v3659 = vadd.f32 %v3445, %v3602
      %v3660 = vadd.f32 %v3446, %v3605
      %v3661 = vadd.f32 %v3447, %v3608
      %v3662 = vadd.f32 %v3448, %v3611
      %v3663 = vadd.f32 %v3449, %v3614
      %v3664 = vadd.f32 %v3450, %v3617
      %v3665 = vadd.f32 %v3451, %v3620
      %v3666 = vadd.f32 %v3452, %v3623
      %v3667 = vadd.f32 %v3453, %v3626
      %v3668 = vadd.f32 %v3454, %v3629
      %v3669 = vadd.f32 %v3455, %v3632
      %v3670 = vadd.f32 %v3456, %v3635
      %v3671 = vadd.f32 %v3457, %v3638
      %v3672 = vadd.f32 %v3458, %v3641
      %v3673 = vadd.f32 %v3459, %v3644
      %v3674 = vadd.f32 %v3460, %v3647
      %v3675 = vadd.f32 %v3461, %v3650
      %v3676 = vld [vmem:[#allocation2 + $0x32] sm:$0xff]
      %v3677 = vld [vmem:[#allocation2 + $0x3a] sm:$0xff]
      %v3678 = vld [vmem:[#allocation2 + $0x42] sm:$0xff]
      %v3679 = vld [vmem:[#allocation2 + $0x4a] sm:$0xff]
      %v3680 = vld [vmem:[#allocation2 + $0x52] sm:$0xff]
      %v3681 = vld [vmem:[#allocation2 + $0x5a] sm:$0xff]
      %v3682 = vld [vmem:[#allocation2 + $0x62] sm:$0xff]
      %v3683 = vld [vmem:[#allocation2 + $0x6a] sm:$0xff]
      %v3684 = vld [vmem:[#allocation2 + $0x72] sm:$0xff]
      %v3685 = vld [vmem:[#allocation2 + $0x7a] sm:$0xff]
      %v3686 = vld [vmem:[#allocation2 + $0x82] sm:$0xff]
      %v3687 = vld [vmem:[#allocation2 + $0x8a] sm:$0xff]
      %v3688 = vld [vmem:[#allocation2 + $0x92] sm:$0xff]
      %v3689 = vld [vmem:[#allocation2 + $0x9a] sm:$0xff]
      %v3690 = vld [vmem:[#allocation2 + $0xa2] sm:$0xff]
      %v3691 = vld [vmem:[#allocation2 + $0xaa] sm:$0xff]
      %v3692 = vld [vmem:[#allocation2 + $0xb2] sm:$0xff]
      %v3693 = vld [vmem:[#allocation2 + $0xba] sm:$0xff]
      %v3694 = vld [vmem:[#allocation2 + $0xc2] sm:$0xff]
      %v3695 = vld [vmem:[#allocation2 + $0xca] sm:$0xff]
      %v3696 = vld [vmem:[#allocation2 + $0xd2] sm:$0xff]
      %v3697 = vld [vmem:[#allocation2 + $0xda] sm:$0xff]
      %v3698 = vld [vmem:[#allocation2 + $0xe2] sm:$0xff]
      %v3699 = vld [vmem:[#allocation2 + $0xea] sm:$0xff]
      %s3700 = scalar_lea.vmem %s6, 32
      %v3701 = vld [vmem:[%s3700] sm:$0xf]
      %v3703 = vsel %vm1844, %v3676, 0
      %v3706 = vsel %vm1844, %v3677, 0
      %v3709 = vsel %vm1844, %v3678, 0
      %v3712 = vsel %vm1844, %v3679, 0
      %v3715 = vsel %vm1844, %v3680, 0
      %v3718 = vsel %vm1844, %v3681, 0
      %v3721 = vsel %vm1844, %v3682, 0
      %v3724 = vsel %vm1844, %v3683, 0
      %v3727 = vsel %vm1844, %v3684, 0
      %v3730 = vsel %vm1844, %v3685, 0
      %v3733 = vsel %vm1844, %v3686, 0
      %v3736 = vsel %vm1844, %v3687, 0
      %v3739 = vsel %vm1844, %v3688, 0
      %v3742 = vsel %vm1844, %v3689, 0
      %v3745 = vsel %vm1844, %v3690, 0
      %v3748 = vsel %vm1844, %v3691, 0
      %v3751 = vsel %vm1844, %v3692, 0
      %v3754 = vsel %vm1844, %v3693, 0
      %v3757 = vsel %vm1844, %v3694, 0
      %v3760 = vsel %vm1844, %v3695, 0
      %v3763 = vsel %vm1844, %v3696, 0
      %v3766 = vsel %vm1844, %v3697, 0
      %v3769 = vsel %vm1844, %v3698, 0
      %v3772 = vsel %vm1844, %v3699, 0
      %v3775 = vsel %vm2135, %v3701, 0
      %3777 = vmatpush.msra.mxu0 0.0
      %3778 = vmatpush.msra.mxu0 0.0
      %3779 = vmatpush.msra.mxu0 0.0
      %3780 = vmatpush.msra.mxu0 0.0
      %3781 = vmatpush.msra.mxu0 0.0
      %3782 = vmatpush.msra.mxu0 0.0
      %3783 = vmatpush.msra.mxu0 0.0
      %3784 = vmatpush.msra.mxu0 0.0
      %3785 = vmatpush.msra.mxu0 0.0
      %3786 = vmatpush.msra.mxu0 0.0
      %3787 = vmatpush.msra.mxu0 0.0
      %3788 = vmatpush.msra.mxu0 0.0
      %3789 = vmatpush.msra.mxu0 0.0
      %3790 = vmatpush.msra.mxu0 0.0
      %3791 = vmatpush.msra.mxu0 0.0
      %3792 = vmatpush.msra.mxu0 %v3775
      %3793 = vmatmul.f32.gmra.mxu0 %v3703
      %v3794 = vpop.f32.mrf.mxu0
      %v3795 = vadd.f32 0.0, %v3794
      %3796 = vmatmul.f32.gmra.mxu0 %v3706
      %v3797 = vpop.f32.mrf.mxu0
      %v3798 = vadd.f32 0.0, %v3797
      %3799 = vmatmul.f32.gmra.mxu0 %v3709
      %v3800 = vpop.f32.mrf.mxu0
      %v3801 = vadd.f32 0.0, %v3800
      %3802 = vmatmul.f32.gmra.mxu0 %v3712
      %v3803 = vpop.f32.mrf.mxu0
      %v3804 = vadd.f32 0.0, %v3803
      %3805 = vmatmul.f32.gmra.mxu0 %v3715
      %v3806 = vpop.f32.mrf.mxu0
      %v3807 = vadd.f32 0.0, %v3806
      %3808 = vmatmul.f32.gmra.mxu0 %v3718
      %v3809 = vpop.f32.mrf.mxu0
      %v3810 = vadd.f32 0.0, %v3809
      %3811 = vmatmul.f32.gmra.mxu0 %v3721
      %v3812 = vpop.f32.mrf.mxu0
      %v3813 = vadd.f32 0.0, %v3812
      %3814 = vmatmul.f32.gmra.mxu0 %v3724
      %v3815 = vpop.f32.mrf.mxu0
      %v3816 = vadd.f32 0.0, %v3815
      %3817 = vmatmul.f32.gmra.mxu0 %v3727
      %v3818 = vpop.f32.mrf.mxu0
      %v3819 = vadd.f32 0.0, %v3818
      %3820 = vmatmul.f32.gmra.mxu0 %v3730
      %v3821 = vpop.f32.mrf.mxu0
      %v3822 = vadd.f32 0.0, %v3821
      %3823 = vmatmul.f32.gmra.mxu0 %v3733
      %v3824 = vpop.f32.mrf.mxu0
      %v3825 = vadd.f32 0.0, %v3824
      %3826 = vmatmul.f32.gmra.mxu0 %v3736
      %v3827 = vpop.f32.mrf.mxu0
      %v3828 = vadd.f32 0.0, %v3827
      %3829 = vmatmul.f32.gmra.mxu0 %v3739
      %v3830 = vpop.f32.mrf.mxu0
      %v3831 = vadd.f32 0.0, %v3830
      %3832 = vmatmul.f32.gmra.mxu0 %v3742
      %v3833 = vpop.f32.mrf.mxu0
      %v3834 = vadd.f32 0.0, %v3833
      %3835 = vmatmul.f32.gmra.mxu0 %v3745
      %v3836 = vpop.f32.mrf.mxu0
      %v3837 = vadd.f32 0.0, %v3836
      %3838 = vmatmul.f32.gmra.mxu0 %v3748
      %v3839 = vpop.f32.mrf.mxu0
      %v3840 = vadd.f32 0.0, %v3839
      %3841 = vmatmul.f32.gmra.mxu0 %v3751
      %v3842 = vpop.f32.mrf.mxu0
      %v3843 = vadd.f32 0.0, %v3842
      %3844 = vmatmul.f32.gmra.mxu0 %v3754
      %v3845 = vpop.f32.mrf.mxu0
      %v3846 = vadd.f32 0.0, %v3845
      %3847 = vmatmul.f32.gmra.mxu0 %v3757
      %v3848 = vpop.f32.mrf.mxu0
      %v3849 = vadd.f32 0.0, %v3848
      %3850 = vmatmul.f32.gmra.mxu0 %v3760
      %v3851 = vpop.f32.mrf.mxu0
      %v3852 = vadd.f32 0.0, %v3851
      %3853 = vmatmul.f32.gmra.mxu0 %v3763
      %v3854 = vpop.f32.mrf.mxu0
      %v3855 = vadd.f32 0.0, %v3854
      %3856 = vmatmul.f32.gmra.mxu0 %v3766
      %v3857 = vpop.f32.mrf.mxu0
      %v3858 = vadd.f32 0.0, %v3857
      %3859 = vmatmul.f32.gmra.mxu0 %v3769
      %v3860 = vpop.f32.mrf.mxu0
      %v3861 = vadd.f32 0.0, %v3860
      %3862 = vmatmul.f32.gmra.mxu0 %v3772
      %v3863 = vpop.f32.mrf.mxu0
      %v3864 = vadd.f32 0.0, %v3863
      %3865 = vdwg.mxu0
      %v3866 = vadd.f32 %v3652, %v3795
      %v3867 = vadd.f32 %v3653, %v3798
      %v3868 = vadd.f32 %v3654, %v3801
      %v3869 = vadd.f32 %v3655, %v3804
      %v3870 = vadd.f32 %v3656, %v3807
      %v3871 = vadd.f32 %v3657, %v3810
      %v3872 = vadd.f32 %v3658, %v3813
      %v3873 = vadd.f32 %v3659, %v3816
      %v3874 = vadd.f32 %v3660, %v3819
      %v3875 = vadd.f32 %v3661, %v3822
      %v3876 = vadd.f32 %v3662, %v3825
      %v3877 = vadd.f32 %v3663, %v3828
      %v3878 = vadd.f32 %v3664, %v3831
      %v3879 = vadd.f32 %v3665, %v3834
      %v3880 = vadd.f32 %v3666, %v3837
      %v3881 = vadd.f32 %v3667, %v3840
      %v3882 = vadd.f32 %v3668, %v3843
      %v3883 = vadd.f32 %v3669, %v3846
      %v3884 = vadd.f32 %v3670, %v3849
      %v3885 = vadd.f32 %v3671, %v3852
      %v3886 = vadd.f32 %v3672, %v3855
      %v3887 = vadd.f32 %v3673, %v3858
      %v3888 = vadd.f32 %v3674, %v3861
      %v3889 = vadd.f32 %v3675, %v3864
      %v3890 = vld [vmem:[%s7] sm:$0x1]
      %v3892 = vperm.slane %v3890, 0
      %v3894 = vmul.f32 %v3866, %v3892
      %v3895 = vmul.f32 %v3867, %v3892
      %v3896 = vmul.f32 %v3868, %v3892
      %v3897 = vmul.f32 %v3869, %v3892
      %v3898 = vmul.f32 %v3870, %v3892
      %v3899 = vmul.f32 %v3871, %v3892
      %v3900 = vmul.f32 %v3872, %v3892
      %v3901 = vmul.f32 %v3873, %v3892
      %v3902 = vmul.f32 %v3874, %v3892
      %v3903 = vmul.f32 %v3875, %v3892
      %v3904 = vmul.f32 %v3876, %v3892
      %v3905 = vmul.f32 %v3877, %v3892
      %v3906 = vmul.f32 %v3878, %v3892
      %v3907 = vmul.f32 %v3879, %v3892
      %v3908 = vmul.f32 %v3880, %v3892
      %v3909 = vmul.f32 %v3881, %v3892
      %v3910 = vmul.f32 %v3882, %v3892
      %v3911 = vmul.f32 %v3883, %v3892
      %v3912 = vmul.f32 %v3884, %v3892
      %v3913 = vmul.f32 %v3885, %v3892
      %v3914 = vmul.f32 %v3886, %v3892
      %v3915 = vmul.f32 %v3887, %v3892
      %v3916 = vmul.f32 %v3888, %v3892
      %v3917 = vmul.f32 %v3889, %v3892
      %v3918 = vld [vmem:[%s8] sm:$0x1]
      %v3920 = vperm.slane %v3918, 0
      %v3922 = vadd.f32 %v3894, %v3920
      %v3923 = vadd.f32 %v3895, %v3920
      %v3924 = vadd.f32 %v3896, %v3920
      %v3925 = vadd.f32 %v3897, %v3920
      %v3926 = vadd.f32 %v3898, %v3920
      %v3927 = vadd.f32 %v3899, %v3920
      %v3928 = vadd.f32 %v3900, %v3920
      %v3929 = vadd.f32 %v3901, %v3920
      %v3930 = vadd.f32 %v3902, %v3920
      %v3931 = vadd.f32 %v3903, %v3920
      %v3932 = vadd.f32 %v3904, %v3920
      %v3933 = vadd.f32 %v3905, %v3920
      %v3934 = vadd.f32 %v3906, %v3920
      %v3935 = vadd.f32 %v3907, %v3920
      %v3936 = vadd.f32 %v3908, %v3920
      %v3937 = vadd.f32 %v3909, %v3920
      %v3938 = vadd.f32 %v3910, %v3920
      %v3939 = vadd.f32 %v3911, %v3920
      %v3940 = vadd.f32 %v3912, %v3920
      %v3941 = vadd.f32 %v3913, %v3920
      %v3942 = vadd.f32 %v3914, %v3920
      %v3943 = vadd.f32 %v3915, %v3920
      %v3944 = vadd.f32 %v3916, %v3920
      %v3945 = vadd.f32 %v3917, %v3920
      %v3946 = vmax.f32 %v3922, 0.0
      %v3947 = vmax.f32 %v3923, 0.0
      %v3948 = vmax.f32 %v3924, 0.0
      %v3949 = vmax.f32 %v3925, 0.0
      %v3950 = vmax.f32 %v3926, 0.0
      %v3951 = vmax.f32 %v3927, 0.0
      %v3952 = vmax.f32 %v3928, 0.0
      %v3953 = vmax.f32 %v3929, 0.0
      %v3954 = vmax.f32 %v3930, 0.0
      %v3955 = vmax.f32 %v3931, 0.0
      %v3956 = vmax.f32 %v3932, 0.0
      %v3957 = vmax.f32 %v3933, 0.0
      %v3958 = vmax.f32 %v3934, 0.0
      %v3959 = vmax.f32 %v3935, 0.0
      %v3960 = vmax.f32 %v3936, 0.0
      %v3961 = vmax.f32 %v3937, 0.0
      %v3962 = vmax.f32 %v3938, 0.0
      %v3963 = vmax.f32 %v3939, 0.0
      %v3964 = vmax.f32 %v3940, 0.0
      %v3965 = vmax.f32 %v3941, 0.0
      %v3966 = vmax.f32 %v3942, 0.0
      %v3967 = vmax.f32 %v3943, 0.0
      %v3968 = vmax.f32 %v3944, 0.0
      %v3969 = vmax.f32 %v3945, 0.0
      %v3970 = vld [vmem:[%s9] sm:$0xf]
      %v3972 = vsel %vm1844, %v3946, 0
      %v3975 = vsel %vm1844, %v3947, 0
      %v3978 = vsel %vm1844, %v3948, 0
      %v3981 = vsel %vm1844, %v3949, 0
      %v3984 = vsel %vm1844, %v3950, 0
      %v3987 = vsel %vm1844, %v3951, 0
      %v3990 = vsel %vm1844, %v3952, 0
      %v3993 = vsel %vm1844, %v3953, 0
      %v3996 = vsel %vm1844, %v3954, 0
      %v3999 = vsel %vm1844, %v3955, 0
      %v4002 = vsel %vm1844, %v3956, 0
      %v4005 = vsel %vm1844, %v3957, 0
      %v4008 = vsel %vm1844, %v3958, 0
      %v4011 = vsel %vm1844, %v3959, 0
      %v4014 = vsel %vm1844, %v3960, 0
      %v4017 = vsel %vm1844, %v3961, 0
      %v4020 = vsel %vm1844, %v3962, 0
      %v4023 = vsel %vm1844, %v3963, 0
      %v4026 = vsel %vm1844, %v3964, 0
      %v4029 = vsel %vm1844, %v3965, 0
      %v4032 = vsel %vm1844, %v3966, 0
      %v4035 = vsel %vm1844, %v3967, 0
      %v4038 = vsel %vm1844, %v3968, 0
      %v4041 = vsel %vm1844, %v3969, 0
      %v4044 = vsel %vm2135, %v3970, 0
      %4046 = vmatpush.msra.mxu0 0.0
      %4047 = vmatpush.msra.mxu0 0.0
      %4048 = vmatpush.msra.mxu0 0.0
      %4049 = vmatpush.msra.mxu0 0.0
      %4050 = vmatpush.msra.mxu0 0.0
      %4051 = vmatpush.msra.mxu0 0.0
      %4052 = vmatpush.msra.mxu0 0.0
      %4053 = vmatpush.msra.mxu0 0.0
      %4054 = vmatpush.msra.mxu0 0.0
      %4055 = vmatpush.msra.mxu0 0.0
      %4056 = vmatpush.msra.mxu0 0.0
      %4057 = vmatpush.msra.mxu0 0.0
      %4058 = vmatpush.msra.mxu0 0.0
      %4059 = vmatpush.msra.mxu0 0.0
      %4060 = vmatpush.msra.mxu0 0.0
      %4061 = vmatpush.msra.mxu0 %v4044
      %4062 = vmatmul.f32.gmra.mxu0 %v3972
      %v4063 = vpop.f32.mrf.mxu0
      %v4064 = vadd.f32 0.0, %v4063
      %4065 = vmatmul.f32.gmra.mxu0 %v3975
      %v4066 = vpop.f32.mrf.mxu0
      %v4067 = vadd.f32 0.0, %v4066
      %4068 = vmatmul.f32.gmra.mxu0 %v3978
      %v4069 = vpop.f32.mrf.mxu0
      %4070 = vmatmul.f32.gmra.mxu0 %v3981
      %v4071 = vpop.f32.mrf.mxu0
      %v4072 = vadd.f32 0.0, %v4071
      %4073 = vmatmul.f32.gmra.mxu0 %v3984
      %v4074 = vpop.f32.mrf.mxu0
      %v4075 = vadd.f32 0.0, %v4074
      %4076 = vmatmul.f32.gmra.mxu0 %v3987
      %v4077 = vpop.f32.mrf.mxu0
      %4078 = vmatmul.f32.gmra.mxu0 %v3990
      %v4079 = vpop.f32.mrf.mxu0
      %v4080 = vadd.f32 0.0, %v4079
      %4081 = vmatmul.f32.gmra.mxu0 %v3993
      %v4082 = vpop.f32.mrf.mxu0
      %v4083 = vadd.f32 0.0, %v4082
      %4084 = vmatmul.f32.gmra.mxu0 %v3996
      %v4085 = vpop.f32.mrf.mxu0
      %4086 = vmatmul.f32.gmra.mxu0 %v3999
      %v4087 = vpop.f32.mrf.mxu0
      %v4088 = vadd.f32 0.0, %v4087
      %4089 = vmatmul.f32.gmra.mxu0 %v4002
      %v4090 = vpop.f32.mrf.mxu0
      %v4091 = vadd.f32 0.0, %v4090
      %4092 = vmatmul.f32.gmra.mxu0 %v4005
      %v4093 = vpop.f32.mrf.mxu0
      %4094 = vmatmul.f32.gmra.mxu0 %v4008
      %v4095 = vpop.f32.mrf.mxu0
      %v4096 = vadd.f32 0.0, %v4095
      %4097 = vmatmul.f32.gmra.mxu0 %v4011
      %v4098 = vpop.f32.mrf.mxu0
      %v4099 = vadd.f32 0.0, %v4098
      %4100 = vmatmul.f32.gmra.mxu0 %v4014
      %v4101 = vpop.f32.mrf.mxu0
      %4102 = vmatmul.f32.gmra.mxu0 %v4017
      %v4103 = vpop.f32.mrf.mxu0
      %v4104 = vadd.f32 0.0, %v4103
      %4105 = vmatmul.f32.gmra.mxu0 %v4020
      %v4106 = vpop.f32.mrf.mxu0
      %v4107 = vadd.f32 0.0, %v4106
      %4108 = vmatmul.f32.gmra.mxu0 %v4023
      %v4109 = vpop.f32.mrf.mxu0
      %4110 = vmatmul.f32.gmra.mxu0 %v4026
      %v4111 = vpop.f32.mrf.mxu0
      %v4112 = vadd.f32 0.0, %v4111
      %4113 = vmatmul.f32.gmra.mxu0 %v4029
      %v4114 = vpop.f32.mrf.mxu0
      %v4115 = vadd.f32 0.0, %v4114
      %4116 = vmatmul.f32.gmra.mxu0 %v4032
      %v4117 = vpop.f32.mrf.mxu0
      %4118 = vmatmul.f32.gmra.mxu0 %v4035
      %v4119 = vpop.f32.mrf.mxu0
      %v4120 = vadd.f32 0.0, %v4119
      %4121 = vmatmul.f32.gmra.mxu0 %v4038
      %v4122 = vpop.f32.mrf.mxu0
      %v4123 = vadd.f32 0.0, %v4122
      %4124 = vmatmul.f32.gmra.mxu0 %v4041
      %v4125 = vpop.f32.mrf.mxu0
      %4126 = vdwg.mxu0
      %v4127 = vld [vmem:[%s10] sm:$0x1]
      %v4129 = vperm.slane %v4127, 0
      %v4131 = vmul.f32 %v4064, %v4129
      %v4132 = vmul.f32 %v4067, %v4129
      %v4133 = vmul.f32 %v4072, %v4129
      %v4134 = vmul.f32 %v4075, %v4129
      %v4135 = vmul.f32 %v4080, %v4129
      %v4136 = vmul.f32 %v4083, %v4129
      %v4137 = vmul.f32 %v4088, %v4129
      %v4138 = vmul.f32 %v4091, %v4129
      %v4139 = vmul.f32 %v4096, %v4129
      %v4140 = vmul.f32 %v4099, %v4129
      %v4141 = vmul.f32 %v4104, %v4129
      %v4142 = vmul.f32 %v4107, %v4129
      %v4143 = vmul.f32 %v4112, %v4129
      %v4144 = vmul.f32 %v4115, %v4129
      %v4145 = vmul.f32 %v4120, %v4129
      %v4146 = vmul.f32 %v4123, %v4129
      %v4147 = vld [vmem:[%s11] sm:$0x1]
      %v4149 = vperm.slane %v4147, 0
      %v4151 = vadd.f32 %v4131, %v4149
      %v4152 = vadd.f32 %v4132, %v4149
      %v4153 = vadd.f32 %v4133, %v4149
      %v4154 = vadd.f32 %v4134, %v4149
      %v4155 = vadd.f32 %v4135, %v4149
      %v4156 = vadd.f32 %v4136, %v4149
      %v4157 = vadd.f32 %v4137, %v4149
      %v4158 = vadd.f32 %v4138, %v4149
      %v4159 = vadd.f32 %v4139, %v4149
      %v4160 = vadd.f32 %v4140, %v4149
      %v4161 = vadd.f32 %v4141, %v4149
      %v4162 = vadd.f32 %v4142, %v4149
      %v4163 = vadd.f32 %v4143, %v4149
      %v4164 = vadd.f32 %v4144, %v4149
      %v4165 = vadd.f32 %v4145, %v4149
      %v4166 = vadd.f32 %v4146, %v4149
      %v4167 = vld [vmem:[%s535 + $0x1] sm:$0xff]
      %v4168 = vld [vmem:[%s535 + $0x9] sm:$0xff]
      %v4169 = vld [vmem:[%s535 + $0x19] sm:$0xff]
      %v4170 = vld [vmem:[%s535 + $0x21] sm:$0xff]
      %v4171 = vld [vmem:[%s535 + $0x31] sm:$0xff]
      %v4172 = vld [vmem:[%s535 + $0x39] sm:$0xff]
      %v4173 = vld [vmem:[%s535 + $0x49] sm:$0xff]
      %v4174 = vld [vmem:[%s535 + $0x51] sm:$0xff]
      %v4175 = vld [vmem:[%s535 + $0x61] sm:$0xff]
      %v4176 = vld [vmem:[%s535 + $0x69] sm:$0xff]
      %v4177 = vld [vmem:[%s535 + $0x79] sm:$0xff]
      %v4178 = vld [vmem:[%s535 + $0x81] sm:$0xff]
      %v4179 = vld [vmem:[%s535 + $0x91] sm:$0xff]
      %v4180 = vld [vmem:[%s535 + $0x99] sm:$0xff]
      %v4181 = vld [vmem:[%s535 + $0xa9] sm:$0xff]
      %v4182 = vld [vmem:[%s535 + $0xb1] sm:$0xff]
      %v4183 = vadd.f32 %v4151, %v4167
      %v4184 = vadd.f32 %v4152, %v4168
      %v4185 = vadd.f32 %v4153, %v4169
      %v4186 = vadd.f32 %v4154, %v4170
      %v4187 = vadd.f32 %v4155, %v4171
      %v4188 = vadd.f32 %v4156, %v4172
      %v4189 = vadd.f32 %v4157, %v4173
      %v4190 = vadd.f32 %v4158, %v4174
      %v4191 = vadd.f32 %v4159, %v4175
      %v4192 = vadd.f32 %v4160, %v4176
      %v4193 = vadd.f32 %v4161, %v4177
      %v4194 = vadd.f32 %v4162, %v4178
      %v4195 = vadd.f32 %v4163, %v4179
      %v4196 = vadd.f32 %v4164, %v4180
      %v4197 = vadd.f32 %v4165, %v4181
      %v4198 = vadd.f32 %v4166, %v4182
      %v4199 = vmax.f32 %v4183, 0.0
      %v4200 = vmax.f32 %v4184, 0.0
      %v4201 = vmax.f32 %v4185, 0.0
      %v4202 = vmax.f32 %v4186, 0.0
      %v4203 = vmax.f32 %v4187, 0.0
      %v4204 = vmax.f32 %v4188, 0.0
      %v4205 = vmax.f32 %v4189, 0.0
      %v4206 = vmax.f32 %v4190, 0.0
      %v4207 = vmax.f32 %v4191, 0.0
      %v4208 = vmax.f32 %v4192, 0.0
      %v4209 = vmax.f32 %v4193, 0.0
      %v4210 = vmax.f32 %v4194, 0.0
      %v4211 = vmax.f32 %v4195, 0.0
      %v4212 = vmax.f32 %v4196, 0.0
      %v4213 = vmax.f32 %v4197, 0.0
      %v4214 = vmax.f32 %v4198, 0.0
      %4215 = vst.msk [vmem:[%s580] sm:$0xff] %vm1530, %v4199
      %4216 = vst.msk [vmem:[%s580 + $0x8] sm:$0xff] %vm1530, %v4200
      %4217 = vst.msk [vmem:[%s580 + $0x10] sm:$0xff] %vm1530, %v4201
      %4218 = vst.msk [vmem:[%s580 + $0x18] sm:$0xff] %vm1530, %v4202
      %4219 = vst.msk [vmem:[%s580 + $0x20] sm:$0xff] %vm1530, %v4203
      %4220 = vst.msk [vmem:[%s580 + $0x28] sm:$0xff] %vm1530, %v4204
      %4221 = vst.msk [vmem:[%s580 + $0x30] sm:$0xff] %vm1530, %v4205
      %4222 = vst.msk [vmem:[%s580 + $0x38] sm:$0xff] %vm1530, %v4206
      %4223 = vst.msk [vmem:[%s580 + $0x40] sm:$0xff] %vm1530, %v4207
      %4224 = vst.msk [vmem:[%s580 + $0x48] sm:$0xff] %vm1530, %v4208
      %4225 = vst.msk [vmem:[%s580 + $0x50] sm:$0xff] %vm1530, %v4209
      %4226 = vst.msk [vmem:[%s580 + $0x58] sm:$0xff] %vm1530, %v4210
      %4227 = vst.msk [vmem:[%s580 + $0x60] sm:$0xff] %vm1530, %v4211
      %4228 = vst.msk [vmem:[%s580 + $0x68] sm:$0xff] %vm1530, %v4212
      %4229 = vst.msk [vmem:[%s580 + $0x70] sm:$0xff] %vm1530, %v4213
      %4230 = vst.msk [vmem:[%s580 + $0x78] sm:$0xff] %vm1530, %v4214
      %s4231 = smul.u32 8, %s28
      %p4232 = scmp.lt.s32.totalorder %s27, 1
      %s4233 = scalar_select %p4232, %s27, 1
      %p4234 = scmp.lt.s32.totalorder %s4231, 15
      %s4235 = scalar_select %p4234, %s4231, 15
      %s4236 = smul.addr %s4235, 2
      %s4237 = smul.addr %s4233, 32
      %s4238 = sadd.s32 %s4236, %s4237
      %s4239 = smul.addr %s4238, 8
      %s4240 = scalar_lea.vmem %s12, %s4239
      // Predicated region
      $region69: #{bottleneck_forward.1} parent=67 // pred_check
        %p4241 = pneg %p344
      $region70: #{bottleneck_forward.1} parent=67 // pred_check_branch
        %4243 = sbr.rel (%p4241) target = $region72
      $region71: #{bottleneck_forward.1} parent=67 // pred_region
        %s4244 = smul.u32 8, %s28
      $region72: #{bottleneck_forward.1} parent=67 // pred_fallthru
        _
    $region68: #{bottleneck_forward.1} parent=5 // pred_fallthru
      _
    %p4245 = scmp.le.s32.totalorder 2, %s18
    // Predicated region
    $region73: #{bottleneck_forward.1} parent=5 // pred_check
      %p4246 = pneg %p4245
    $region74: #{bottleneck_forward.1} parent=5 // pred_check_branch
      %4248 = sbr.rel (%p4246) target = $region76
    $region75: #{bottleneck_forward.1} parent=5 // pred_region
      %s4249 = ssub.s32 %s18, 2
      // Predicated region
      $region77: #{bottleneck_forward.1} parent=75 // pred_check
        %p4250 = pneg %p350
      $region78: #{bottleneck_forward.1} parent=75 // pred_check_branch
        %4252 = sbr.rel (%p4250) target = $region80
      $region79: #{bottleneck_forward.1} parent=75 // pred_region
        %s4253 = smul.u32 8, %s30
        %p4254 = scmp.lt.s32.totalorder %s29, 1
        %s4255 = scalar_select %p4254, %s29, 1
        %p4256 = scmp.lt.s32.totalorder %s4253, 15
        %s4257 = scalar_select %p4256, %s4253, 15
        %s4258 = smul.addr %s4257, 2
        %s4259 = smul.addr %s4255, 32
        %s4260 = sadd.s32 %s4258, %s4259
        %s4261 = smul.addr %s4260, 8
        %s4262 = scalar_lea.vmem %s12, %s4261
      $region80: #{bottleneck_forward.1} parent=75 // pred_fallthru
        _
    $region76: #{bottleneck_forward.1} parent=5 // pred_fallthru
      _
  $region6: #{bottleneck_forward.1} parent=0 // loop_footer
    %s22 = sadd.s32 1, %s18
  $region7: #{bottleneck_forward.1} parent=0 // loop_footer_branch
    %17 = sbr.rel target = $region3
  $region8: #{bottleneck_forward.1} parent=0 // loop_exit
    _

</llo_original>
